<compile_context>
chip_gen: v7x
topology: tpu7x:2x2x1
jax: 0.10.0
libtpu: 0.0.40
codegen_flags: <defaults>
</compile_context>

<pallas_src>
import numpy as np
import jax
import jax.numpy as jnp
from jax.experimental import pallas as pl
from jax.experimental.pallas import tpu as pltpu


# ---------------------- constant selection matrices (trace time) ------------

def _conv_tap_selectors(H, W, k, stride, pad):
    """T[tap, p, q] = 1 iff conv tap (i,j) at output position q reads input p."""
    Ho = (H + 2 * pad - k) // stride + 1
    Wo = (W + 2 * pad - k) // stride + 1
    q = np.arange(Ho * Wo)
    qh, qw = q // Wo, q % Wo
    T = np.zeros((k * k, H * W, Ho * Wo), np.float32)
    for i in range(k):
        for j in range(k):
            oh = qh * stride + i - pad
            ow = qw * stride + j - pad
            valid = (oh >= 0) & (oh < H) & (ow >= 0) & (ow < W)
            T[i * k + j, (oh * W + ow)[valid], q[valid]] = 1.0
    return T, Ho, Wo


def _pool_tap_selectors(H, W, k, stride):
    """G[tap, p, q] = 1 iff pooling tap (di,dj) at output position q reads input p."""
    Ho = (H - k) // stride + 1
    Wo = (W - k) // stride + 1
    q = np.arange(Ho * Wo)
    qh, qw = q // Wo, q % Wo
    G = np.zeros((k * k, H * W, Ho * Wo), np.float32)
    for di in range(k):
        for dj in range(k):
            p = (qh * stride + di) * W + (qw * stride + dj)
            G[di * k + dj, p, q] = 1.0
    return G, Ho, Wo


# ------------------------------ plan building --------------------------------

def _push(operands, arr):
    operands.append(arr)
    return len(operands) - 1


def build_plan(config, params, input_shape):
    """Walk the config once, pre-arrange weights/constants, emit an op plan."""
    N, C, H, W = input_shape
    layers = config['layers']
    operands, plan = [], []
    is_image = True     # no flatten seen yet
    stacked = True      # kernel activation is a (C, H*W) slab
    F = None
    i = 0
    while i < len(layers):
        lc, p = layers[i], params[i]
        t = lc['type']
        fuse_relu = (i + 1 < len(layers)) and (layers[i + 1]['type'] == 'relu')
        if t == 'conv':
            assert is_image, "conv after flatten is unsupported"
            w, b = p
            k, s, pd = lc['kernel_size'], lc['stride'], lc['padding']
            Cout, Cin = lc['out_channels'], lc['in_channels']
            assert Cin == C
            T, Ho, Wo = _conv_tap_selectors(H, W, k, s, pd)
            w_taps = jnp.transpose(w, (2, 3, 0, 1)).reshape(k * k, Cout, Cin)
            plan.append(dict(kind='conv', taps=k * k, relu=fuse_relu,
                             t=_push(operands, jnp.asarray(T)),
                             w=_push(operands, w_taps.astype(jnp.float32)),
                             b=_push(operands, b.reshape(Cout, 1).astype(jnp.float32))))
            C, H, W = Cout, Ho, Wo
            i += 2 if fuse_relu else 1
        elif t == 'relu':
            plan.append(dict(kind='relu'))
            i += 1
        elif t == 'maxpool':
            assert is_image, "maxpool after flatten is unsupported"
            k, s = lc['kernel_size'], lc['stride']
            G, Ho, Wo = _pool_tap_selectors(H, W, k, s)
            plan.append(dict(kind='pool', taps=k * k,
                             g=_push(operands, jnp.asarray(G))))
            H, W = Ho, Wo
            i += 1
        elif t == 'flatten':
            # The (C, H*W) slab already IS the NCHW flatten order -> no data movement.
            is_image = False
            plan.append(dict(kind='flatten'))
            i += 1
        elif t == 'linear':
            assert not is_image, "linear requires a preceding flatten"
            w, b = p
            in_f, out_f = lc['in_features'], lc['out_features']
            wt = jnp.transpose(w, (1, 0)).astype(jnp.float32)   # pre-transposed once
            brow = b.reshape(1, out_f).astype(jnp.float32)
            if stacked:
                assert in_f == C * H * W
                plan.append(dict(kind='linear', mode='stacked', C=C, S=H * W,
                                 relu=fuse_relu,
                                 w=_push(operands, wt), b=_push(operands, brow)))
                stacked = False
            else:
                assert in_f == F
                plan.append(dict(kind='linear', mode='flat', relu=fuse_relu,
                                 w=_push(operands, wt), b=_push(operands, brow)))
            F = out_f
            i += 2 if fuse_relu else 1
        else:
            raise ValueError(f"unknown layer type: {t}")

    meta = dict(stacked=stacked, is_image=is_image, C=C, H=H, W=W, F=F)
    return plan, operands, meta


# ------------------------------ fused kernel ---------------------------------

def make_kernel(plan, n_operands):
    def kernel(*refs):
        x_ref = refs[0]
        op_refs = refs[1:1 + n_operands]
        o_ref = refs[1 + n_operands]

        h = x_ref[0]                                    # (Cin, H*W) f32, VMEM resident
        for op in plan:
            kind = op['kind']
            if kind == 'conv':
                t_ref, w_ref, b_ref = (op_refs[op['t']], op_refs[op['w']],
                                       op_refs[op['b']])
                acc = None
                for tap in range(op['taps']):
                    # gather the shifted/zero-padded window via a 0/1 matmul (MXU)
                    patch = jnp.dot(h, t_ref[tap],
                                    preferred_element_type=jnp.float32)   # (Cin, Ho*Wo)
                    part = jnp.dot(w_ref[tap], patch,
                                   preferred_element_type=jnp.float32)    # (Cout, Ho*Wo)
                    acc = part if acc is None else acc + part
                acc = acc + b_ref[...]                  # bias column broadcast
                if op['relu']:                          # fused ReLU epilogue
                    acc = jnp.maximum(acc, 0.0)
                h = acc
            elif kind == 'relu':
                h = jnp.maximum(h, 0.0)
            elif kind == 'pool':
                g_ref = op_refs[op['g']]
                red = jnp.dot(h, g_ref[0], preferred_element_type=jnp.float32)
                for tap in range(1, op['taps']):
                    red = jnp.maximum(
                        red, jnp.dot(h, g_ref[tap],
                                     preferred_element_type=jnp.float32))
                h = red                                 # (C, Ho*Wo)
            elif kind == 'flatten':
                pass                                    # representation no-op
            elif kind == 'linear':
                w_ref, b_ref = op_refs[op['w']], op_refs[op['b']]
                wt = w_ref[...]                         # (in, out), pre-transposed
                if op['mode'] == 'stacked':
                    C, S = op['C'], op['S']
                    acc = b_ref[...]                    # (1, out)
                    for c in range(C):
                        acc = acc + jnp.dot(h[c:c + 1, :], wt[c * S:(c + 1) * S, :],
                                            preferred_element_type=jnp.float32)
                else:
                    acc = jnp.dot(h, wt, preferred_element_type=jnp.float32) + b_ref[...]
                if op['relu']:
                    acc = jnp.maximum(acc, 0.0)
                h = acc
        o_ref[0] = h
    return kernel


def build_cnn_forward(config, params, input_shape):
    N, Cin, H, W = input_shape
    plan, operands, meta = build_plan(config, params, input_shape)
    kernel = make_kernel(plan, len(operands))

    in_specs = [pl.BlockSpec((1, Cin, H * W), lambda n: (n, 0, 0))]
    for arr in operands:                                # weights/constants: full-array blocks
        in_specs.append(pl.BlockSpec(arr.shape, lambda n, _nd=arr.ndim: (0,) * _nd))

    if meta['stacked']:
        Cf, Sf = meta['C'], meta['H'] * meta['W']
        out_shape = jax.ShapeDtypeStruct((N, Cf, Sf), jnp.float32)
        out_spec = pl.BlockSpec((1, Cf, Sf), lambda n: (n, 0, 0))
    else:
        F = meta['F']
        out_shape = jax.ShapeDtypeStruct((N, 1, F), jnp.float32)
        out_spec = pl.BlockSpec((1, 1, F), lambda n: (n, 0, 0))

    fused = pl.pallas_call(
        kernel,
        out_shape=out_shape,
        grid=(N,),
        in_specs=in_specs,
        out_specs=out_spec,
        compiler_params=pltpu.CompilerParams(
            dimension_semantics=("parallel",)),   # v7x: one sample per TensorCore
    )

    def forward(x_nchw):
        x_slab = x_nchw.reshape(N, Cin, H * W).astype(jnp.float32)
        out = fused(x_slab, *operands)
        if meta['stacked']:
            if meta['is_image']:
                return out.reshape(N, meta['C'], meta['H'], meta['W'])
            return out.reshape(N, meta['C'] * meta['H'] * meta['W'])
        return out.reshape(N, meta['F'])

    return forward


# ------------------------------ params & reference ---------------------------

def init_params(config, key):
    params = []
    for lc in config['layers']:
        if lc['type'] == 'conv':
            key, k1, k2 = jax.random.split(key, 3)
            w = 0.05 * jax.random.normal(
                k1, (lc['out_channels'], lc['in_channels'],
                     lc['kernel_size'], lc['kernel_size']), jnp.float32)
            b = 0.05 * jax.random.normal(k2, (lc['out_channels'],), jnp.float32)
            params.append((w, b))
        elif lc['type'] == 'linear':
            key, k1, k2 = jax.random.split(key, 3)
            w = 0.05 * jax.random.normal(
                k1, (lc['out_features'], lc['in_features']), jnp.float32)
            b = 0.05 * jax.random.normal(k2, (lc['out_features'],), jnp.float32)
            params.append((w, b))
        else:
            params.append(None)
    return params


def reference_forward(x_nchw, config, params):
    x = x_nchw
    for lc, p in zip(config['layers'], params):
        t = lc['type']
        if t == 'conv':
            w, b = p
            x = jax.lax.conv_general_dilated(
                x, w, (lc['stride'], lc['stride']),
                [(lc['padding'], lc['padding'])] * 2,
                dimension_numbers=('NCHW', 'OIHW', 'NCHW'),
            ) + b[None, :, None, None]
        elif t == 'relu':
            x = jnp.maximum(x, 0.0)
        elif t == 'maxpool':
            k, s = lc['kernel_size'], lc['stride']
            x = jax.lax.reduce_window(x, -jnp.inf, jax.lax.max,
                                      (1, 1, k, k), (1, 1, s, s), 'VALID')
        elif t == 'flatten':
            x = x.reshape(x.shape[0], -1)
        elif t == 'linear':
            w, b = p
            x = x @ w.T + b
    return x


# ----------------------------------- main -------------------------------------

if __name__ == "__main__":
    config = {
        'layers': [
            {'type': 'conv', 'in_channels': 4, 'out_channels': 8,
             'kernel_size': 3, 'stride': 1, 'padding': 1},
            {'type': 'relu'},
            {'type': 'maxpool', 'kernel_size': 2, 'stride': 2},
            {'type': 'flatten'},
            {'type': 'linear', 'in_features': 8 * 8 * 8, 'out_features': 32},
        ]
    }

    key = jax.random.PRNGKey(0)
    key, xkey = jax.random.split(key)
    x = jax.random.normal(xkey, (2, 4, 16, 16), jnp.float32)   # NCHW, like PyTorch
    params = init_params(config, key)

    forward = build_cnn_forward(config, params, x.shape)
    out = jax.block_until_ready(forward(x))

    ref = jax.block_until_ready(reference_forward(x, config, params))
    assert out.shape == (2, 32), out.shape
    assert jnp.allclose(out, ref, atol=1e-4, rtol=1e-4), \
        float(jnp.max(jnp.abs(out - ref)))

    print("KERNEL_OK")
</pallas_src>

<mosaic_0001>
module attributes {stable_mosaic.version = 11 : i64} {
  func.func @kernel(%arg0: i32, %arg1: memref<1x4x256xf32, #tpu.memory_space<vmem>>, %arg2: memref<9x256x256xf32, #tpu.memory_space<vmem>>, %arg3: memref<9x8x4xf32, #tpu.memory_space<vmem>>, %arg4: memref<8x1xf32, #tpu.memory_space<vmem>>, %arg5: memref<4x256x64xf32, #tpu.memory_space<vmem>>, %arg6: memref<512x32xf32, #tpu.memory_space<vmem>>, %arg7: memref<1x32xf32, #tpu.memory_space<vmem>>, %arg8: memref<1x1x32xf32, #tpu.memory_space<vmem>>) attributes {dimension_semantics = [#tpu.dimension_semantics<parallel>], iteration_bounds = array<i64: 2>, scalar_prefetch = 0 : i64, scratch_operands = 0 : i64, tpu.core_type = #tpu.core_type<tc>, window_params = [{transform_indices = @transform_0, window_bounds = array<i64: 1, 4, 256>}, {pipeline_mode = #tpu.pipeline_mode<synchronous>, transform_indices = @transform_1, window_bounds = array<i64: 9, 256, 256>}, {pipeline_mode = #tpu.pipeline_mode<synchronous>, transform_indices = @transform_2, window_bounds = array<i64: 9, 8, 4>}, {pipeline_mode = #tpu.pipeline_mode<synchronous>, transform_indices = @transform_3, window_bounds = array<i64: 8, 1>}, {pipeline_mode = #tpu.pipeline_mode<synchronous>, transform_indices = @transform_4, window_bounds = array<i64: 4, 256, 64>}, {pipeline_mode = #tpu.pipeline_mode<synchronous>, transform_indices = @transform_5, window_bounds = array<i64: 512, 32>}, {pipeline_mode = #tpu.pipeline_mode<synchronous>, transform_indices = @transform_6, window_bounds = array<i64: 1, 32>}, {transform_indices = @transform_7, window_bounds = array<i64: 1, 1, 32>}]} {
    %c0 = arith.constant 0 : index
    %c0_0 = arith.constant 0 : index
    %c0_1 = arith.constant 0 : index
    %0 = vector.load %arg1[%c0, %c0_0, %c0_1] : memref<1x4x256xf32, #tpu.memory_space<vmem>>, vector<1x4x256xf32>
    %1 = vector.shape_cast %0 : vector<1x4x256xf32> to vector<4x256xf32>
    %c0_2 = arith.constant 0 : index
    %c0_3 = arith.constant 0 : index
    %c0_4 = arith.constant 0 : index
    %2 = vector.load %arg2[%c0_2, %c0_3, %c0_4] : memref<9x256x256xf32, #tpu.memory_space<vmem>>, vector<1x256x256xf32>
    %3 = vector.shape_cast %2 : vector<1x256x256xf32> to vector<256x256xf32>
    %cst = arith.constant dense<0.000000e+00> : vector<4x256xf32>
    %4 = tpu.matmul %1, %3, %cst {dimension_numbers = #tpu.dot_dimension_numbers<[1], [0], [0], [1], [0, 0, 1, 1], [], []>} : vector<4x256xf32>, vector<256x256xf32>, vector<4x256xf32> -> vector<4x256xf32>
    %c0_5 = arith.constant 0 : index
    %c0_6 = arith.constant 0 : index
    %c0_7 = arith.constant 0 : index
    %5 = vector.load %arg3[%c0_5, %c0_6, %c0_7] : memref<9x8x4xf32, #tpu.memory_space<vmem>>, vector<1x8x4xf32>
    %6 = vector.shape_cast %5 : vector<1x8x4xf32> to vector<8x4xf32>
    %cst_8 = arith.constant dense<0.000000e+00> : vector<8x256xf32>
    %7 = tpu.matmul %6, %4, %cst_8 {dimension_numbers = #tpu.dot_dimension_numbers<[1], [0], [0], [1], [0, 0, 1, 1], [], []>} : vector<8x4xf32>, vector<4x256xf32>, vector<8x256xf32> -> vector<8x256xf32>
    %c1 = arith.constant 1 : index
    %c0_9 = arith.constant 0 : index
    %c0_10 = arith.constant 0 : index
    %8 = vector.load %arg2[%c1, %c0_9, %c0_10] : memref<9x256x256xf32, #tpu.memory_space<vmem>>, vector<1x256x256xf32>
    %9 = vector.shape_cast %8 : vector<1x256x256xf32> to vector<256x256xf32>
    %cst_11 = arith.constant dense<0.000000e+00> : vector<4x256xf32>
    %10 = tpu.matmul %1, %9, %cst_11 {dimension_numbers = #tpu.dot_dimension_numbers<[1], [0], [0], [1], [0, 0, 1, 1], [], []>} : vector<4x256xf32>, vector<256x256xf32>, vector<4x256xf32> -> vector<4x256xf32>
    %c1_12 = arith.constant 1 : index
    %c0_13 = arith.constant 0 : index
    %c0_14 = arith.constant 0 : index
    %11 = vector.load %arg3[%c1_12, %c0_13, %c0_14] : memref<9x8x4xf32, #tpu.memory_space<vmem>>, vector<1x8x4xf32>
    %12 = vector.shape_cast %11 : vector<1x8x4xf32> to vector<8x4xf32>
    %cst_15 = arith.constant dense<0.000000e+00> : vector<8x256xf32>
    %13 = tpu.matmul %12, %10, %cst_15 {dimension_numbers = #tpu.dot_dimension_numbers<[1], [0], [0], [1], [0, 0, 1, 1], [], []>} : vector<8x4xf32>, vector<4x256xf32>, vector<8x256xf32> -> vector<8x256xf32>
    %14 = arith.addf %7, %13 : vector<8x256xf32>
    %c2 = arith.constant 2 : index
    %c0_16 = arith.constant 0 : index
    %c0_17 = arith.constant 0 : index
    %15 = vector.load %arg2[%c2, %c0_16, %c0_17] : memref<9x256x256xf32, #tpu.memory_space<vmem>>, vector<1x256x256xf32>
    %16 = vector.shape_cast %15 : vector<1x256x256xf32> to vector<256x256xf32>
    %cst_18 = arith.constant dense<0.000000e+00> : vector<4x256xf32>
    %17 = tpu.matmul %1, %16, %cst_18 {dimension_numbers = #tpu.dot_dimension_numbers<[1], [0], [0], [1], [0, 0, 1, 1], [], []>} : vector<4x256xf32>, vector<256x256xf32>, vector<4x256xf32> -> vector<4x256xf32>
    %c2_19 = arith.constant 2 : index
    %c0_20 = arith.constant 0 : index
    %c0_21 = arith.constant 0 : index
    %18 = vector.load %arg3[%c2_19, %c0_20, %c0_21] : memref<9x8x4xf32, #tpu.memory_space<vmem>>, vector<1x8x4xf32>
    %19 = vector.shape_cast %18 : vector<1x8x4xf32> to vector<8x4xf32>
    %cst_22 = arith.constant dense<0.000000e+00> : vector<8x256xf32>
    %20 = tpu.matmul %19, %17, %cst_22 {dimension_numbers = #tpu.dot_dimension_numbers<[1], [0], [0], [1], [0, 0, 1, 1], [], []>} : vector<8x4xf32>, vector<4x256xf32>, vector<8x256xf32> -> vector<8x256xf32>
    %21 = arith.addf %14, %20 : vector<8x256xf32>
    %c3 = arith.constant 3 : index
    %c0_23 = arith.constant 0 : index
    %c0_24 = arith.constant 0 : index
    %22 = vector.load %arg2[%c3, %c0_23, %c0_24] : memref<9x256x256xf32, #tpu.memory_space<vmem>>, vector<1x256x256xf32>
    %23 = vector.shape_cast %22 : vector<1x256x256xf32> to vector<256x256xf32>
    %cst_25 = arith.constant dense<0.000000e+00> : vector<4x256xf32>
    %24 = tpu.matmul %1, %23, %cst_25 {dimension_numbers = #tpu.dot_dimension_numbers<[1], [0], [0], [1], [0, 0, 1, 1], [], []>} : vector<4x256xf32>, vector<256x256xf32>, vector<4x256xf32> -> vector<4x256xf32>
    %c3_26 = arith.constant 3 : index
    %c0_27 = arith.constant 0 : index
    %c0_28 = arith.constant 0 : index
    %25 = vector.load %arg3[%c3_26, %c0_27, %c0_28] : memref<9x8x4xf32, #tpu.memory_space<vmem>>, vector<1x8x4xf32>
    %26 = vector.shape_cast %25 : vector<1x8x4xf32> to vector<8x4xf32>
    %cst_29 = arith.constant dense<0.000000e+00> : vector<8x256xf32>
    %27 = tpu.matmul %26, %24, %cst_29 {dimension_numbers = #tpu.dot_dimension_numbers<[1], [0], [0], [1], [0, 0, 1, 1], [], []>} : vector<8x4xf32>, vector<4x256xf32>, vector<8x256xf32> -> vector<8x256xf32>
    %28 = arith.addf %21, %27 : vector<8x256xf32>
    %c4 = arith.constant 4 : index
    %c0_30 = arith.constant 0 : index
    %c0_31 = arith.constant 0 : index
    %29 = vector.load %arg2[%c4, %c0_30, %c0_31] : memref<9x256x256xf32, #tpu.memory_space<vmem>>, vector<1x256x256xf32>
    %30 = vector.shape_cast %29 : vector<1x256x256xf32> to vector<256x256xf32>
    %cst_32 = arith.constant dense<0.000000e+00> : vector<4x256xf32>
    %31 = tpu.matmul %1, %30, %cst_32 {dimension_numbers = #tpu.dot_dimension_numbers<[1], [0], [0], [1], [0, 0, 1, 1], [], []>} : vector<4x256xf32>, vector<256x256xf32>, vector<4x256xf32> -> vector<4x256xf32>
    %c4_33 = arith.constant 4 : index
    %c0_34 = arith.constant 0 : index
    %c0_35 = arith.constant 0 : index
    %32 = vector.load %arg3[%c4_33, %c0_34, %c0_35] : memref<9x8x4xf32, #tpu.memory_space<vmem>>, vector<1x8x4xf32>
    %33 = vector.shape_cast %32 : vector<1x8x4xf32> to vector<8x4xf32>
    %cst_36 = arith.constant dense<0.000000e+00> : vector<8x256xf32>
    %34 = tpu.matmul %33, %31, %cst_36 {dimension_numbers = #tpu.dot_dimension_numbers<[1], [0], [0], [1], [0, 0, 1, 1], [], []>} : vector<8x4xf32>, vector<4x256xf32>, vector<8x256xf32> -> vector<8x256xf32>
    %35 = arith.addf %28, %34 : vector<8x256xf32>
    %c5 = arith.constant 5 : index
    %c0_37 = arith.constant 0 : index
    %c0_38 = arith.constant 0 : index
    %36 = vector.load %arg2[%c5, %c0_37, %c0_38] : memref<9x256x256xf32, #tpu.memory_space<vmem>>, vector<1x256x256xf32>
    %37 = vector.shape_cast %36 : vector<1x256x256xf32> to vector<256x256xf32>
    %cst_39 = arith.constant dense<0.000000e+00> : vector<4x256xf32>
    %38 = tpu.matmul %1, %37, %cst_39 {dimension_numbers = #tpu.dot_dimension_numbers<[1], [0], [0], [1], [0, 0, 1, 1], [], []>} : vector<4x256xf32>, vector<256x256xf32>, vector<4x256xf32> -> vector<4x256xf32>
    %c5_40 = arith.constant 5 : index
    %c0_41 = arith.constant 0 : index
    %c0_42 = arith.constant 0 : index
    %39 = vector.load %arg3[%c5_40, %c0_41, %c0_42] : memref<9x8x4xf32, #tpu.memory_space<vmem>>, vector<1x8x4xf32>
    %40 = vector.shape_cast %39 : vector<1x8x4xf32> to vector<8x4xf32>
    %cst_43 = arith.constant dense<0.000000e+00> : vector<8x256xf32>
    %41 = tpu.matmul %40, %38, %cst_43 {dimension_numbers = #tpu.dot_dimension_numbers<[1], [0], [0], [1], [0, 0, 1, 1], [], []>} : vector<8x4xf32>, vector<4x256xf32>, vector<8x256xf32> -> vector<8x256xf32>
    %42 = arith.addf %35, %41 : vector<8x256xf32>
    %c6 = arith.constant 6 : index
    %c0_44 = arith.constant 0 : index
    %c0_45 = arith.constant 0 : index
    %43 = vector.load %arg2[%c6, %c0_44, %c0_45] : memref<9x256x256xf32, #tpu.memory_space<vmem>>, vector<1x256x256xf32>
    %44 = vector.shape_cast %43 : vector<1x256x256xf32> to vector<256x256xf32>
    %cst_46 = arith.constant dense<0.000000e+00> : vector<4x256xf32>
    %45 = tpu.matmul %1, %44, %cst_46 {dimension_numbers = #tpu.dot_dimension_numbers<[1], [0], [0], [1], [0, 0, 1, 1], [], []>} : vector<4x256xf32>, vector<256x256xf32>, vector<4x256xf32> -> vector<4x256xf32>
    %c6_47 = arith.constant 6 : index
    %c0_48 = arith.constant 0 : index
    %c0_49 = arith.constant 0 : index
    %46 = vector.load %arg3[%c6_47, %c0_48, %c0_49] : memref<9x8x4xf32, #tpu.memory_space<vmem>>, vector<1x8x4xf32>
    %47 = vector.shape_cast %46 : vector<1x8x4xf32> to vector<8x4xf32>
    %cst_50 = arith.constant dense<0.000000e+00> : vector<8x256xf32>
    %48 = tpu.matmul %47, %45, %cst_50 {dimension_numbers = #tpu.dot_dimension_numbers<[1], [0], [0], [1], [0, 0, 1, 1], [], []>} : vector<8x4xf32>, vector<4x256xf32>, vector<8x256xf32> -> vector<8x256xf32>
    %49 = arith.addf %42, %48 : vector<8x256xf32>
    %c7 = arith.constant 7 : index
    %c0_51 = arith.constant 0 : index
    %c0_52 = arith.constant 0 : index
    %50 = vector.load %arg2[%c7, %c0_51, %c0_52] : memref<9x256x256xf32, #tpu.memory_space<vmem>>, vector<1x256x256xf32>
    %51 = vector.shape_cast %50 : vector<1x256x256xf32> to vector<256x256xf32>
    %cst_53 = arith.constant dense<0.000000e+00> : vector<4x256xf32>
    %52 = tpu.matmul %1, %51, %cst_53 {dimension_numbers = #tpu.dot_dimension_numbers<[1], [0], [0], [1], [0, 0, 1, 1], [], []>} : vector<4x256xf32>, vector<256x256xf32>, vector<4x256xf32> -> vector<4x256xf32>
    %c7_54 = arith.constant 7 : index
    %c0_55 = arith.constant 0 : index
    %c0_56 = arith.constant 0 : index
    %53 = vector.load %arg3[%c7_54, %c0_55, %c0_56] : memref<9x8x4xf32, #tpu.memory_space<vmem>>, vector<1x8x4xf32>
    %54 = vector.shape_cast %53 : vector<1x8x4xf32> to vector<8x4xf32>
    %cst_57 = arith.constant dense<0.000000e+00> : vector<8x256xf32>
    %55 = tpu.matmul %54, %52, %cst_57 {dimension_numbers = #tpu.dot_dimension_numbers<[1], [0], [0], [1], [0, 0, 1, 1], [], []>} : vector<8x4xf32>, vector<4x256xf32>, vector<8x256xf32> -> vector<8x256xf32>
    %56 = arith.addf %49, %55 : vector<8x256xf32>
    %c8 = arith.constant 8 : index
    %c0_58 = arith.constant 0 : index
    %c0_59 = arith.constant 0 : index
    %57 = vector.load %arg2[%c8, %c0_58, %c0_59] : memref<9x256x256xf32, #tpu.memory_space<vmem>>, vector<1x256x256xf32>
    %58 = vector.shape_cast %57 : vector<1x256x256xf32> to vector<256x256xf32>
    %cst_60 = arith.constant dense<0.000000e+00> : vector<4x256xf32>
    %59 = tpu.matmul %1, %58, %cst_60 {dimension_numbers = #tpu.dot_dimension_numbers<[1], [0], [0], [1], [0, 0, 1, 1], [], []>} : vector<4x256xf32>, vector<256x256xf32>, vector<4x256xf32> -> vector<4x256xf32>
    %c8_61 = arith.constant 8 : index
    %c0_62 = arith.constant 0 : index
    %c0_63 = arith.constant 0 : index
    %60 = vector.load %arg3[%c8_61, %c0_62, %c0_63] : memref<9x8x4xf32, #tpu.memory_space<vmem>>, vector<1x8x4xf32>
    %61 = vector.shape_cast %60 : vector<1x8x4xf32> to vector<8x4xf32>
    %cst_64 = arith.constant dense<0.000000e+00> : vector<8x256xf32>
    %62 = tpu.matmul %61, %59, %cst_64 {dimension_numbers = #tpu.dot_dimension_numbers<[1], [0], [0], [1], [0, 0, 1, 1], [], []>} : vector<8x4xf32>, vector<4x256xf32>, vector<8x256xf32> -> vector<8x256xf32>
    %63 = arith.addf %56, %62 : vector<8x256xf32>
    %c0_65 = arith.constant 0 : index
    %c0_66 = arith.constant 0 : index
    %64 = vector.load %arg4[%c0_65, %c0_66] : memref<8x1xf32, #tpu.memory_space<vmem>>, vector<8x1xf32>
    %65 = vector.broadcast %64 : vector<8x1xf32> to vector<8x256xf32>
    %66 = arith.addf %63, %65 : vector<8x256xf32>
    %cst_67 = arith.constant 0.000000e+00 : f32
    %67 = vector.broadcast %cst_67 : f32 to vector<8x256xf32>
    %68 = arith.maximumf %66, %67 : vector<8x256xf32>
    %c0_68 = arith.constant 0 : index
    %c0_69 = arith.constant 0 : index
    %c0_70 = arith.constant 0 : index
    %69 = vector.load %arg5[%c0_68, %c0_69, %c0_70] : memref<4x256x64xf32, #tpu.memory_space<vmem>>, vector<1x256x64xf32>
    %70 = vector.shape_cast %69 : vector<1x256x64xf32> to vector<256x64xf32>
    %cst_71 = arith.constant dense<0.000000e+00> : vector<8x64xf32>
    %71 = tpu.matmul %68, %70, %cst_71 {dimension_numbers = #tpu.dot_dimension_numbers<[1], [0], [0], [1], [0, 0, 1, 1], [], []>} : vector<8x256xf32>, vector<256x64xf32>, vector<8x64xf32> -> vector<8x64xf32>
    %c1_72 = arith.constant 1 : index
    %c0_73 = arith.constant 0 : index
    %c0_74 = arith.constant 0 : index
    %72 = vector.load %arg5[%c1_72, %c0_73, %c0_74] : memref<4x256x64xf32, #tpu.memory_space<vmem>>, vector<1x256x64xf32>
    %73 = vector.shape_cast %72 : vector<1x256x64xf32> to vector<256x64xf32>
    %cst_75 = arith.constant dense<0.000000e+00> : vector<8x64xf32>
    %74 = tpu.matmul %68, %73, %cst_75 {dimension_numbers = #tpu.dot_dimension_numbers<[1], [0], [0], [1], [0, 0, 1, 1], [], []>} : vector<8x256xf32>, vector<256x64xf32>, vector<8x64xf32> -> vector<8x64xf32>
    %75 = arith.maximumf %71, %74 : vector<8x64xf32>
    %c2_76 = arith.constant 2 : index
    %c0_77 = arith.constant 0 : index
    %c0_78 = arith.constant 0 : index
    %76 = vector.load %arg5[%c2_76, %c0_77, %c0_78] : memref<4x256x64xf32, #tpu.memory_space<vmem>>, vector<1x256x64xf32>
    %77 = vector.shape_cast %76 : vector<1x256x64xf32> to vector<256x64xf32>
    %cst_79 = arith.constant dense<0.000000e+00> : vector<8x64xf32>
    %78 = tpu.matmul %68, %77, %cst_79 {dimension_numbers = #tpu.dot_dimension_numbers<[1], [0], [0], [1], [0, 0, 1, 1], [], []>} : vector<8x256xf32>, vector<256x64xf32>, vector<8x64xf32> -> vector<8x64xf32>
    %79 = arith.maximumf %75, %78 : vector<8x64xf32>
    %c3_80 = arith.constant 3 : index
    %c0_81 = arith.constant 0 : index
    %c0_82 = arith.constant 0 : index
    %80 = vector.load %arg5[%c3_80, %c0_81, %c0_82] : memref<4x256x64xf32, #tpu.memory_space<vmem>>, vector<1x256x64xf32>
    %81 = vector.shape_cast %80 : vector<1x256x64xf32> to vector<256x64xf32>
    %cst_83 = arith.constant dense<0.000000e+00> : vector<8x64xf32>
    %82 = tpu.matmul %68, %81, %cst_83 {dimension_numbers = #tpu.dot_dimension_numbers<[1], [0], [0], [1], [0, 0, 1, 1], [], []>} : vector<8x256xf32>, vector<256x64xf32>, vector<8x64xf32> -> vector<8x64xf32>
    %83 = arith.maximumf %79, %82 : vector<8x64xf32>
    %c0_84 = arith.constant 0 : index
    %c0_85 = arith.constant 0 : index
    %84 = vector.load %arg6[%c0_84, %c0_85] : memref<512x32xf32, #tpu.memory_space<vmem>>, vector<512x32xf32>
    %c0_86 = arith.constant 0 : index
    %c0_87 = arith.constant 0 : index
    %85 = vector.load %arg7[%c0_86, %c0_87] : memref<1x32xf32, #tpu.memory_space<vmem>>, vector<1x32xf32>
    %86 = vector.extract_strided_slice %83 {offsets = [0, 0], sizes = [1, 64], strides = [1, 1]} : vector<8x64xf32> to vector<1x64xf32>
    %87 = vector.extract_strided_slice %84 {offsets = [0, 0], sizes = [64, 32], strides = [1, 1]} : vector<512x32xf32> to vector<64x32xf32>
    %cst_88 = arith.constant dense<0.000000e+00> : vector<1x32xf32>
    %88 = tpu.matmul %86, %87, %cst_88 {dimension_numbers = #tpu.dot_dimension_numbers<[1], [0], [0], [1], [0, 0, 1, 1], [], []>} : vector<1x64xf32>, vector<64x32xf32>, vector<1x32xf32> -> vector<1x32xf32>
    %89 = arith.addf %85, %88 : vector<1x32xf32>
    %90 = vector.extract_strided_slice %83 {offsets = [1, 0], sizes = [1, 64], strides = [1, 1]} : vector<8x64xf32> to vector<1x64xf32>
    %91 = vector.extract_strided_slice %84 {offsets = [64, 0], sizes = [64, 32], strides = [1, 1]} : vector<512x32xf32> to vector<64x32xf32>
    %cst_89 = arith.constant dense<0.000000e+00> : vector<1x32xf32>
    %92 = tpu.matmul %90, %91, %cst_89 {dimension_numbers = #tpu.dot_dimension_numbers<[1], [0], [0], [1], [0, 0, 1, 1], [], []>} : vector<1x64xf32>, vector<64x32xf32>, vector<1x32xf32> -> vector<1x32xf32>
    %93 = arith.addf %89, %92 : vector<1x32xf32>
    %94 = vector.extract_strided_slice %83 {offsets = [2, 0], sizes = [1, 64], strides = [1, 1]} : vector<8x64xf32> to vector<1x64xf32>
    %95 = vector.extract_strided_slice %84 {offsets = [128, 0], sizes = [64, 32], strides = [1, 1]} : vector<512x32xf32> to vector<64x32xf32>
    %cst_90 = arith.constant dense<0.000000e+00> : vector<1x32xf32>
    %96 = tpu.matmul %94, %95, %cst_90 {dimension_numbers = #tpu.dot_dimension_numbers<[1], [0], [0], [1], [0, 0, 1, 1], [], []>} : vector<1x64xf32>, vector<64x32xf32>, vector<1x32xf32> -> vector<1x32xf32>
    %97 = arith.addf %93, %96 : vector<1x32xf32>
    %98 = vector.extract_strided_slice %83 {offsets = [3, 0], sizes = [1, 64], strides = [1, 1]} : vector<8x64xf32> to vector<1x64xf32>
    %99 = vector.extract_strided_slice %84 {offsets = [192, 0], sizes = [64, 32], strides = [1, 1]} : vector<512x32xf32> to vector<64x32xf32>
    %cst_91 = arith.constant dense<0.000000e+00> : vector<1x32xf32>
    %100 = tpu.matmul %98, %99, %cst_91 {dimension_numbers = #tpu.dot_dimension_numbers<[1], [0], [0], [1], [0, 0, 1, 1], [], []>} : vector<1x64xf32>, vector<64x32xf32>, vector<1x32xf32> -> vector<1x32xf32>
    %101 = arith.addf %97, %100 : vector<1x32xf32>
    %102 = vector.extract_strided_slice %83 {offsets = [4, 0], sizes = [1, 64], strides = [1, 1]} : vector<8x64xf32> to vector<1x64xf32>
    %103 = vector.extract_strided_slice %84 {offsets = [256, 0], sizes = [64, 32], strides = [1, 1]} : vector<512x32xf32> to vector<64x32xf32>
    %cst_92 = arith.constant dense<0.000000e+00> : vector<1x32xf32>
    %104 = tpu.matmul %102, %103, %cst_92 {dimension_numbers = #tpu.dot_dimension_numbers<[1], [0], [0], [1], [0, 0, 1, 1], [], []>} : vector<1x64xf32>, vector<64x32xf32>, vector<1x32xf32> -> vector<1x32xf32>
    %105 = arith.addf %101, %104 : vector<1x32xf32>
    %106 = vector.extract_strided_slice %83 {offsets = [5, 0], sizes = [1, 64], strides = [1, 1]} : vector<8x64xf32> to vector<1x64xf32>
    %107 = vector.extract_strided_slice %84 {offsets = [320, 0], sizes = [64, 32], strides = [1, 1]} : vector<512x32xf32> to vector<64x32xf32>
    %cst_93 = arith.constant dense<0.000000e+00> : vector<1x32xf32>
    %108 = tpu.matmul %106, %107, %cst_93 {dimension_numbers = #tpu.dot_dimension_numbers<[1], [0], [0], [1], [0, 0, 1, 1], [], []>} : vector<1x64xf32>, vector<64x32xf32>, vector<1x32xf32> -> vector<1x32xf32>
    %109 = arith.addf %105, %108 : vector<1x32xf32>
    %110 = vector.extract_strided_slice %83 {offsets = [6, 0], sizes = [1, 64], strides = [1, 1]} : vector<8x64xf32> to vector<1x64xf32>
    %111 = vector.extract_strided_slice %84 {offsets = [384, 0], sizes = [64, 32], strides = [1, 1]} : vector<512x32xf32> to vector<64x32xf32>
    %cst_94 = arith.constant dense<0.000000e+00> : vector<1x32xf32>
    %112 = tpu.matmul %110, %111, %cst_94 {dimension_numbers = #tpu.dot_dimension_numbers<[1], [0], [0], [1], [0, 0, 1, 1], [], []>} : vector<1x64xf32>, vector<64x32xf32>, vector<1x32xf32> -> vector<1x32xf32>
    %113 = arith.addf %109, %112 : vector<1x32xf32>
    %114 = vector.extract_strided_slice %83 {offsets = [7, 0], sizes = [1, 64], strides = [1, 1]} : vector<8x64xf32> to vector<1x64xf32>
    %115 = vector.extract_strided_slice %84 {offsets = [448, 0], sizes = [64, 32], strides = [1, 1]} : vector<512x32xf32> to vector<64x32xf32>
    %cst_95 = arith.constant dense<0.000000e+00> : vector<1x32xf32>
    %116 = tpu.matmul %114, %115, %cst_95 {dimension_numbers = #tpu.dot_dimension_numbers<[1], [0], [0], [1], [0, 0, 1, 1], [], []>} : vector<1x64xf32>, vector<64x32xf32>, vector<1x32xf32> -> vector<1x32xf32>
    %117 = arith.addf %113, %116 : vector<1x32xf32>
    %c0_96 = arith.constant 0 : index
    %c0_97 = arith.constant 0 : index
    %c0_98 = arith.constant 0 : index
    %118 = vector.load %arg8[%c0_96, %c0_97, %c0_98] : memref<1x1x32xf32, #tpu.memory_space<vmem>>, vector<1x1x32xf32>
    %119 = vector.shape_cast %118 : vector<1x1x32xf32> to vector<1x32xf32>
    %120 = vector.shape_cast %117 : vector<1x32xf32> to vector<1x1x32xf32>
    tpu.vector_store %arg8[%c0_96, %c0_97, %c0_98], %120 {strides = array<i32>} : memref<1x1x32xf32, #tpu.memory_space<vmem>>, vector<1x1x32xf32>,
    return
  }
  func.func @transform_0(%arg0: i32) -> (i32, i32, i32) {
    %c0_i32 = arith.constant 0 : i32
    %c0_i32_0 = arith.constant 0 : i32
    %c0_i32_1 = arith.constant 0 : i32
    return %arg0, %c0_i32, %c0_i32_0 : i32, i32, i32
  }
  func.func @transform_1(%arg0: i32) -> (i32, i32, i32) {
    %c0_i32 = arith.constant 0 : i32
    %c0_i32_0 = arith.constant 0 : i32
    %c0_i32_1 = arith.constant 0 : i32
    %c0_i32_2 = arith.constant 0 : i32
    return %c0_i32, %c0_i32_0, %c0_i32_1 : i32, i32, i32
  }
  func.func @transform_2(%arg0: i32) -> (i32, i32, i32) {
    %c0_i32 = arith.constant 0 : i32
    %c0_i32_0 = arith.constant 0 : i32
    %c0_i32_1 = arith.constant 0 : i32
    %c0_i32_2 = arith.constant 0 : i32
    return %c0_i32, %c0_i32_0, %c0_i32_1 : i32, i32, i32
  }
  func.func @transform_3(%arg0: i32) -> (i32, i32) {
    %c0_i32 = arith.constant 0 : i32
    %c0_i32_0 = arith.constant 0 : i32
    %c0_i32_1 = arith.constant 0 : i32
    return %c0_i32, %c0_i32_0 : i32, i32
  }
  func.func @transform_4(%arg0: i32) -> (i32, i32, i32) {
    %c0_i32 = arith.constant 0 : i32
    %c0_i32_0 = arith.constant 0 : i32
    %c0_i32_1 = arith.constant 0 : i32
    %c0_i32_2 = arith.constant 0 : i32
    return %c0_i32, %c0_i32_0, %c0_i32_1 : i32, i32, i32
  }
  func.func @transform_5(%arg0: i32) -> (i32, i32) {
    %c0_i32 = arith.constant 0 : i32
    %c0_i32_0 = arith.constant 0 : i32
    %c0_i32_1 = arith.constant 0 : i32
    return %c0_i32, %c0_i32_0 : i32, i32
  }
  func.func @transform_6(%arg0: i32) -> (i32, i32) {
    %c0_i32 = arith.constant 0 : i32
    %c0_i32_0 = arith.constant 0 : i32
    %c0_i32_1 = arith.constant 0 : i32
    return %c0_i32, %c0_i32_0 : i32, i32
  }
  func.func @transform_7(%arg0: i32) -> (i32, i32, i32) {
    %c0_i32 = arith.constant 0 : i32
    %c0_i32_0 = arith.constant 0 : i32
    %c0_i32_1 = arith.constant 0 : i32
    return %arg0, %c0_i32, %c0_i32_0 : i32, i32, i32
  }
}

</mosaic_0001>

<llo_original>
// kernel: tpu_custom_call.1
$region0: #{tpu_custom_call.1}
  #allocation0 [shape = 'u32[]', space=smem, size = 0x4, offset = 0x4, fixed_abs, tag = 'smem constant byte address 0x4 - core index']
  #allocation1 [shape = 'u32[144,128]{1,0:T(1,128)}', space=vmem, size = 0x12000, scoped, tag = 'internal scratch']
  %s0 = inlined_call_operand.hbm [shape: f32[2,4,256], index: 0, kind: input, shape index: {}]
  %s1 = inlined_call_operand.hbm [shape: f32[9,256,256], index: 1, kind: input, shape index: {}]
  %s2 = inlined_call_operand.vmem [shape: f32[9,8,4], index: 2, kind: input, shape index: {}]
  %s3 = inlined_call_operand.vmem [shape: f32[8,1], index: 3, kind: input, shape index: {}]
  %s4 = inlined_call_operand.vmem [shape: f32[4,256,64], index: 4, kind: input, shape index: {}]
  %s5 = inlined_call_operand.vmem [shape: f32[512,32], index: 5, kind: input, shape index: {}]
  %s6 = inlined_call_operand.hbm [shape: f32[1,32], index: 6, kind: input, shape index: {}]
  %s7 = inlined_call_operand.hbm [shape: f32[2,1,32], index: 7, kind: output, shape index: {}]
  %s8 = sld [smem:[#allocation0]]
  $region73: #{tpu_custom_call.1} parent=0
    _
  %s10 = ssub.s32 1, %s8
  %s11 = scalar_select 0, %s10, %s8
  $region1: #{tpu_custom_call.1} parent=0
    #allocation2 [shape = 'u8[8192]{0}', space=vmem, size = 0x2000, scoped, tag = 'input window, operand 0']
    #allocation3 [shape = 's32[2]{0}', space=sflag, size = 0x8, scoped, tag = 'scoped memory for tpu_custom_call.1']
    #allocation4 [shape = 's32[2]{0}', space=sflag, size = 0x8, scoped, tag = 'scoped memory for tpu_custom_call.1']
    #allocation5 [shape = 'u8[2359296]{0}', space=vmem, size = 0x240000, scoped, tag = 'input window, operand 1, single buffered']
    #allocation6 [shape = 's32[1]{0}', space=sflag, size = 0x4, scoped, tag = 'scoped memory for tpu_custom_call.1']
    #allocation7 [shape = 'u8[512]{0}', space=vmem, size = 0x400, scoped, tag = 'input window, operand 6, single buffered']
    #allocation8 [shape = 'u8[1024]{0}', space=vmem, size = 0x400, scoped, tag = 'output window, operand 0']
    %12 = vsyncpa [#allocation3], 0
    %s13 = scalar_lea.sflag [#allocation3], 1
    %14 = vsyncpa %s13, 0
    %15 = vsyncpa [#allocation6], 0
    %16 = vsyncpa [#allocation4], 0
    %s17 = scalar_lea.sflag [#allocation4], 1
    %18 = vsyncpa %s17, 0
    loop: start=0, step=1, limit=4
    $region2: #{tpu_custom_call.1} parent=1 // loop_pre_header
      _
    $region3: #{tpu_custom_call.1} parent=1 // loop_header
      %s20 = sphi 0, %s24
      %p21 = scmp.ge.s32.totalorder %s20, 4
      %s30 = sphi 0, %s32
      %s33 = sphi 0, %s30
      %s34 = sphi 0, %s33
      %s50 = sphi 0, %s34
      %s54 = sphi 0, %s54
      %s56 = sphi 0, %s54
      %s57 = sphi 0, %s56
      %s71 = sphi 0, %s57
      %s75 = sphi 0, %s75
      %s77 = sphi 0, %s75
      %s78 = sphi 0, %s77
      %s92 = sphi 0, %s78
      %s96 = sphi 0, %s96
      %s98 = sphi 0, %s96
      %s99 = sphi 0, %s98
      %s113 = sphi 0, %s99
      %s117 = sphi 0, %s117
      %s119 = sphi 0, %s117
      %s120 = sphi 0, %s119
      %s134 = sphi 0, %s120
      %s138 = sphi 0, %s138
      %s140 = sphi 0, %s138
      %s141 = sphi 0, %s140
      %s155 = sphi 0, %s141
      %s159 = sphi 0, %s159
      %s161 = sphi 0, %s159
      %s162 = sphi 0, %s161
      %s176 = sphi 0, %s162
      %s182 = sphi 0, %s184
      %s185 = sphi 0, %s182
      %s186 = sphi 0, %s185
      %s202 = sphi 0, %s186
    $region4: #{tpu_custom_call.1} parent=1 // loop_header_branch
      %23 = sbr.rel (%p21) target = $region8
    $region5: #{tpu_custom_call.1} parent=1 // loop_body
      %s25 = ssub.s32 %s20, 1
      %s26 = ssub.s32 %s20, 2
      %s27 = sadd.s32 %s20, 1
      %s28 = ssub.s32 %s20, %s27
      %p29 = scmp.eq.s32.totalorder %s28, 0
      %s31 = sadd.s32 %s30, 1
      %s32 = scalar_select %p29, %s30, %s31
      %p35 = pneg %p29
      %p36 = scmp.eq.s32.totalorder %s20, 1
      %p37 = por %p35, %p36
      %p38 = scmp.ne.s32.totalorder %s30, %s33
      %p39 = scmp.eq.s32.totalorder %s20, 0
      %p40 = por %p38, %p39
      %p41 = scmp.ne.s32.totalorder %s30, %s33
      %p42 = scmp.eq.s32.totalorder %s25, 1
      %p43 = por %p41, %p42
      %p44 = scmp.ne.s32.totalorder %s33, %s34
      %p45 = scmp.eq.s32.totalorder %s25, 0
      %p46 = por %p44, %p45
      %p47 = scmp.ne.s32.totalorder %s33, %s34
      %p48 = scmp.eq.s32.totalorder %s26, 1
      %p49 = por %p47, %p48
      %p51 = scmp.ne.s32.totalorder %s34, %s50
      %p52 = scmp.eq.s32.totalorder %s26, 0
      %p53 = por %p51, %p52
      %s55 = sadd.s32 %s54, 1
      %p58 = scmp.eq.s32.totalorder %s20, 1
      %p59 = scmp.ne.s32.totalorder %s54, %s56
      %p60 = scmp.eq.s32.totalorder %s20, 0
      %p61 = por %p59, %p60
      %p62 = scmp.ne.s32.totalorder %s54, %s56
      %p63 = scmp.eq.s32.totalorder %s25, 1
      %p64 = por %p62, %p63
      %p65 = scmp.ne.s32.totalorder %s56, %s57
      %p66 = scmp.eq.s32.totalorder %s25, 0
      %p67 = por %p65, %p66
      %p68 = scmp.ne.s32.totalorder %s56, %s57
      %p69 = scmp.eq.s32.totalorder %s26, 1
      %p70 = por %p68, %p69
      %p72 = scmp.ne.s32.totalorder %s57, %s71
      %p73 = scmp.eq.s32.totalorder %s26, 0
      %p74 = por %p72, %p73
      %s76 = sadd.s32 %s75, 1
      %p79 = scmp.eq.s32.totalorder %s20, 1
      %p80 = scmp.ne.s32.totalorder %s75, %s77
      %p81 = scmp.eq.s32.totalorder %s20, 0
      %p82 = por %p80, %p81
      %p83 = scmp.ne.s32.totalorder %s75, %s77
      %p84 = scmp.eq.s32.totalorder %s25, 1
      %p85 = por %p83, %p84
      %p86 = scmp.ne.s32.totalorder %s77, %s78
      %p87 = scmp.eq.s32.totalorder %s25, 0
      %p88 = por %p86, %p87
      %p89 = scmp.ne.s32.totalorder %s77, %s78
      %p90 = scmp.eq.s32.totalorder %s26, 1
      %p91 = por %p89, %p90
      %p93 = scmp.ne.s32.totalorder %s78, %s92
      %p94 = scmp.eq.s32.totalorder %s26, 0
      %p95 = por %p93, %p94
      %s97 = sadd.s32 %s96, 1
      %p100 = scmp.eq.s32.totalorder %s20, 1
      %p101 = scmp.ne.s32.totalorder %s96, %s98
      %p102 = scmp.eq.s32.totalorder %s20, 0
      %p103 = por %p101, %p102
      %p104 = scmp.ne.s32.totalorder %s96, %s98
      %p105 = scmp.eq.s32.totalorder %s25, 1
      %p106 = por %p104, %p105
      %p107 = scmp.ne.s32.totalorder %s98, %s99
      %p108 = scmp.eq.s32.totalorder %s25, 0
      %p109 = por %p107, %p108
      %p110 = scmp.ne.s32.totalorder %s98, %s99
      %p111 = scmp.eq.s32.totalorder %s26, 1
      %p112 = por %p110, %p111
      %p114 = scmp.ne.s32.totalorder %s99, %s113
      %p115 = scmp.eq.s32.totalorder %s26, 0
      %p116 = por %p114, %p115
      %s118 = sadd.s32 %s117, 1
      %p121 = scmp.eq.s32.totalorder %s20, 1
      %p122 = scmp.ne.s32.totalorder %s117, %s119
      %p123 = scmp.eq.s32.totalorder %s20, 0
      %p124 = por %p122, %p123
      %p125 = scmp.ne.s32.totalorder %s117, %s119
      %p126 = scmp.eq.s32.totalorder %s25, 1
      %p127 = por %p125, %p126
      %p128 = scmp.ne.s32.totalorder %s119, %s120
      %p129 = scmp.eq.s32.totalorder %s25, 0
      %p130 = por %p128, %p129
      %p131 = scmp.ne.s32.totalorder %s119, %s120
      %p132 = scmp.eq.s32.totalorder %s26, 1
      %p133 = por %p131, %p132
      %p135 = scmp.ne.s32.totalorder %s120, %s134
      %p136 = scmp.eq.s32.totalorder %s26, 0
      %p137 = por %p135, %p136
      %s139 = sadd.s32 %s138, 1
      %p142 = scmp.eq.s32.totalorder %s20, 1
      %p143 = scmp.ne.s32.totalorder %s138, %s140
      %p144 = scmp.eq.s32.totalorder %s20, 0
      %p145 = por %p143, %p144
      %p146 = scmp.ne.s32.totalorder %s138, %s140
      %p147 = scmp.eq.s32.totalorder %s25, 1
      %p148 = por %p146, %p147
      %p149 = scmp.ne.s32.totalorder %s140, %s141
      %p150 = scmp.eq.s32.totalorder %s25, 0
      %p151 = por %p149, %p150
      %p152 = scmp.ne.s32.totalorder %s140, %s141
      %p153 = scmp.eq.s32.totalorder %s26, 1
      %p154 = por %p152, %p153
      %p156 = scmp.ne.s32.totalorder %s141, %s155
      %p157 = scmp.eq.s32.totalorder %s26, 0
      %p158 = por %p156, %p157
      %s160 = sadd.s32 %s159, 1
      %p163 = scmp.eq.s32.totalorder %s20, 1
      %p164 = scmp.ne.s32.totalorder %s159, %s161
      %p165 = scmp.eq.s32.totalorder %s20, 0
      %p166 = por %p164, %p165
      %p167 = scmp.ne.s32.totalorder %s159, %s161
      %p168 = scmp.eq.s32.totalorder %s25, 1
      %p169 = por %p167, %p168
      %p170 = scmp.ne.s32.totalorder %s161, %s162
      %p171 = scmp.eq.s32.totalorder %s25, 0
      %p172 = por %p170, %p171
      %p173 = scmp.ne.s32.totalorder %s161, %s162
      %p174 = scmp.eq.s32.totalorder %s26, 1
      %p175 = por %p173, %p174
      %p177 = scmp.ne.s32.totalorder %s162, %s176
      %p178 = scmp.eq.s32.totalorder %s26, 0
      %p179 = por %p177, %p178
      %s180 = ssub.s32 %s20, %s27
      %p181 = scmp.eq.s32.totalorder %s180, 0
      %s183 = sadd.s32 %s182, 1
      %s184 = scalar_select %p181, %s182, %s183
      %p187 = pneg %p181
      %p188 = scmp.eq.s32.totalorder %s20, 1
      %p189 = por %p187, %p188
      %p190 = scmp.ne.s32.totalorder %s182, %s185
      %p191 = scmp.eq.s32.totalorder %s20, 0
      %p192 = por %p190, %p191
      %p193 = scmp.ne.s32.totalorder %s182, %s185
      %p194 = scmp.eq.s32.totalorder %s25, 1
      %p195 = por %p193, %p194
      %p196 = scmp.ne.s32.totalorder %s185, %s186
      %p197 = scmp.eq.s32.totalorder %s25, 0
      %p198 = por %p196, %p197
      %p199 = scmp.ne.s32.totalorder %s185, %s186
      %p200 = scmp.eq.s32.totalorder %s26, 1
      %p201 = por %p199, %p200
      %p203 = scmp.ne.s32.totalorder %s186, %s202
      %p204 = scmp.eq.s32.totalorder %s26, 0
      %p205 = por %p203, %p204
      %p206 = scmp.le.s32.totalorder 1, %s20
      %p207 = scmp.lt.s32.totalorder %s20, 3
      %p208 = pnand %p206, %p207
      %p209 = pneg %p208
      // Predicated region
      $region9: #{tpu_custom_call.1} parent=5 // pred_check
        _
      $region10: #{tpu_custom_call.1} parent=5 // pred_check_branch
        %211 = sbr.rel (%p208) target = $region12
      $region11: #{tpu_custom_call.1} parent=5 // pred_region
        %s212 = ssub.s32 %s20, 1
        // Predicated region
        $region13: #{tpu_custom_call.1} parent=11 // pred_check
          %p213 = pneg %p67
        $region14: #{tpu_custom_call.1} parent=11 // pred_check_branch
          %215 = sbr.rel (%p213) target = $region16
        $region15: #{tpu_custom_call.1} parent=11 // pred_region
          %s217 = ssub.s32 73728, 73728
          %218 = vsyncadd [#allocation6], %s217
          %s219 = sshll.u32 [#allocation5], 4
          %s220 = int_to_ptr.vmem [resolvable:$true] %s219
          %225 = dma.hbm_to_vmem [thread:$0]  %s1, 73728, %s220, [#allocation6], 256, 256, 16
        $region16: #{tpu_custom_call.1} parent=11 // pred_fallthru
          _
        // Predicated region
        $region17: #{tpu_custom_call.1} parent=11 // pred_check
          %p226 = pneg %p88
        $region18: #{tpu_custom_call.1} parent=11 // pred_check_branch
          %228 = sbr.rel (%p226) target = $region20
        $region19: #{tpu_custom_call.1} parent=11 // pred_region
          _
        $region20: #{tpu_custom_call.1} parent=11 // pred_fallthru
          _
        // Predicated region
        $region21: #{tpu_custom_call.1} parent=11 // pred_check
          %p229 = pneg %p109
        $region22: #{tpu_custom_call.1} parent=11 // pred_check_branch
          %231 = sbr.rel (%p229) target = $region24
        $region23: #{tpu_custom_call.1} parent=11 // pred_region
          _
        $region24: #{tpu_custom_call.1} parent=11 // pred_fallthru
          _
        // Predicated region
        $region25: #{tpu_custom_call.1} parent=11 // pred_check
          %p232 = pneg %p130
        $region26: #{tpu_custom_call.1} parent=11 // pred_check_branch
          %234 = sbr.rel (%p232) target = $region28
        $region27: #{tpu_custom_call.1} parent=11 // pred_region
          _
        $region28: #{tpu_custom_call.1} parent=11 // pred_fallthru
          _
        // Predicated region
        $region29: #{tpu_custom_call.1} parent=11 // pred_check
          %p235 = pneg %p151
        $region30: #{tpu_custom_call.1} parent=11 // pred_check_branch
          %237 = sbr.rel (%p235) target = $region32
        $region31: #{tpu_custom_call.1} parent=11 // pred_region
          _
        $region32: #{tpu_custom_call.1} parent=11 // pred_fallthru
          _
        // Predicated region
        $region33: #{tpu_custom_call.1} parent=11 // pred_check
          %p238 = pneg %p172
        $region34: #{tpu_custom_call.1} parent=11 // pred_check_branch
          %240 = sbr.rel (%p238) target = $region36
        $region35: #{tpu_custom_call.1} parent=11 // pred_region
          %s242 = ssub.s32 16, 16
          %243 = vsyncadd [#allocation6], %s242
          %s245 = sshll.u32 [#allocation7], 4
          %s246 = int_to_ptr.vmem [resolvable:$true] %s245
          %248 = dma.hbm_to_vmem [thread:$0]  %s6, 16, %s246, [#allocation6]
        $region36: #{tpu_custom_call.1} parent=11 // pred_fallthru
          _
      $region12: #{tpu_custom_call.1} parent=5 // pred_fallthru
        _
      %p249 = scmp.lt.s32.totalorder %s20, 2
      // Predicated region
      $region37: #{tpu_custom_call.1} parent=5 // pred_check
        %p250 = pneg %p249
      $region38: #{tpu_custom_call.1} parent=5 // pred_check_branch
        %252 = sbr.rel (%p250) target = $region40
      $region39: #{tpu_custom_call.1} parent=5 // pred_region
        // Predicated region
        $region41: #{tpu_custom_call.1} parent=39 // pred_check
          %p253 = pneg %p40
        $region42: #{tpu_custom_call.1} parent=39 // pred_check_branch
          %255 = sbr.rel (%p253) target = $region44
        $region43: #{tpu_custom_call.1} parent=39 // pred_region
          %s256 = sand.u32 %s30, 1
          %s257 = scalar_lea.sflag [#allocation3], %s256
          %s258 = sand.u32 %s30, 1
          %s259 = smul.addr %s258, 8
          %s260 = scalar_lea.vmem [#allocation2], %s259
          %s262 = ssub.s32 128, 128
          %263 = vsyncadd %s257, %s262
          %s264 = smul.addr %s20, 2
          %s265 = smul.addr %s264, 64
          %s266 = scalar_lea.hbm %s0, %s265
          %s268 = sshll.u32 %s260, 4
          %s269 = int_to_ptr.vmem [resolvable:$true] %s268
          %271 = dma.hbm_to_vmem [thread:$0]  %s266, 128, %s269, %s257
        $region44: #{tpu_custom_call.1} parent=39 // pred_fallthru
          _
      $region40: #{tpu_custom_call.1} parent=5 // pred_fallthru
        _
      %p272 = scmp.le.s32.totalorder 1, %s20
      %p273 = scmp.lt.s32.totalorder %s20, 3
      %p274 = pnand %p272, %p273
      %p275 = pneg %p274
      // Predicated region
      $region45: #{tpu_custom_call.1} parent=5 // pred_check
        _
      $region46: #{tpu_custom_call.1} parent=5 // pred_check_branch
        %277 = sbr.rel (%p274) target = $region48
      $region47: #{tpu_custom_call.1} parent=5 // pred_region
        %s278 = ssub.s32 %s20, 1
        %s279 = sand.u32 %s33, 1
        %s280 = scalar_lea.sflag [#allocation3], %s279
        %s281 = sand.u32 %s33, 1
        %s282 = smul.addr %s281, 8
        %s283 = scalar_lea.vmem [#allocation2], %s282
        // Predicated region
        $region49: #{tpu_custom_call.1} parent=47 // pred_check
          %p284 = pneg %p46
        $region50: #{tpu_custom_call.1} parent=47 // pred_check_branch
          %286 = sbr.rel (%p284) target = $region52
        $region51: #{tpu_custom_call.1} parent=47 // pred_region
          %287 = dma.done %s280, 128
        $region52: #{tpu_custom_call.1} parent=47 // pred_fallthru
          _
        // Predicated region
        $region53: #{tpu_custom_call.1} parent=47 // pred_check
          %p288 = pneg %p67
        $region54: #{tpu_custom_call.1} parent=47 // pred_check_branch
          %290 = sbr.rel (%p288) target = $region56
        $region55: #{tpu_custom_call.1} parent=47 // pred_region
          %291 = dma.done [#allocation6], 73728
        $region56: #{tpu_custom_call.1} parent=47 // pred_fallthru
          _
        // Predicated region
        $region57: #{tpu_custom_call.1} parent=47 // pred_check
          %p292 = pneg %p172
        $region58: #{tpu_custom_call.1} parent=47 // pred_check_branch
          %294 = sbr.rel (%p292) target = $region60
        $region59: #{tpu_custom_call.1} parent=47 // pred_region
          %295 = dma.done [#allocation6], 16
        $region60: #{tpu_custom_call.1} parent=47 // pred_fallthru
          _
        %s296 = sand.u32 %s33, 1
        %s297 = scalar_lea.sflag [#allocation3], %s296
        %s298 = sand.u32 %s33, 1
        %s299 = smul.addr %s298, 8
        %s300 = scalar_lea.vmem [#allocation2], %s299
        %p301 = pneg %p46
        %p302 = pneg %p43
        %p303 = pneg %p67
        %p304 = pneg %p64
        %p305 = pneg %p88
        %p306 = pneg %p85
        %p307 = pneg %p109
        %p308 = pneg %p106
        %p309 = pneg %p130
        %p310 = pneg %p127
        %p311 = pneg %p151
        %p312 = pneg %p148
        %p313 = pneg %p172
        %p314 = pneg %p169
        %p315 = pneg %p198
        %p316 = pneg %p195
        %s317 = sand.u32 %s185, 1
        %s318 = scalar_lea.sflag [#allocation4], %s317
        %s319 = sand.u32 %s185, 1
        %s320 = scalar_lea.vmem [#allocation8], %s319
        %v321 = vld [vmem:[%s283] sm:$0xff]
        %v322 = vld [vmem:[#allocation5] sm:$0xff]
        %v323 = vld [vmem:[#allocation5 + $0x8] sm:$0xff]
        %v324 = vld [vmem:[#allocation5 + $0x10] sm:$0xff]
        %v325 = vld [vmem:[#allocation5 + $0x18] sm:$0xff]
        %v326 = vld [vmem:[#allocation5 + $0x20] sm:$0xff]
        %v327 = vld [vmem:[#allocation5 + $0x28] sm:$0xff]
        %v328 = vld [vmem:[#allocation5 + $0x30] sm:$0xff]
        %v329 = vld [vmem:[#allocation5 + $0x38] sm:$0xff]
        %v330 = vld [vmem:[#allocation5 + $0x40] sm:$0xff]
        %v331 = vld [vmem:[#allocation5 + $0x48] sm:$0xff]
        %v332 = vld [vmem:[#allocation5 + $0x50] sm:$0xff]
        %v333 = vld [vmem:[#allocation5 + $0x58] sm:$0xff]
        %v334 = vld [vmem:[#allocation5 + $0x60] sm:$0xff]
        %v335 = vld [vmem:[#allocation5 + $0x68] sm:$0xff]
        %v336 = vld [vmem:[#allocation5 + $0x70] sm:$0xff]
        %v337 = vld [vmem:[#allocation5 + $0x78] sm:$0xff]
        %v338 = vld [vmem:[#allocation5 + $0x80] sm:$0xff]
        %v339 = vld [vmem:[#allocation5 + $0x88] sm:$0xff]
        %v340 = vld [vmem:[#allocation5 + $0x90] sm:$0xff]
        %v341 = vld [vmem:[#allocation5 + $0x98] sm:$0xff]
        %v342 = vld [vmem:[#allocation5 + $0xa0] sm:$0xff]
        %v343 = vld [vmem:[#allocation5 + $0xa8] sm:$0xff]
        %v344 = vld [vmem:[#allocation5 + $0xb0] sm:$0xff]
        %v345 = vld [vmem:[#allocation5 + $0xb8] sm:$0xff]
        %v346 = vld [vmem:[#allocation5 + $0xc0] sm:$0xff]
        %v347 = vld [vmem:[#allocation5 + $0xc8] sm:$0xff]
        %v348 = vld [vmem:[#allocation5 + $0xd0] sm:$0xff]
        %v349 = vld [vmem:[#allocation5 + $0xd8] sm:$0xff]
        %v350 = vld [vmem:[#allocation5 + $0xe0] sm:$0xff]
        %v351 = vld [vmem:[#allocation5 + $0xe8] sm:$0xff]
        %v352 = vld [vmem:[#allocation5 + $0xf0] sm:$0xff]
        %v353 = vld [vmem:[#allocation5 + $0xf8] sm:$0xff]
        %v354 = vld [vmem:[#allocation5 + $0x100] sm:$0xff]
        %v355 = vld [vmem:[#allocation5 + $0x108] sm:$0xff]
        %v356 = vld [vmem:[#allocation5 + $0x110] sm:$0xff]
        %v357 = vld [vmem:[#allocation5 + $0x118] sm:$0xff]
        %v358 = vld [vmem:[#allocation5 + $0x120] sm:$0xff]
        %v359 = vld [vmem:[#allocation5 + $0x128] sm:$0xff]
        %v360 = vld [vmem:[#allocation5 + $0x130] sm:$0xff]
        %v361 = vld [vmem:[#allocation5 + $0x138] sm:$0xff]
        %v362 = vld [vmem:[#allocation5 + $0x140] sm:$0xff]
        %v363 = vld [vmem:[#allocation5 + $0x148] sm:$0xff]
        %v364 = vld [vmem:[#allocation5 + $0x150] sm:$0xff]
        %v365 = vld [vmem:[#allocation5 + $0x158] sm:$0xff]
        %v366 = vld [vmem:[#allocation5 + $0x160] sm:$0xff]
        %v367 = vld [vmem:[#allocation5 + $0x168] sm:$0xff]
        %v368 = vld [vmem:[#allocation5 + $0x170] sm:$0xff]
        %v369 = vld [vmem:[#allocation5 + $0x178] sm:$0xff]
        %v370 = vld [vmem:[#allocation5 + $0x180] sm:$0xff]
        %v371 = vld [vmem:[#allocation5 + $0x188] sm:$0xff]
        %v372 = vld [vmem:[#allocation5 + $0x190] sm:$0xff]
        %v373 = vld [vmem:[#allocation5 + $0x198] sm:$0xff]
        %v374 = vld [vmem:[#allocation5 + $0x1a0] sm:$0xff]
        %v375 = vld [vmem:[#allocation5 + $0x1a8] sm:$0xff]
        %v376 = vld [vmem:[#allocation5 + $0x1b0] sm:$0xff]
        %v377 = vld [vmem:[#allocation5 + $0x1b8] sm:$0xff]
        %v378 = vld [vmem:[#allocation5 + $0x1c0] sm:$0xff]
        %v379 = vld [vmem:[#allocation5 + $0x1c8] sm:$0xff]
        %v380 = vld [vmem:[#allocation5 + $0x1d0] sm:$0xff]
        %v381 = vld [vmem:[#allocation5 + $0x1d8] sm:$0xff]
        %v382 = vld [vmem:[#allocation5 + $0x1e0] sm:$0xff]
        %v383 = vld [vmem:[#allocation5 + $0x1e8] sm:$0xff]
        %v384 = vld [vmem:[#allocation5 + $0x1f0] sm:$0xff]
        %v385 = vld [vmem:[#allocation5 + $0x1f8] sm:$0xff]
        %v387 = vcombine.high %v321, %v321
        %389 = vmatprep.subr.mxu0 %v323
        %390 = vmatpush1.msra.mxu0 %v322
        %391 = vmatprep.subr.mxu0 %v325
        %392 = vmatpush1.msra.mxu0 %v324
        %393 = vmatprep.subr.mxu0 %v327
        %394 = vmatpush1.msra.mxu0 %v326
        %395 = vmatprep.subr.mxu0 %v329
        %396 = vmatpush1.msra.mxu0 %v328
        %397 = vmatprep.subr.mxu0 %v331
        %398 = vmatpush1.msra.mxu0 %v330
        %399 = vmatprep.subr.mxu0 %v333
        %400 = vmatpush1.msra.mxu0 %v332
        %401 = vmatprep.subr.mxu0 %v335
        %402 = vmatpush1.msra.mxu0 %v334
        %403 = vmatprep.subr.mxu0 %v337
        %404 = vmatpush1.msra.mxu0 %v336
        %405 = vmatprep.subr.mxu0 %v339
        %406 = vmatpush1.msra.mxu0 %v338
        %407 = vmatprep.subr.mxu0 %v341
        %408 = vmatpush1.msra.mxu0 %v340
        %409 = vmatprep.subr.mxu0 %v343
        %410 = vmatpush1.msra.mxu0 %v342
        %411 = vmatprep.subr.mxu0 %v345
        %412 = vmatpush1.msra.mxu0 %v344
        %413 = vmatprep.subr.mxu0 %v347
        %414 = vmatpush1.msra.mxu0 %v346
        %415 = vmatprep.subr.mxu0 %v349
        %416 = vmatpush1.msra.mxu0 %v348
        %417 = vmatprep.subr.mxu0 %v351
        %418 = vmatpush1.msra.mxu0 %v350
        %419 = vmatprep.subr.mxu0 %v353
        %420 = vmatpush1.msra.mxu0 %v352
        %421 = vmatprep.subr.mxu0 %v355
        %422 = vmatpush1.msra.mxu0 %v354
        %423 = vmatprep.subr.mxu0 %v357
        %424 = vmatpush1.msra.mxu0 %v356
        %425 = vmatprep.subr.mxu0 %v359
        %426 = vmatpush1.msra.mxu0 %v358
        %427 = vmatprep.subr.mxu0 %v361
        %428 = vmatpush1.msra.mxu0 %v360
        %429 = vmatprep.subr.mxu0 %v363
        %430 = vmatpush1.msra.mxu0 %v362
        %431 = vmatprep.subr.mxu0 %v365
        %432 = vmatpush1.msra.mxu0 %v364
        %433 = vmatprep.subr.mxu0 %v367
        %434 = vmatpush1.msra.mxu0 %v366
        %435 = vmatprep.subr.mxu0 %v369
        %436 = vmatpush1.msra.mxu0 %v368
        %437 = vmatprep.subr.mxu0 %v371
        %438 = vmatpush1.msra.mxu0 %v370
        %439 = vmatprep.subr.mxu0 %v373
        %440 = vmatpush1.msra.mxu0 %v372
        %441 = vmatprep.subr.mxu0 %v375
        %442 = vmatpush1.msra.mxu0 %v374
        %443 = vmatprep.subr.mxu0 %v377
        %444 = vmatpush1.msra.mxu0 %v376
        %445 = vmatprep.subr.mxu0 %v379
        %446 = vmatpush1.msra.mxu0 %v378
        %447 = vmatprep.subr.mxu0 %v381
        %448 = vmatpush1.msra.mxu0 %v380
        %449 = vmatprep.subr.mxu0 %v383
        %450 = vmatpush1.msra.mxu0 %v382
        %451 = vmatprep.subr.mxu0 %v385
        %452 = vmatpush1.msra.mxu0 %v384
        %453 = vmatprep.mubr.f32.mxu0 %v387
        %454 = vmatmul.mubr.f32.gmra.mrb[0].mxu0 %v321
        %v455 = vpop.f32.mrb[0].mxu0
        %v456 = vadd.f32 0.0, %v455
        %v457 = vpop.f32.mrb[0].mxu0
        %v458 = vadd.f32 0.0, %v457
        %459 = vdwg.mxu0
        %v460 = vld [vmem:[%s2] sm:$0xff]
        %s461 = scalar_lea.vmem [#allocation5], 512
        %v462 = vld [vmem:[%s461] sm:$0xff]
        %v463 = vld [vmem:[%s461 + $0x8] sm:$0xff]
        %v464 = vld [vmem:[%s461 + $0x10] sm:$0xff]
        %v465 = vld [vmem:[%s461 + $0x18] sm:$0xff]
        %v466 = vld [vmem:[%s461 + $0x20] sm:$0xff]
        %v467 = vld [vmem:[%s461 + $0x28] sm:$0xff]
        %v468 = vld [vmem:[%s461 + $0x30] sm:$0xff]
        %v469 = vld [vmem:[%s461 + $0x38] sm:$0xff]
        %v470 = vld [vmem:[%s461 + $0x40] sm:$0xff]
        %v471 = vld [vmem:[%s461 + $0x48] sm:$0xff]
        %v472 = vld [vmem:[%s461 + $0x50] sm:$0xff]
        %v473 = vld [vmem:[%s461 + $0x58] sm:$0xff]
        %v474 = vld [vmem:[%s461 + $0x60] sm:$0xff]
        %v475 = vld [vmem:[%s461 + $0x68] sm:$0xff]
        %v476 = vld [vmem:[%s461 + $0x70] sm:$0xff]
        %v477 = vld [vmem:[%s461 + $0x78] sm:$0xff]
        %v478 = vld [vmem:[%s461 + $0x80] sm:$0xff]
        %v479 = vld [vmem:[%s461 + $0x88] sm:$0xff]
        %v480 = vld [vmem:[%s461 + $0x90] sm:$0xff]
        %v481 = vld [vmem:[%s461 + $0x98] sm:$0xff]
        %v482 = vld [vmem:[%s461 + $0xa0] sm:$0xff]
        %v483 = vld [vmem:[%s461 + $0xa8] sm:$0xff]
        %v484 = vld [vmem:[%s461 + $0xb0] sm:$0xff]
        %v485 = vld [vmem:[%s461 + $0xb8] sm:$0xff]
        %v486 = vld [vmem:[%s461 + $0xc0] sm:$0xff]
        %v487 = vld [vmem:[%s461 + $0xc8] sm:$0xff]
        %v488 = vld [vmem:[%s461 + $0xd0] sm:$0xff]
        %v489 = vld [vmem:[%s461 + $0xd8] sm:$0xff]
        %v490 = vld [vmem:[%s461 + $0xe0] sm:$0xff]
        %v491 = vld [vmem:[%s461 + $0xe8] sm:$0xff]
        %v492 = vld [vmem:[%s461 + $0xf0] sm:$0xff]
        %v493 = vld [vmem:[%s461 + $0xf8] sm:$0xff]
        %v494 = vld [vmem:[%s461 + $0x100] sm:$0xff]
        %v495 = vld [vmem:[%s461 + $0x108] sm:$0xff]
        %v496 = vld [vmem:[%s461 + $0x110] sm:$0xff]
        %v497 = vld [vmem:[%s461 + $0x118] sm:$0xff]
        %v498 = vld [vmem:[%s461 + $0x120] sm:$0xff]
        %v499 = vld [vmem:[%s461 + $0x128] sm:$0xff]
        %v500 = vld [vmem:[%s461 + $0x130] sm:$0xff]
        %v501 = vld [vmem:[%s461 + $0x138] sm:$0xff]
        %v502 = vld [vmem:[%s461 + $0x140] sm:$0xff]
        %v503 = vld [vmem:[%s461 + $0x148] sm:$0xff]
        %v504 = vld [vmem:[%s461 + $0x150] sm:$0xff]
        %v505 = vld [vmem:[%s461 + $0x158] sm:$0xff]
        %v506 = vld [vmem:[%s461 + $0x160] sm:$0xff]
        %v507 = vld [vmem:[%s461 + $0x168] sm:$0xff]
        %v508 = vld [vmem:[%s461 + $0x170] sm:$0xff]
        %v509 = vld [vmem:[%s461 + $0x178] sm:$0xff]
        %v510 = vld [vmem:[%s461 + $0x180] sm:$0xff]
        %v511 = vld [vmem:[%s461 + $0x188] sm:$0xff]
        %v512 = vld [vmem:[%s461 + $0x190] sm:$0xff]
        %v513 = vld [vmem:[%s461 + $0x198] sm:$0xff]
        %v514 = vld [vmem:[%s461 + $0x1a0] sm:$0xff]
        %v515 = vld [vmem:[%s461 + $0x1a8] sm:$0xff]
        %v516 = vld [vmem:[%s461 + $0x1b0] sm:$0xff]
        %v517 = vld [vmem:[%s461 + $0x1b8] sm:$0xff]
        %v518 = vld [vmem:[%s461 + $0x1c0] sm:$0xff]
        %v519 = vld [vmem:[%s461 + $0x1c8] sm:$0xff]
        %v520 = vld [vmem:[%s461 + $0x1d0] sm:$0xff]
        %v521 = vld [vmem:[%s461 + $0x1d8] sm:$0xff]
        %v522 = vld [vmem:[%s461 + $0x1e0] sm:$0xff]
        %v523 = vld [vmem:[%s461 + $0x1e8] sm:$0xff]
        %v524 = vld [vmem:[%s461 + $0x1f0] sm:$0xff]
        %v525 = vld [vmem:[%s461 + $0x1f8] sm:$0xff]
        %526 = vmatprep.subr.mxu0 %v463
        %527 = vmatpush1.msra.mxu0 %v462
        %528 = vmatprep.subr.mxu0 %v465
        %529 = vmatpush1.msra.mxu0 %v464
        %530 = vmatprep.subr.mxu0 %v467
        %531 = vmatpush1.msra.mxu0 %v466
        %532 = vmatprep.subr.mxu0 %v469
        %533 = vmatpush1.msra.mxu0 %v468
        %534 = vmatprep.subr.mxu0 %v471
        %535 = vmatpush1.msra.mxu0 %v470
        %536 = vmatprep.subr.mxu0 %v473
        %537 = vmatpush1.msra.mxu0 %v472
        %538 = vmatprep.subr.mxu0 %v475
        %539 = vmatpush1.msra.mxu0 %v474
        %540 = vmatprep.subr.mxu0 %v477
        %541 = vmatpush1.msra.mxu0 %v476
        %542 = vmatprep.subr.mxu0 %v479
        %543 = vmatpush1.msra.mxu0 %v478
        %544 = vmatprep.subr.mxu0 %v481
        %545 = vmatpush1.msra.mxu0 %v480
        %546 = vmatprep.subr.mxu0 %v483
        %547 = vmatpush1.msra.mxu0 %v482
        %548 = vmatprep.subr.mxu0 %v485
        %549 = vmatpush1.msra.mxu0 %v484
        %550 = vmatprep.subr.mxu0 %v487
        %551 = vmatpush1.msra.mxu0 %v486
        %552 = vmatprep.subr.mxu0 %v489
        %553 = vmatpush1.msra.mxu0 %v488
        %554 = vmatprep.subr.mxu0 %v491
        %555 = vmatpush1.msra.mxu0 %v490
        %556 = vmatprep.subr.mxu0 %v493
        %557 = vmatpush1.msra.mxu0 %v492
        %558 = vmatprep.subr.mxu0 %v495
        %559 = vmatpush1.msra.mxu0 %v494
        %560 = vmatprep.subr.mxu0 %v497
        %561 = vmatpush1.msra.mxu0 %v496
        %562 = vmatprep.subr.mxu0 %v499
        %563 = vmatpush1.msra.mxu0 %v498
        %564 = vmatprep.subr.mxu0 %v501
        %565 = vmatpush1.msra.mxu0 %v500
        %566 = vmatprep.subr.mxu0 %v503
        %567 = vmatpush1.msra.mxu0 %v502
        %568 = vmatprep.subr.mxu0 %v505
        %569 = vmatpush1.msra.mxu0 %v504
        %570 = vmatprep.subr.mxu0 %v507
        %571 = vmatpush1.msra.mxu0 %v506
        %572 = vmatprep.subr.mxu0 %v509
        %573 = vmatpush1.msra.mxu0 %v508
        %574 = vmatprep.subr.mxu0 %v511
        %575 = vmatpush1.msra.mxu0 %v510
        %576 = vmatprep.subr.mxu0 %v513
        %577 = vmatpush1.msra.mxu0 %v512
        %578 = vmatprep.subr.mxu0 %v515
        %579 = vmatpush1.msra.mxu0 %v514
        %580 = vmatprep.subr.mxu0 %v517
        %581 = vmatpush1.msra.mxu0 %v516
        %582 = vmatprep.subr.mxu0 %v519
        %583 = vmatpush1.msra.mxu0 %v518
        %584 = vmatprep.subr.mxu0 %v521
        %585 = vmatpush1.msra.mxu0 %v520
        %586 = vmatprep.subr.mxu0 %v523
        %587 = vmatpush1.msra.mxu0 %v522
        %588 = vmatprep.subr.mxu0 %v525
        %589 = vmatpush1.msra.mxu0 %v524
        %590 = vmatprep.mubr.f32.mxu0 %v387
        %591 = vmatmul.mubr.f32.gmra.mrb[0].mxu0 %v321
        %v592 = vpop.f32.mrb[0].mxu0
        %v593 = vadd.f32 0.0, %v592
        %v594 = vpop.f32.mrb[0].mxu0
        %v595 = vadd.f32 0.0, %v594
        %596 = vdwg.mxu0
        %s597 = scalar_lea.vmem %s2, 8
        %v598 = vld [vmem:[%s597] sm:$0xff]
        %vm599 = vcmask 31744
        %v601 = vsel %vm599, %v598, 0
        %vm603 = vcmask 1043456
        %v605 = vsel %vm603, %v593, 0
        %v608 = vsel %vm603, %v595, 0
        %610 = vmatprep.subr.mxu0 %v608
        %611 = vmatpush1.msra.mxu0 %v605
        %612 = vmatprep.subr.mxu0 0.0
        %613 = vmatpush1.msra.mxu0 0.0
        %614 = vmatprep.subr.mxu0 0.0
        %615 = vmatpush1.msra.mxu0 0.0
        %616 = vmatprep.subr.mxu0 0.0
        %617 = vmatpush1.msra.mxu0 0.0
        %618 = vmatprep.subr.mxu0 0.0
        %619 = vmatpush1.msra.mxu0 0.0
        %620 = vmatprep.subr.mxu0 0.0
        %621 = vmatpush1.msra.mxu0 0.0
        %622 = vmatprep.subr.mxu0 0.0
        %623 = vmatpush1.msra.mxu0 0.0
        %624 = vmatprep.subr.mxu0 0.0
        %625 = vmatpush1.msra.mxu0 0.0
        %626 = vmatprep.subr.mxu0 0.0
        %627 = vmatpush1.msra.mxu0 0.0
        %628 = vmatprep.subr.mxu0 0.0
        %629 = vmatpush1.msra.mxu0 0.0
        %630 = vmatprep.subr.mxu0 0.0
        %631 = vmatpush1.msra.mxu0 0.0
        %632 = vmatprep.subr.mxu0 0.0
        %633 = vmatpush1.msra.mxu0 0.0
        %634 = vmatprep.subr.mxu0 0.0
        %635 = vmatpush1.msra.mxu0 0.0
        %636 = vmatprep.subr.mxu0 0.0
        %637 = vmatpush1.msra.mxu0 0.0
        %638 = vmatprep.subr.mxu0 0.0
        %639 = vmatpush1.msra.mxu0 0.0
        %640 = vmatprep.subr.mxu0 0.0
        %641 = vmatpush1.msra.mxu0 0.0
        %642 = vmatprep.subr.mxu0 0.0
        %643 = vmatpush1.msra.mxu0 0.0
        %644 = vmatprep.subr.mxu0 0.0
        %645 = vmatpush1.msra.mxu0 0.0
        %646 = vmatprep.subr.mxu0 0.0
        %647 = vmatpush1.msra.mxu0 0.0
        %648 = vmatprep.subr.mxu0 0.0
        %649 = vmatpush1.msra.mxu0 0.0
        %650 = vmatprep.subr.mxu0 0.0
        %651 = vmatpush1.msra.mxu0 0.0
        %652 = vmatprep.subr.mxu0 0.0
        %653 = vmatpush1.msra.mxu0 0.0
        %654 = vmatprep.subr.mxu0 0.0
        %655 = vmatpush1.msra.mxu0 0.0
        %656 = vmatprep.subr.mxu0 0.0
        %657 = vmatpush1.msra.mxu0 0.0
        %658 = vmatprep.subr.mxu0 0.0
        %659 = vmatpush1.msra.mxu0 0.0
        %660 = vmatprep.subr.mxu0 0.0
        %661 = vmatpush1.msra.mxu0 0.0
        %662 = vmatprep.subr.mxu0 0.0
        %663 = vmatpush1.msra.mxu0 0.0
        %664 = vmatprep.subr.mxu0 0.0
        %665 = vmatpush1.msra.mxu0 0.0
        %666 = vmatprep.subr.mxu0 0.0
        %667 = vmatpush1.msra.mxu0 0.0
        %668 = vmatprep.subr.mxu0 0.0
        %669 = vmatpush1.msra.mxu0 0.0
        %670 = vmatprep.subr.mxu0 0.0
        %671 = vmatpush1.msra.mxu0 0.0
        %672 = vmatprep.subr.mxu0 0.0
        %673 = vmatpush1.msra.mxu0 0.0
        %674 = vmatprep.mubr.f32.mxu0 0.0
        %675 = vmatmul.mubr.f32.gmra.mrb[0].mxu0 %v601
        %v676 = vpop.f32.mrb[0].mxu0
        %v677 = vadd.f32 0.0, %v676
        %v678 = vpop.f32.mrb[0].mxu0
        %v679 = vadd.f32 0.0, %v678
        %680 = vdwg.mxu0
        %v682 = vsel %vm599, %v460, 0
        %v685 = vsel %vm603, %v456, 0
        %v688 = vsel %vm603, %v458, 0
        %690 = vmatprep.subr.mxu0 %v688
        %691 = vmatpush1.msra.mxu0 %v685
        %692 = vmatprep.subr.mxu0 0.0
        %693 = vmatpush1.msra.mxu0 0.0
        %694 = vmatprep.subr.mxu0 0.0
        %695 = vmatpush1.msra.mxu0 0.0
        %696 = vmatprep.subr.mxu0 0.0
        %697 = vmatpush1.msra.mxu0 0.0
        %698 = vmatprep.subr.mxu0 0.0
        %699 = vmatpush1.msra.mxu0 0.0
        %700 = vmatprep.subr.mxu0 0.0
        %701 = vmatpush1.msra.mxu0 0.0
        %702 = vmatprep.subr.mxu0 0.0
        %703 = vmatpush1.msra.mxu0 0.0
        %704 = vmatprep.subr.mxu0 0.0
        %705 = vmatpush1.msra.mxu0 0.0
        %706 = vmatprep.subr.mxu0 0.0
        %707 = vmatpush1.msra.mxu0 0.0
        %708 = vmatprep.subr.mxu0 0.0
        %709 = vmatpush1.msra.mxu0 0.0
        %710 = vmatprep.subr.mxu0 0.0
        %711 = vmatpush1.msra.mxu0 0.0
        %712 = vmatprep.subr.mxu0 0.0
        %713 = vmatpush1.msra.mxu0 0.0
        %714 = vmatprep.subr.mxu0 0.0
        %715 = vmatpush1.msra.mxu0 0.0
        %716 = vmatprep.subr.mxu0 0.0
        %717 = vmatpush1.msra.mxu0 0.0
        %718 = vmatprep.subr.mxu0 0.0
        %719 = vmatpush1.msra.mxu0 0.0
        %720 = vmatprep.subr.mxu0 0.0
        %721 = vmatpush1.msra.mxu0 0.0
        %722 = vmatprep.subr.mxu0 0.0
        %723 = vmatpush1.msra.mxu0 0.0
        %724 = vmatprep.subr.mxu0 0.0
        %725 = vmatpush1.msra.mxu0 0.0
        %726 = vmatprep.subr.mxu0 0.0
        %727 = vmatpush1.msra.mxu0 0.0
        %728 = vmatprep.subr.mxu0 0.0
        %729 = vmatpush1.msra.mxu0 0.0
        %730 = vmatprep.subr.mxu0 0.0
        %731 = vmatpush1.msra.mxu0 0.0
        %732 = vmatprep.subr.mxu0 0.0
        %733 = vmatpush1.msra.mxu0 0.0
        %734 = vmatprep.subr.mxu0 0.0
        %735 = vmatpush1.msra.mxu0 0.0
        %736 = vmatprep.subr.mxu0 0.0
        %737 = vmatpush1.msra.mxu0 0.0
        %738 = vmatprep.subr.mxu0 0.0
        %739 = vmatpush1.msra.mxu0 0.0
        %740 = vmatprep.subr.mxu0 0.0
        %741 = vmatpush1.msra.mxu0 0.0
        %742 = vmatprep.subr.mxu0 0.0
        %743 = vmatpush1.msra.mxu0 0.0
        %744 = vmatprep.subr.mxu0 0.0
        %745 = vmatpush1.msra.mxu0 0.0
        %746 = vmatprep.subr.mxu0 0.0
        %747 = vmatpush1.msra.mxu0 0.0
        %748 = vmatprep.subr.mxu0 0.0
        %749 = vmatpush1.msra.mxu0 0.0
        %750 = vmatprep.subr.mxu0 0.0
        %751 = vmatpush1.msra.mxu0 0.0
        %752 = vmatprep.subr.mxu0 0.0
        %753 = vmatpush1.msra.mxu0 0.0
        %754 = vmatprep.mubr.f32.mxu0 0.0
        %755 = vmatmul.mubr.f32.gmra.mrb[0].mxu0 %v682
        %v756 = vpop.f32.mrb[0].mxu0
        %v757 = vadd.f32 %v677, %v756
        %v758 = vpop.f32.mrb[0].mxu0
        %v759 = vadd.f32 %v679, %v758
        %760 = vdwg.mxu0
        %s761 = scalar_lea.vmem [#allocation5], 1024
        %v762 = vld [vmem:[%s761] sm:$0xff]
        %v763 = vld [vmem:[%s761 + $0x8] sm:$0xff]
        %v764 = vld [vmem:[%s761 + $0x10] sm:$0xff]
        %v765 = vld [vmem:[%s761 + $0x18] sm:$0xff]
        %v766 = vld [vmem:[%s761 + $0x20] sm:$0xff]
        %v767 = vld [vmem:[%s761 + $0x28] sm:$0xff]
        %v768 = vld [vmem:[%s761 + $0x30] sm:$0xff]
        %v769 = vld [vmem:[%s761 + $0x38] sm:$0xff]
        %v770 = vld [vmem:[%s761 + $0x40] sm:$0xff]
        %v771 = vld [vmem:[%s761 + $0x48] sm:$0xff]
        %v772 = vld [vmem:[%s761 + $0x50] sm:$0xff]
        %v773 = vld [vmem:[%s761 + $0x58] sm:$0xff]
        %v774 = vld [vmem:[%s761 + $0x60] sm:$0xff]
        %v775 = vld [vmem:[%s761 + $0x68] sm:$0xff]
        %v776 = vld [vmem:[%s761 + $0x70] sm:$0xff]
        %v777 = vld [vmem:[%s761 + $0x78] sm:$0xff]
        %v778 = vld [vmem:[%s761 + $0x80] sm:$0xff]
        %v779 = vld [vmem:[%s761 + $0x88] sm:$0xff]
        %v780 = vld [vmem:[%s761 + $0x90] sm:$0xff]
        %v781 = vld [vmem:[%s761 + $0x98] sm:$0xff]
        %v782 = vld [vmem:[%s761 + $0xa0] sm:$0xff]
        %v783 = vld [vmem:[%s761 + $0xa8] sm:$0xff]
        %v784 = vld [vmem:[%s761 + $0xb0] sm:$0xff]
        %v785 = vld [vmem:[%s761 + $0xb8] sm:$0xff]
        %v786 = vld [vmem:[%s761 + $0xc0] sm:$0xff]
        %v787 = vld [vmem:[%s761 + $0xc8] sm:$0xff]
        %v788 = vld [vmem:[%s761 + $0xd0] sm:$0xff]
        %v789 = vld [vmem:[%s761 + $0xd8] sm:$0xff]
        %v790 = vld [vmem:[%s761 + $0xe0] sm:$0xff]
        %v791 = vld [vmem:[%s761 + $0xe8] sm:$0xff]
        %v792 = vld [vmem:[%s761 + $0xf0] sm:$0xff]
        %v793 = vld [vmem:[%s761 + $0xf8] sm:$0xff]
        %v794 = vld [vmem:[%s761 + $0x100] sm:$0xff]
        %v795 = vld [vmem:[%s761 + $0x108] sm:$0xff]
        %v796 = vld [vmem:[%s761 + $0x110] sm:$0xff]
        %v797 = vld [vmem:[%s761 + $0x118] sm:$0xff]
        %v798 = vld [vmem:[%s761 + $0x120] sm:$0xff]
        %v799 = vld [vmem:[%s761 + $0x128] sm:$0xff]
        %v800 = vld [vmem:[%s761 + $0x130] sm:$0xff]
        %v801 = vld [vmem:[%s761 + $0x138] sm:$0xff]
        %v802 = vld [vmem:[%s761 + $0x140] sm:$0xff]
        %v803 = vld [vmem:[%s761 + $0x148] sm:$0xff]
        %v804 = vld [vmem:[%s761 + $0x150] sm:$0xff]
        %v805 = vld [vmem:[%s761 + $0x158] sm:$0xff]
        %v806 = vld [vmem:[%s761 + $0x160] sm:$0xff]
        %v807 = vld [vmem:[%s761 + $0x168] sm:$0xff]
        %v808 = vld [vmem:[%s761 + $0x170] sm:$0xff]
        %v809 = vld [vmem:[%s761 + $0x178] sm:$0xff]
        %v810 = vld [vmem:[%s761 + $0x180] sm:$0xff]
        %v811 = vld [vmem:[%s761 + $0x188] sm:$0xff]
        %v812 = vld [vmem:[%s761 + $0x190] sm:$0xff]
        %v813 = vld [vmem:[%s761 + $0x198] sm:$0xff]
        %v814 = vld [vmem:[%s761 + $0x1a0] sm:$0xff]
        %v815 = vld [vmem:[%s761 + $0x1a8] sm:$0xff]
        %v816 = vld [vmem:[%s761 + $0x1b0] sm:$0xff]
        %v817 = vld [vmem:[%s761 + $0x1b8] sm:$0xff]
        %v818 = vld [vmem:[%s761 + $0x1c0] sm:$0xff]
        %v819 = vld [vmem:[%s761 + $0x1c8] sm:$0xff]
        %v820 = vld [vmem:[%s761 + $0x1d0] sm:$0xff]
        %v821 = vld [vmem:[%s761 + $0x1d8] sm:$0xff]
        %v822 = vld [vmem:[%s761 + $0x1e0] sm:$0xff]
        %v823 = vld [vmem:[%s761 + $0x1e8] sm:$0xff]
        %v824 = vld [vmem:[%s761 + $0x1f0] sm:$0xff]
        %v825 = vld [vmem:[%s761 + $0x1f8] sm:$0xff]
        %826 = vmatprep.subr.mxu0 %v763
        %827 = vmatpush1.msra.mxu0 %v762
        %828 = vmatprep.subr.mxu0 %v765
        %829 = vmatpush1.msra.mxu0 %v764
        %830 = vmatprep.subr.mxu0 %v767
        %831 = vmatpush1.msra.mxu0 %v766
        %832 = vmatprep.subr.mxu0 %v769
        %833 = vmatpush1.msra.mxu0 %v768
        %834 = vmatprep.subr.mxu0 %v771
        %835 = vmatpush1.msra.mxu0 %v770
        %836 = vmatprep.subr.mxu0 %v773
        %837 = vmatpush1.msra.mxu0 %v772
        %838 = vmatprep.subr.mxu0 %v775
        %839 = vmatpush1.msra.mxu0 %v774
        %840 = vmatprep.subr.mxu0 %v777
        %841 = vmatpush1.msra.mxu0 %v776
        %842 = vmatprep.subr.mxu0 %v779
        %843 = vmatpush1.msra.mxu0 %v778
        %844 = vmatprep.subr.mxu0 %v781
        %845 = vmatpush1.msra.mxu0 %v780
        %846 = vmatprep.subr.mxu0 %v783
        %847 = vmatpush1.msra.mxu0 %v782
        %848 = vmatprep.subr.mxu0 %v785
        %849 = vmatpush1.msra.mxu0 %v784
        %850 = vmatprep.subr.mxu0 %v787
        %851 = vmatpush1.msra.mxu0 %v786
        %852 = vmatprep.subr.mxu0 %v789
        %853 = vmatpush1.msra.mxu0 %v788
        %854 = vmatprep.subr.mxu0 %v791
        %855 = vmatpush1.msra.mxu0 %v790
        %856 = vmatprep.subr.mxu0 %v793
        %857 = vmatpush1.msra.mxu0 %v792
        %858 = vmatprep.subr.mxu0 %v795
        %859 = vmatpush1.msra.mxu0 %v794
        %860 = vmatprep.subr.mxu0 %v797
        %861 = vmatpush1.msra.mxu0 %v796
        %862 = vmatprep.subr.mxu0 %v799
        %863 = vmatpush1.msra.mxu0 %v798
        %864 = vmatprep.subr.mxu0 %v801
        %865 = vmatpush1.msra.mxu0 %v800
        %866 = vmatprep.subr.mxu0 %v803
        %867 = vmatpush1.msra.mxu0 %v802
        %868 = vmatprep.subr.mxu0 %v805
        %869 = vmatpush1.msra.mxu0 %v804
        %870 = vmatprep.subr.mxu0 %v807
        %871 = vmatpush1.msra.mxu0 %v806
        %872 = vmatprep.subr.mxu0 %v809
        %873 = vmatpush1.msra.mxu0 %v808
        %874 = vmatprep.subr.mxu0 %v811
        %875 = vmatpush1.msra.mxu0 %v810
        %876 = vmatprep.subr.mxu0 %v813
        %877 = vmatpush1.msra.mxu0 %v812
        %878 = vmatprep.subr.mxu0 %v815
        %879 = vmatpush1.msra.mxu0 %v814
        %880 = vmatprep.subr.mxu0 %v817
        %881 = vmatpush1.msra.mxu0 %v816
        %882 = vmatprep.subr.mxu0 %v819
        %883 = vmatpush1.msra.mxu0 %v818
        %884 = vmatprep.subr.mxu0 %v821
        %885 = vmatpush1.msra.mxu0 %v820
        %886 = vmatprep.subr.mxu0 %v823
        %887 = vmatpush1.msra.mxu0 %v822
        %888 = vmatprep.subr.mxu0 %v825
        %889 = vmatpush1.msra.mxu0 %v824
        %890 = vmatprep.mubr.f32.mxu0 %v387
        %891 = vmatmul.mubr.f32.gmra.mrb[0].mxu0 %v321
        %v892 = vpop.f32.mrb[0].mxu0
        %v893 = vadd.f32 0.0, %v892
        %v894 = vpop.f32.mrb[0].mxu0
        %v895 = vadd.f32 0.0, %v894
        %896 = vdwg.mxu0
        %s897 = scalar_lea.vmem %s2, 16
        %v898 = vld [vmem:[%s897] sm:$0xff]
        %v900 = vsel %vm599, %v898, 0
        %v903 = vsel %vm603, %v893, 0
        %v906 = vsel %vm603, %v895, 0
        %908 = vmatprep.subr.mxu0 %v906
        %909 = vmatpush1.msra.mxu0 %v903
        %910 = vmatprep.subr.mxu0 0.0
        %911 = vmatpush1.msra.mxu0 0.0
        %912 = vmatprep.subr.mxu0 0.0
        %913 = vmatpush1.msra.mxu0 0.0
        %914 = vmatprep.subr.mxu0 0.0
        %915 = vmatpush1.msra.mxu0 0.0
        %916 = vmatprep.subr.mxu0 0.0
        %917 = vmatpush1.msra.mxu0 0.0
        %918 = vmatprep.subr.mxu0 0.0
        %919 = vmatpush1.msra.mxu0 0.0
        %920 = vmatprep.subr.mxu0 0.0
        %921 = vmatpush1.msra.mxu0 0.0
        %922 = vmatprep.subr.mxu0 0.0
        %923 = vmatpush1.msra.mxu0 0.0
        %924 = vmatprep.subr.mxu0 0.0
        %925 = vmatpush1.msra.mxu0 0.0
        %926 = vmatprep.subr.mxu0 0.0
        %927 = vmatpush1.msra.mxu0 0.0
        %928 = vmatprep.subr.mxu0 0.0
        %929 = vmatpush1.msra.mxu0 0.0
        %930 = vmatprep.subr.mxu0 0.0
        %931 = vmatpush1.msra.mxu0 0.0
        %932 = vmatprep.subr.mxu0 0.0
        %933 = vmatpush1.msra.mxu0 0.0
        %934 = vmatprep.subr.mxu0 0.0
        %935 = vmatpush1.msra.mxu0 0.0
        %936 = vmatprep.subr.mxu0 0.0
        %937 = vmatpush1.msra.mxu0 0.0
        %938 = vmatprep.subr.mxu0 0.0
        %939 = vmatpush1.msra.mxu0 0.0
        %940 = vmatprep.subr.mxu0 0.0
        %941 = vmatpush1.msra.mxu0 0.0
        %942 = vmatprep.subr.mxu0 0.0
        %943 = vmatpush1.msra.mxu0 0.0
        %944 = vmatprep.subr.mxu0 0.0
        %945 = vmatpush1.msra.mxu0 0.0
        %946 = vmatprep.subr.mxu0 0.0
        %947 = vmatpush1.msra.mxu0 0.0
        %948 = vmatprep.subr.mxu0 0.0
        %949 = vmatpush1.msra.mxu0 0.0
        %950 = vmatprep.subr.mxu0 0.0
        %951 = vmatpush1.msra.mxu0 0.0
        %952 = vmatprep.subr.mxu0 0.0
        %953 = vmatpush1.msra.mxu0 0.0
        %954 = vmatprep.subr.mxu0 0.0
        %955 = vmatpush1.msra.mxu0 0.0
        %956 = vmatprep.subr.mxu0 0.0
        %957 = vmatpush1.msra.mxu0 0.0
        %958 = vmatprep.subr.mxu0 0.0
        %959 = vmatpush1.msra.mxu0 0.0
        %960 = vmatprep.subr.mxu0 0.0
        %961 = vmatpush1.msra.mxu0 0.0
        %962 = vmatprep.subr.mxu0 0.0
        %963 = vmatpush1.msra.mxu0 0.0
        %964 = vmatprep.subr.mxu0 0.0
        %965 = vmatpush1.msra.mxu0 0.0
        %966 = vmatprep.subr.mxu0 0.0
        %967 = vmatpush1.msra.mxu0 0.0
        %968 = vmatprep.subr.mxu0 0.0
        %969 = vmatpush1.msra.mxu0 0.0
        %970 = vmatprep.subr.mxu0 0.0
        %971 = vmatpush1.msra.mxu0 0.0
        %972 = vmatprep.mubr.f32.mxu0 0.0
        %973 = vmatmul.mubr.f32.gmra.mrb[0].mxu0 %v900
        %v974 = vpop.f32.mrb[0].mxu0
        %v975 = vadd.f32 0.0, %v974
        %v976 = vpop.f32.mrb[0].mxu0
        %v977 = vadd.f32 0.0, %v976
        %978 = vdwg.mxu0
        %v979 = vadd.f32 %v757, %v975
        %v980 = vadd.f32 %v759, %v977
        %s981 = scalar_lea.vmem [#allocation5], 1536
        %v982 = vld [vmem:[%s981] sm:$0xff]
        %v983 = vld [vmem:[%s981 + $0x8] sm:$0xff]
        %v984 = vld [vmem:[%s981 + $0x10] sm:$0xff]
        %v985 = vld [vmem:[%s981 + $0x18] sm:$0xff]
        %v986 = vld [vmem:[%s981 + $0x20] sm:$0xff]
        %v987 = vld [vmem:[%s981 + $0x28] sm:$0xff]
        %v988 = vld [vmem:[%s981 + $0x30] sm:$0xff]
        %v989 = vld [vmem:[%s981 + $0x38] sm:$0xff]
        %v990 = vld [vmem:[%s981 + $0x40] sm:$0xff]
        %v991 = vld [vmem:[%s981 + $0x48] sm:$0xff]
        %v992 = vld [vmem:[%s981 + $0x50] sm:$0xff]
        %v993 = vld [vmem:[%s981 + $0x58] sm:$0xff]
        %v994 = vld [vmem:[%s981 + $0x60] sm:$0xff]
        %v995 = vld [vmem:[%s981 + $0x68] sm:$0xff]
        %v996 = vld [vmem:[%s981 + $0x70] sm:$0xff]
        %v997 = vld [vmem:[%s981 + $0x78] sm:$0xff]
        %v998 = vld [vmem:[%s981 + $0x80] sm:$0xff]
        %v999 = vld [vmem:[%s981 + $0x88] sm:$0xff]
        %v1000 = vld [vmem:[%s981 + $0x90] sm:$0xff]
        %v1001 = vld [vmem:[%s981 + $0x98] sm:$0xff]
        %v1002 = vld [vmem:[%s981 + $0xa0] sm:$0xff]
        %v1003 = vld [vmem:[%s981 + $0xa8] sm:$0xff]
        %v1004 = vld [vmem:[%s981 + $0xb0] sm:$0xff]
        %v1005 = vld [vmem:[%s981 + $0xb8] sm:$0xff]
        %v1006 = vld [vmem:[%s981 + $0xc0] sm:$0xff]
        %v1007 = vld [vmem:[%s981 + $0xc8] sm:$0xff]
        %v1008 = vld [vmem:[%s981 + $0xd0] sm:$0xff]
        %v1009 = vld [vmem:[%s981 + $0xd8] sm:$0xff]
        %v1010 = vld [vmem:[%s981 + $0xe0] sm:$0xff]
        %v1011 = vld [vmem:[%s981 + $0xe8] sm:$0xff]
        %v1012 = vld [vmem:[%s981 + $0xf0] sm:$0xff]
        %v1013 = vld [vmem:[%s981 + $0xf8] sm:$0xff]
        %v1014 = vld [vmem:[%s981 + $0x100] sm:$0xff]
        %v1015 = vld [vmem:[%s981 + $0x108] sm:$0xff]
        %v1016 = vld [vmem:[%s981 + $0x110] sm:$0xff]
        %v1017 = vld [vmem:[%s981 + $0x118] sm:$0xff]
        %v1018 = vld [vmem:[%s981 + $0x120] sm:$0xff]
        %v1019 = vld [vmem:[%s981 + $0x128] sm:$0xff]
        %v1020 = vld [vmem:[%s981 + $0x130] sm:$0xff]
        %v1021 = vld [vmem:[%s981 + $0x138] sm:$0xff]
        %v1022 = vld [vmem:[%s981 + $0x140] sm:$0xff]
        %v1023 = vld [vmem:[%s981 + $0x148] sm:$0xff]
        %v1024 = vld [vmem:[%s981 + $0x150] sm:$0xff]
        %v1025 = vld [vmem:[%s981 + $0x158] sm:$0xff]
        %v1026 = vld [vmem:[%s981 + $0x160] sm:$0xff]
        %v1027 = vld [vmem:[%s981 + $0x168] sm:$0xff]
        %v1028 = vld [vmem:[%s981 + $0x170] sm:$0xff]
        %v1029 = vld [vmem:[%s981 + $0x178] sm:$0xff]
        %v1030 = vld [vmem:[%s981 + $0x180] sm:$0xff]
        %v1031 = vld [vmem:[%s981 + $0x188] sm:$0xff]
        %v1032 = vld [vmem:[%s981 + $0x190] sm:$0xff]
        %v1033 = vld [vmem:[%s981 + $0x198] sm:$0xff]
        %v1034 = vld [vmem:[%s981 + $0x1a0] sm:$0xff]
        %v1035 = vld [vmem:[%s981 + $0x1a8] sm:$0xff]
        %v1036 = vld [vmem:[%s981 + $0x1b0] sm:$0xff]
        %v1037 = vld [vmem:[%s981 + $0x1b8] sm:$0xff]
        %v1038 = vld [vmem:[%s981 + $0x1c0] sm:$0xff]
        %v1039 = vld [vmem:[%s981 + $0x1c8] sm:$0xff]
        %v1040 = vld [vmem:[%s981 + $0x1d0] sm:$0xff]
        %v1041 = vld [vmem:[%s981 + $0x1d8] sm:$0xff]
        %v1042 = vld [vmem:[%s981 + $0x1e0] sm:$0xff]
        %v1043 = vld [vmem:[%s981 + $0x1e8] sm:$0xff]
        %v1044 = vld [vmem:[%s981 + $0x1f0] sm:$0xff]
        %v1045 = vld [vmem:[%s981 + $0x1f8] sm:$0xff]
        %1046 = vmatprep.subr.mxu0 %v983
        %1047 = vmatpush1.msra.mxu0 %v982
        %1048 = vmatprep.subr.mxu0 %v985
        %1049 = vmatpush1.msra.mxu0 %v984
        %1050 = vmatprep.subr.mxu0 %v987
        %1051 = vmatpush1.msra.mxu0 %v986
        %1052 = vmatprep.subr.mxu0 %v989
        %1053 = vmatpush1.msra.mxu0 %v988
        %1054 = vmatprep.subr.mxu0 %v991
        %1055 = vmatpush1.msra.mxu0 %v990
        %1056 = vmatprep.subr.mxu0 %v993
        %1057 = vmatpush1.msra.mxu0 %v992
        %1058 = vmatprep.subr.mxu0 %v995
        %1059 = vmatpush1.msra.mxu0 %v994
        %1060 = vmatprep.subr.mxu0 %v997
        %1061 = vmatpush1.msra.mxu0 %v996
        %1062 = vmatprep.subr.mxu0 %v999
        %1063 = vmatpush1.msra.mxu0 %v998
        %1064 = vmatprep.subr.mxu0 %v1001
        %1065 = vmatpush1.msra.mxu0 %v1000
        %1066 = vmatprep.subr.mxu0 %v1003
        %1067 = vmatpush1.msra.mxu0 %v1002
        %1068 = vmatprep.subr.mxu0 %v1005
        %1069 = vmatpush1.msra.mxu0 %v1004
        %1070 = vmatprep.subr.mxu0 %v1007
        %1071 = vmatpush1.msra.mxu0 %v1006
        %1072 = vmatprep.subr.mxu0 %v1009
        %1073 = vmatpush1.msra.mxu0 %v1008
        %1074 = vmatprep.subr.mxu0 %v1011
        %1075 = vmatpush1.msra.mxu0 %v1010
        %1076 = vmatprep.subr.mxu0 %v1013
        %1077 = vmatpush1.msra.mxu0 %v1012
        %1078 = vmatprep.subr.mxu0 %v1015
        %1079 = vmatpush1.msra.mxu0 %v1014
        %1080 = vmatprep.subr.mxu0 %v1017
        %1081 = vmatpush1.msra.mxu0 %v1016
        %1082 = vmatprep.subr.mxu0 %v1019
        %1083 = vmatpush1.msra.mxu0 %v1018
        %1084 = vmatprep.subr.mxu0 %v1021
        %1085 = vmatpush1.msra.mxu0 %v1020
        %1086 = vmatprep.subr.mxu0 %v1023
        %1087 = vmatpush1.msra.mxu0 %v1022
        %1088 = vmatprep.subr.mxu0 %v1025
        %1089 = vmatpush1.msra.mxu0 %v1024
        %1090 = vmatprep.subr.mxu0 %v1027
        %1091 = vmatpush1.msra.mxu0 %v1026
        %1092 = vmatprep.subr.mxu0 %v1029
        %1093 = vmatpush1.msra.mxu0 %v1028
        %1094 = vmatprep.subr.mxu0 %v1031
        %1095 = vmatpush1.msra.mxu0 %v1030
        %1096 = vmatprep.subr.mxu0 %v1033
        %1097 = vmatpush1.msra.mxu0 %v1032
        %1098 = vmatprep.subr.mxu0 %v1035
        %1099 = vmatpush1.msra.mxu0 %v1034
        %1100 = vmatprep.subr.mxu0 %v1037
        %1101 = vmatpush1.msra.mxu0 %v1036
        %1102 = vmatprep.subr.mxu0 %v1039
        %1103 = vmatpush1.msra.mxu0 %v1038
        %1104 = vmatprep.subr.mxu0 %v1041
        %1105 = vmatpush1.msra.mxu0 %v1040
        %1106 = vmatprep.subr.mxu0 %v1043
        %1107 = vmatpush1.msra.mxu0 %v1042
        %1108 = vmatprep.subr.mxu0 %v1045
        %1109 = vmatpush1.msra.mxu0 %v1044
        %1110 = vmatprep.mubr.f32.mxu0 %v387
        %1111 = vmatmul.mubr.f32.gmra.mrb[0].mxu0 %v321
        %v1112 = vpop.f32.mrb[0].mxu0
        %v1113 = vadd.f32 0.0, %v1112
        %v1114 = vpop.f32.mrb[0].mxu0
        %v1115 = vadd.f32 0.0, %v1114
        %1116 = vdwg.mxu0
        %s1117 = scalar_lea.vmem %s2, 24
        %v1118 = vld [vmem:[%s1117] sm:$0xff]
        %v1120 = vsel %vm599, %v1118, 0
        %v1123 = vsel %vm603, %v1113, 0
        %v1126 = vsel %vm603, %v1115, 0
        %1128 = vmatprep.subr.mxu0 %v1126
        %1129 = vmatpush1.msra.mxu0 %v1123
        %1130 = vmatprep.subr.mxu0 0.0
        %1131 = vmatpush1.msra.mxu0 0.0
        %1132 = vmatprep.subr.mxu0 0.0
        %1133 = vmatpush1.msra.mxu0 0.0
        %1134 = vmatprep.subr.mxu0 0.0
        %1135 = vmatpush1.msra.mxu0 0.0
        %1136 = vmatprep.subr.mxu0 0.0
        %1137 = vmatpush1.msra.mxu0 0.0
        %1138 = vmatprep.subr.mxu0 0.0
        %1139 = vmatpush1.msra.mxu0 0.0
        %1140 = vmatprep.subr.mxu0 0.0
        %1141 = vmatpush1.msra.mxu0 0.0
        %1142 = vmatprep.subr.mxu0 0.0
        %1143 = vmatpush1.msra.mxu0 0.0
        %1144 = vmatprep.subr.mxu0 0.0
        %1145 = vmatpush1.msra.mxu0 0.0
        %1146 = vmatprep.subr.mxu0 0.0
        %1147 = vmatpush1.msra.mxu0 0.0
        %1148 = vmatprep.subr.mxu0 0.0
        %1149 = vmatpush1.msra.mxu0 0.0
        %1150 = vmatprep.subr.mxu0 0.0
        %1151 = vmatpush1.msra.mxu0 0.0
        %1152 = vmatprep.subr.mxu0 0.0
        %1153 = vmatpush1.msra.mxu0 0.0
        %1154 = vmatprep.subr.mxu0 0.0
        %1155 = vmatpush1.msra.mxu0 0.0
        %1156 = vmatprep.subr.mxu0 0.0
        %1157 = vmatpush1.msra.mxu0 0.0
        %1158 = vmatprep.subr.mxu0 0.0
        %1159 = vmatpush1.msra.mxu0 0.0
        %1160 = vmatprep.subr.mxu0 0.0
        %1161 = vmatpush1.msra.mxu0 0.0
        %1162 = vmatprep.subr.mxu0 0.0
        %1163 = vmatpush1.msra.mxu0 0.0
        %1164 = vmatprep.subr.mxu0 0.0
        %1165 = vmatpush1.msra.mxu0 0.0
        %1166 = vmatprep.subr.mxu0 0.0
        %1167 = vmatpush1.msra.mxu0 0.0
        %1168 = vmatprep.subr.mxu0 0.0
        %1169 = vmatpush1.msra.mxu0 0.0
        %1170 = vmatprep.subr.mxu0 0.0
        %1171 = vmatpush1.msra.mxu0 0.0
        %1172 = vmatprep.subr.mxu0 0.0
        %1173 = vmatpush1.msra.mxu0 0.0
        %1174 = vmatprep.subr.mxu0 0.0
        %1175 = vmatpush1.msra.mxu0 0.0
        %1176 = vmatprep.subr.mxu0 0.0
        %1177 = vmatpush1.msra.mxu0 0.0
        %1178 = vmatprep.subr.mxu0 0.0
        %1179 = vmatpush1.msra.mxu0 0.0
        %1180 = vmatprep.subr.mxu0 0.0
        %1181 = vmatpush1.msra.mxu0 0.0
        %1182 = vmatprep.subr.mxu0 0.0
        %1183 = vmatpush1.msra.mxu0 0.0
        %1184 = vmatprep.subr.mxu0 0.0
        %1185 = vmatpush1.msra.mxu0 0.0
        %1186 = vmatprep.subr.mxu0 0.0
        %1187 = vmatpush1.msra.mxu0 0.0
        %1188 = vmatprep.subr.mxu0 0.0
        %1189 = vmatpush1.msra.mxu0 0.0
        %1190 = vmatprep.subr.mxu0 0.0
        %1191 = vmatpush1.msra.mxu0 0.0
        %1192 = vmatprep.mubr.f32.mxu0 0.0
        %1193 = vmatmul.mubr.f32.gmra.mrb[0].mxu0 %v1120
        %v1194 = vpop.f32.mrb[0].mxu0
        %v1195 = vadd.f32 0.0, %v1194
        %v1196 = vpop.f32.mrb[0].mxu0
        %v1197 = vadd.f32 0.0, %v1196
        %1198 = vdwg.mxu0
        %v1199 = vadd.f32 %v979, %v1195
        %v1200 = vadd.f32 %v980, %v1197
        %s1201 = scalar_lea.vmem [#allocation5], 2048
        %v1202 = vld [vmem:[%s1201] sm:$0xff]
        %v1203 = vld [vmem:[%s1201 + $0x8] sm:$0xff]
        %v1204 = vld [vmem:[%s1201 + $0x10] sm:$0xff]
        %v1205 = vld [vmem:[%s1201 + $0x18] sm:$0xff]
        %v1206 = vld [vmem:[%s1201 + $0x20] sm:$0xff]
        %v1207 = vld [vmem:[%s1201 + $0x28] sm:$0xff]
        %v1208 = vld [vmem:[%s1201 + $0x30] sm:$0xff]
        %v1209 = vld [vmem:[%s1201 + $0x38] sm:$0xff]
        %v1210 = vld [vmem:[%s1201 + $0x40] sm:$0xff]
        %v1211 = vld [vmem:[%s1201 + $0x48] sm:$0xff]
        %v1212 = vld [vmem:[%s1201 + $0x50] sm:$0xff]
        %v1213 = vld [vmem:[%s1201 + $0x58] sm:$0xff]
        %v1214 = vld [vmem:[%s1201 + $0x60] sm:$0xff]
        %v1215 = vld [vmem:[%s1201 + $0x68] sm:$0xff]
        %v1216 = vld [vmem:[%s1201 + $0x70] sm:$0xff]
        %v1217 = vld [vmem:[%s1201 + $0x78] sm:$0xff]
        %v1218 = vld [vmem:[%s1201 + $0x80] sm:$0xff]
        %v1219 = vld [vmem:[%s1201 + $0x88] sm:$0xff]
        %v1220 = vld [vmem:[%s1201 + $0x90] sm:$0xff]
        %v1221 = vld [vmem:[%s1201 + $0x98] sm:$0xff]
        %v1222 = vld [vmem:[%s1201 + $0xa0] sm:$0xff]
        %v1223 = vld [vmem:[%s1201 + $0xa8] sm:$0xff]
        %v1224 = vld [vmem:[%s1201 + $0xb0] sm:$0xff]
        %v1225 = vld [vmem:[%s1201 + $0xb8] sm:$0xff]
        %v1226 = vld [vmem:[%s1201 + $0xc0] sm:$0xff]
        %v1227 = vld [vmem:[%s1201 + $0xc8] sm:$0xff]
        %v1228 = vld [vmem:[%s1201 + $0xd0] sm:$0xff]
        %v1229 = vld [vmem:[%s1201 + $0xd8] sm:$0xff]
        %v1230 = vld [vmem:[%s1201 + $0xe0] sm:$0xff]
        %v1231 = vld [vmem:[%s1201 + $0xe8] sm:$0xff]
        %v1232 = vld [vmem:[%s1201 + $0xf0] sm:$0xff]
        %v1233 = vld [vmem:[%s1201 + $0xf8] sm:$0xff]
        %v1234 = vld [vmem:[%s1201 + $0x100] sm:$0xff]
        %v1235 = vld [vmem:[%s1201 + $0x108] sm:$0xff]
        %v1236 = vld [vmem:[%s1201 + $0x110] sm:$0xff]
        %v1237 = vld [vmem:[%s1201 + $0x118] sm:$0xff]
        %v1238 = vld [vmem:[%s1201 + $0x120] sm:$0xff]
        %v1239 = vld [vmem:[%s1201 + $0x128] sm:$0xff]
        %v1240 = vld [vmem:[%s1201 + $0x130] sm:$0xff]
        %v1241 = vld [vmem:[%s1201 + $0x138] sm:$0xff]
        %v1242 = vld [vmem:[%s1201 + $0x140] sm:$0xff]
        %v1243 = vld [vmem:[%s1201 + $0x148] sm:$0xff]
        %v1244 = vld [vmem:[%s1201 + $0x150] sm:$0xff]
        %v1245 = vld [vmem:[%s1201 + $0x158] sm:$0xff]
        %v1246 = vld [vmem:[%s1201 + $0x160] sm:$0xff]
        %v1247 = vld [vmem:[%s1201 + $0x168] sm:$0xff]
        %v1248 = vld [vmem:[%s1201 + $0x170] sm:$0xff]
        %v1249 = vld [vmem:[%s1201 + $0x178] sm:$0xff]
        %v1250 = vld [vmem:[%s1201 + $0x180] sm:$0xff]
        %v1251 = vld [vmem:[%s1201 + $0x188] sm:$0xff]
        %v1252 = vld [vmem:[%s1201 + $0x190] sm:$0xff]
        %v1253 = vld [vmem:[%s1201 + $0x198] sm:$0xff]
        %v1254 = vld [vmem:[%s1201 + $0x1a0] sm:$0xff]
        %v1255 = vld [vmem:[%s1201 + $0x1a8] sm:$0xff]
        %v1256 = vld [vmem:[%s1201 + $0x1b0] sm:$0xff]
        %v1257 = vld [vmem:[%s1201 + $0x1b8] sm:$0xff]
        %v1258 = vld [vmem:[%s1201 + $0x1c0] sm:$0xff]
        %v1259 = vld [vmem:[%s1201 + $0x1c8] sm:$0xff]
        %v1260 = vld [vmem:[%s1201 + $0x1d0] sm:$0xff]
        %v1261 = vld [vmem:[%s1201 + $0x1d8] sm:$0xff]
        %v1262 = vld [vmem:[%s1201 + $0x1e0] sm:$0xff]
        %v1263 = vld [vmem:[%s1201 + $0x1e8] sm:$0xff]
        %v1264 = vld [vmem:[%s1201 + $0x1f0] sm:$0xff]
        %v1265 = vld [vmem:[%s1201 + $0x1f8] sm:$0xff]
        %1266 = vmatprep.subr.mxu0 %v1203
        %1267 = vmatpush1.msra.mxu0 %v1202
        %1268 = vmatprep.subr.mxu0 %v1205
        %1269 = vmatpush1.msra.mxu0 %v1204
        %1270 = vmatprep.subr.mxu0 %v1207
        %1271 = vmatpush1.msra.mxu0 %v1206
        %1272 = vmatprep.subr.mxu0 %v1209
        %1273 = vmatpush1.msra.mxu0 %v1208
        %1274 = vmatprep.subr.mxu0 %v1211
        %1275 = vmatpush1.msra.mxu0 %v1210
        %1276 = vmatprep.subr.mxu0 %v1213
        %1277 = vmatpush1.msra.mxu0 %v1212
        %1278 = vmatprep.subr.mxu0 %v1215
        %1279 = vmatpush1.msra.mxu0 %v1214
        %1280 = vmatprep.subr.mxu0 %v1217
        %1281 = vmatpush1.msra.mxu0 %v1216
        %1282 = vmatprep.subr.mxu0 %v1219
        %1283 = vmatpush1.msra.mxu0 %v1218
        %1284 = vmatprep.subr.mxu0 %v1221
        %1285 = vmatpush1.msra.mxu0 %v1220
        %1286 = vmatprep.subr.mxu0 %v1223
        %1287 = vmatpush1.msra.mxu0 %v1222
        %1288 = vmatprep.subr.mxu0 %v1225
        %1289 = vmatpush1.msra.mxu0 %v1224
        %1290 = vmatprep.subr.mxu0 %v1227
        %1291 = vmatpush1.msra.mxu0 %v1226
        %1292 = vmatprep.subr.mxu0 %v1229
        %1293 = vmatpush1.msra.mxu0 %v1228
        %1294 = vmatprep.subr.mxu0 %v1231
        %1295 = vmatpush1.msra.mxu0 %v1230
        %1296 = vmatprep.subr.mxu0 %v1233
        %1297 = vmatpush1.msra.mxu0 %v1232
        %1298 = vmatprep.subr.mxu0 %v1235
        %1299 = vmatpush1.msra.mxu0 %v1234
        %1300 = vmatprep.subr.mxu0 %v1237
        %1301 = vmatpush1.msra.mxu0 %v1236
        %1302 = vmatprep.subr.mxu0 %v1239
        %1303 = vmatpush1.msra.mxu0 %v1238
        %1304 = vmatprep.subr.mxu0 %v1241
        %1305 = vmatpush1.msra.mxu0 %v1240
        %1306 = vmatprep.subr.mxu0 %v1243
        %1307 = vmatpush1.msra.mxu0 %v1242
        %1308 = vmatprep.subr.mxu0 %v1245
        %1309 = vmatpush1.msra.mxu0 %v1244
        %1310 = vmatprep.subr.mxu0 %v1247
        %1311 = vmatpush1.msra.mxu0 %v1246
        %1312 = vmatprep.subr.mxu0 %v1249
        %1313 = vmatpush1.msra.mxu0 %v1248
        %1314 = vmatprep.subr.mxu0 %v1251
        %1315 = vmatpush1.msra.mxu0 %v1250
        %1316 = vmatprep.subr.mxu0 %v1253
        %1317 = vmatpush1.msra.mxu0 %v1252
        %1318 = vmatprep.subr.mxu0 %v1255
        %1319 = vmatpush1.msra.mxu0 %v1254
        %1320 = vmatprep.subr.mxu0 %v1257
        %1321 = vmatpush1.msra.mxu0 %v1256
        %1322 = vmatprep.subr.mxu0 %v1259
        %1323 = vmatpush1.msra.mxu0 %v1258
        %1324 = vmatprep.subr.mxu0 %v1261
        %1325 = vmatpush1.msra.mxu0 %v1260
        %1326 = vmatprep.subr.mxu0 %v1263
        %1327 = vmatpush1.msra.mxu0 %v1262
        %1328 = vmatprep.subr.mxu0 %v1265
        %1329 = vmatpush1.msra.mxu0 %v1264
        %1330 = vmatprep.mubr.f32.mxu0 %v387
        %1331 = vmatmul.mubr.f32.gmra.mrb[0].mxu0 %v321
        %v1332 = vpop.f32.mrb[0].mxu0
        %v1333 = vadd.f32 0.0, %v1332
        %v1334 = vpop.f32.mrb[0].mxu0
        %v1335 = vadd.f32 0.0, %v1334
        %1336 = vdwg.mxu0
        %s1337 = scalar_lea.vmem %s2, 32
        %v1338 = vld [vmem:[%s1337] sm:$0xff]
        %v1340 = vsel %vm599, %v1338, 0
        %v1343 = vsel %vm603, %v1333, 0
        %v1346 = vsel %vm603, %v1335, 0
        %1348 = vmatprep.subr.mxu0 %v1346
        %1349 = vmatpush1.msra.mxu0 %v1343
        %1350 = vmatprep.subr.mxu0 0.0
        %1351 = vmatpush1.msra.mxu0 0.0
        %1352 = vmatprep.subr.mxu0 0.0
        %1353 = vmatpush1.msra.mxu0 0.0
        %1354 = vmatprep.subr.mxu0 0.0
        %1355 = vmatpush1.msra.mxu0 0.0
        %1356 = vmatprep.subr.mxu0 0.0
        %1357 = vmatpush1.msra.mxu0 0.0
        %1358 = vmatprep.subr.mxu0 0.0
        %1359 = vmatpush1.msra.mxu0 0.0
        %1360 = vmatprep.subr.mxu0 0.0
        %1361 = vmatpush1.msra.mxu0 0.0
        %1362 = vmatprep.subr.mxu0 0.0
        %1363 = vmatpush1.msra.mxu0 0.0
        %1364 = vmatprep.subr.mxu0 0.0
        %1365 = vmatpush1.msra.mxu0 0.0
        %1366 = vmatprep.subr.mxu0 0.0
        %1367 = vmatpush1.msra.mxu0 0.0
        %1368 = vmatprep.subr.mxu0 0.0
        %1369 = vmatpush1.msra.mxu0 0.0
        %1370 = vmatprep.subr.mxu0 0.0
        %1371 = vmatpush1.msra.mxu0 0.0
        %1372 = vmatprep.subr.mxu0 0.0
        %1373 = vmatpush1.msra.mxu0 0.0
        %1374 = vmatprep.subr.mxu0 0.0
        %1375 = vmatpush1.msra.mxu0 0.0
        %1376 = vmatprep.subr.mxu0 0.0
        %1377 = vmatpush1.msra.mxu0 0.0
        %1378 = vmatprep.subr.mxu0 0.0
        %1379 = vmatpush1.msra.mxu0 0.0
        %1380 = vmatprep.subr.mxu0 0.0
        %1381 = vmatpush1.msra.mxu0 0.0
        %1382 = vmatprep.subr.mxu0 0.0
        %1383 = vmatpush1.msra.mxu0 0.0
        %1384 = vmatprep.subr.mxu0 0.0
        %1385 = vmatpush1.msra.mxu0 0.0
        %1386 = vmatprep.subr.mxu0 0.0
        %1387 = vmatpush1.msra.mxu0 0.0
        %1388 = vmatprep.subr.mxu0 0.0
        %1389 = vmatpush1.msra.mxu0 0.0
        %1390 = vmatprep.subr.mxu0 0.0
        %1391 = vmatpush1.msra.mxu0 0.0
        %1392 = vmatprep.subr.mxu0 0.0
        %1393 = vmatpush1.msra.mxu0 0.0
        %1394 = vmatprep.subr.mxu0 0.0
        %1395 = vmatpush1.msra.mxu0 0.0
        %1396 = vmatprep.subr.mxu0 0.0
        %1397 = vmatpush1.msra.mxu0 0.0
        %1398 = vmatprep.subr.mxu0 0.0
        %1399 = vmatpush1.msra.mxu0 0.0
        %1400 = vmatprep.subr.mxu0 0.0
        %1401 = vmatpush1.msra.mxu0 0.0
        %1402 = vmatprep.subr.mxu0 0.0
        %1403 = vmatpush1.msra.mxu0 0.0
        %1404 = vmatprep.subr.mxu0 0.0
        %1405 = vmatpush1.msra.mxu0 0.0
        %1406 = vmatprep.subr.mxu0 0.0
        %1407 = vmatpush1.msra.mxu0 0.0
        %1408 = vmatprep.subr.mxu0 0.0
        %1409 = vmatpush1.msra.mxu0 0.0
        %1410 = vmatprep.subr.mxu0 0.0
        %1411 = vmatpush1.msra.mxu0 0.0
        %1412 = vmatprep.mubr.f32.mxu0 0.0
        %1413 = vmatmul.mubr.f32.gmra.mrb[0].mxu0 %v1340
        %v1414 = vpop.f32.mrb[0].mxu0
        %v1415 = vadd.f32 0.0, %v1414
        %v1416 = vpop.f32.mrb[0].mxu0
        %v1417 = vadd.f32 0.0, %v1416
        %1418 = vdwg.mxu0
        %v1419 = vadd.f32 %v1199, %v1415
        %v1420 = vadd.f32 %v1200, %v1417
        %s1421 = scalar_lea.vmem [#allocation5], 2560
        %v1422 = vld [vmem:[%s1421] sm:$0xff]
        %v1423 = vld [vmem:[%s1421 + $0x8] sm:$0xff]
        %v1424 = vld [vmem:[%s1421 + $0x10] sm:$0xff]
        %v1425 = vld [vmem:[%s1421 + $0x18] sm:$0xff]
        %v1426 = vld [vmem:[%s1421 + $0x20] sm:$0xff]
        %v1427 = vld [vmem:[%s1421 + $0x28] sm:$0xff]
        %v1428 = vld [vmem:[%s1421 + $0x30] sm:$0xff]
        %v1429 = vld [vmem:[%s1421 + $0x38] sm:$0xff]
        %v1430 = vld [vmem:[%s1421 + $0x40] sm:$0xff]
        %v1431 = vld [vmem:[%s1421 + $0x48] sm:$0xff]
        %v1432 = vld [vmem:[%s1421 + $0x50] sm:$0xff]
        %v1433 = vld [vmem:[%s1421 + $0x58] sm:$0xff]
        %v1434 = vld [vmem:[%s1421 + $0x60] sm:$0xff]
        %v1435 = vld [vmem:[%s1421 + $0x68] sm:$0xff]
        %v1436 = vld [vmem:[%s1421 + $0x70] sm:$0xff]
        %v1437 = vld [vmem:[%s1421 + $0x78] sm:$0xff]
        %v1438 = vld [vmem:[%s1421 + $0x80] sm:$0xff]
        %v1439 = vld [vmem:[%s1421 + $0x88] sm:$0xff]
        %v1440 = vld [vmem:[%s1421 + $0x90] sm:$0xff]
        %v1441 = vld [vmem:[%s1421 + $0x98] sm:$0xff]
        %v1442 = vld [vmem:[%s1421 + $0xa0] sm:$0xff]
        %v1443 = vld [vmem:[%s1421 + $0xa8] sm:$0xff]
        %v1444 = vld [vmem:[%s1421 + $0xb0] sm:$0xff]
        %v1445 = vld [vmem:[%s1421 + $0xb8] sm:$0xff]
        %v1446 = vld [vmem:[%s1421 + $0xc0] sm:$0xff]
        %v1447 = vld [vmem:[%s1421 + $0xc8] sm:$0xff]
        %v1448 = vld [vmem:[%s1421 + $0xd0] sm:$0xff]
        %v1449 = vld [vmem:[%s1421 + $0xd8] sm:$0xff]
        %v1450 = vld [vmem:[%s1421 + $0xe0] sm:$0xff]
        %v1451 = vld [vmem:[%s1421 + $0xe8] sm:$0xff]
        %v1452 = vld [vmem:[%s1421 + $0xf0] sm:$0xff]
        %v1453 = vld [vmem:[%s1421 + $0xf8] sm:$0xff]
        %v1454 = vld [vmem:[%s1421 + $0x100] sm:$0xff]
        %v1455 = vld [vmem:[%s1421 + $0x108] sm:$0xff]
        %v1456 = vld [vmem:[%s1421 + $0x110] sm:$0xff]
        %v1457 = vld [vmem:[%s1421 + $0x118] sm:$0xff]
        %v1458 = vld [vmem:[%s1421 + $0x120] sm:$0xff]
        %v1459 = vld [vmem:[%s1421 + $0x128] sm:$0xff]
        %v1460 = vld [vmem:[%s1421 + $0x130] sm:$0xff]
        %v1461 = vld [vmem:[%s1421 + $0x138] sm:$0xff]
        %v1462 = vld [vmem:[%s1421 + $0x140] sm:$0xff]
        %v1463 = vld [vmem:[%s1421 + $0x148] sm:$0xff]
        %v1464 = vld [vmem:[%s1421 + $0x150] sm:$0xff]
        %v1465 = vld [vmem:[%s1421 + $0x158] sm:$0xff]
        %v1466 = vld [vmem:[%s1421 + $0x160] sm:$0xff]
        %v1467 = vld [vmem:[%s1421 + $0x168] sm:$0xff]
        %v1468 = vld [vmem:[%s1421 + $0x170] sm:$0xff]
        %v1469 = vld [vmem:[%s1421 + $0x178] sm:$0xff]
        %v1470 = vld [vmem:[%s1421 + $0x180] sm:$0xff]
        %v1471 = vld [vmem:[%s1421 + $0x188] sm:$0xff]
        %v1472 = vld [vmem:[%s1421 + $0x190] sm:$0xff]
        %v1473 = vld [vmem:[%s1421 + $0x198] sm:$0xff]
        %v1474 = vld [vmem:[%s1421 + $0x1a0] sm:$0xff]
        %v1475 = vld [vmem:[%s1421 + $0x1a8] sm:$0xff]
        %v1476 = vld [vmem:[%s1421 + $0x1b0] sm:$0xff]
        %v1477 = vld [vmem:[%s1421 + $0x1b8] sm:$0xff]
        %v1478 = vld [vmem:[%s1421 + $0x1c0] sm:$0xff]
        %v1479 = vld [vmem:[%s1421 + $0x1c8] sm:$0xff]
        %v1480 = vld [vmem:[%s1421 + $0x1d0] sm:$0xff]
        %v1481 = vld [vmem:[%s1421 + $0x1d8] sm:$0xff]
        %v1482 = vld [vmem:[%s1421 + $0x1e0] sm:$0xff]
        %v1483 = vld [vmem:[%s1421 + $0x1e8] sm:$0xff]
        %v1484 = vld [vmem:[%s1421 + $0x1f0] sm:$0xff]
        %v1485 = vld [vmem:[%s1421 + $0x1f8] sm:$0xff]
        %1486 = vmatprep.subr.mxu0 %v1423
        %1487 = vmatpush1.msra.mxu0 %v1422
        %1488 = vmatprep.subr.mxu0 %v1425
        %1489 = vmatpush1.msra.mxu0 %v1424
        %1490 = vmatprep.subr.mxu0 %v1427
        %1491 = vmatpush1.msra.mxu0 %v1426
        %1492 = vmatprep.subr.mxu0 %v1429
        %1493 = vmatpush1.msra.mxu0 %v1428
        %1494 = vmatprep.subr.mxu0 %v1431
        %1495 = vmatpush1.msra.mxu0 %v1430
        %1496 = vmatprep.subr.mxu0 %v1433
        %1497 = vmatpush1.msra.mxu0 %v1432
        %1498 = vmatprep.subr.mxu0 %v1435
        %1499 = vmatpush1.msra.mxu0 %v1434
        %1500 = vmatprep.subr.mxu0 %v1437
        %1501 = vmatpush1.msra.mxu0 %v1436
        %1502 = vmatprep.subr.mxu0 %v1439
        %1503 = vmatpush1.msra.mxu0 %v1438
        %1504 = vmatprep.subr.mxu0 %v1441
        %1505 = vmatpush1.msra.mxu0 %v1440
        %1506 = vmatprep.subr.mxu0 %v1443
        %1507 = vmatpush1.msra.mxu0 %v1442
        %1508 = vmatprep.subr.mxu0 %v1445
        %1509 = vmatpush1.msra.mxu0 %v1444
        %1510 = vmatprep.subr.mxu0 %v1447
        %1511 = vmatpush1.msra.mxu0 %v1446
        %1512 = vmatprep.subr.mxu0 %v1449
        %1513 = vmatpush1.msra.mxu0 %v1448
        %1514 = vmatprep.subr.mxu0 %v1451
        %1515 = vmatpush1.msra.mxu0 %v1450
        %1516 = vmatprep.subr.mxu0 %v1453
        %1517 = vmatpush1.msra.mxu0 %v1452
        %1518 = vmatprep.subr.mxu0 %v1455
        %1519 = vmatpush1.msra.mxu0 %v1454
        %1520 = vmatprep.subr.mxu0 %v1457
        %1521 = vmatpush1.msra.mxu0 %v1456
        %1522 = vmatprep.subr.mxu0 %v1459
        %1523 = vmatpush1.msra.mxu0 %v1458
        %1524 = vmatprep.subr.mxu0 %v1461
        %1525 = vmatpush1.msra.mxu0 %v1460
        %1526 = vmatprep.subr.mxu0 %v1463
        %1527 = vmatpush1.msra.mxu0 %v1462
        %1528 = vmatprep.subr.mxu0 %v1465
        %1529 = vmatpush1.msra.mxu0 %v1464
        %1530 = vmatprep.subr.mxu0 %v1467
        %1531 = vmatpush1.msra.mxu0 %v1466
        %1532 = vmatprep.subr.mxu0 %v1469
        %1533 = vmatpush1.msra.mxu0 %v1468
        %1534 = vmatprep.subr.mxu0 %v1471
        %1535 = vmatpush1.msra.mxu0 %v1470
        %1536 = vmatprep.subr.mxu0 %v1473
        %1537 = vmatpush1.msra.mxu0 %v1472
        %1538 = vmatprep.subr.mxu0 %v1475
        %1539 = vmatpush1.msra.mxu0 %v1474
        %1540 = vmatprep.subr.mxu0 %v1477
        %1541 = vmatpush1.msra.mxu0 %v1476
        %1542 = vmatprep.subr.mxu0 %v1479
        %1543 = vmatpush1.msra.mxu0 %v1478
        %1544 = vmatprep.subr.mxu0 %v1481
        %1545 = vmatpush1.msra.mxu0 %v1480
        %1546 = vmatprep.subr.mxu0 %v1483
        %1547 = vmatpush1.msra.mxu0 %v1482
        %1548 = vmatprep.subr.mxu0 %v1485
        %1549 = vmatpush1.msra.mxu0 %v1484
        %1550 = vmatprep.mubr.f32.mxu0 %v387
        %1551 = vmatmul.mubr.f32.gmra.mrb[0].mxu0 %v321
        %v1552 = vpop.f32.mrb[0].mxu0
        %v1553 = vadd.f32 0.0, %v1552
        %v1554 = vpop.f32.mrb[0].mxu0
        %v1555 = vadd.f32 0.0, %v1554
        %1556 = vdwg.mxu0
        %s1557 = scalar_lea.vmem %s2, 40
        %v1558 = vld [vmem:[%s1557] sm:$0xff]
        %v1560 = vsel %vm599, %v1558, 0
        %v1563 = vsel %vm603, %v1553, 0
        %v1566 = vsel %vm603, %v1555, 0
        %1568 = vmatprep.subr.mxu0 %v1566
        %1569 = vmatpush1.msra.mxu0 %v1563
        %1570 = vmatprep.subr.mxu0 0.0
        %1571 = vmatpush1.msra.mxu0 0.0
        %1572 = vmatprep.subr.mxu0 0.0
        %1573 = vmatpush1.msra.mxu0 0.0
        %1574 = vmatprep.subr.mxu0 0.0
        %1575 = vmatpush1.msra.mxu0 0.0
        %1576 = vmatprep.subr.mxu0 0.0
        %1577 = vmatpush1.msra.mxu0 0.0
        %1578 = vmatprep.subr.mxu0 0.0
        %1579 = vmatpush1.msra.mxu0 0.0
        %1580 = vmatprep.subr.mxu0 0.0
        %1581 = vmatpush1.msra.mxu0 0.0
        %1582 = vmatprep.subr.mxu0 0.0
        %1583 = vmatpush1.msra.mxu0 0.0
        %1584 = vmatprep.subr.mxu0 0.0
        %1585 = vmatpush1.msra.mxu0 0.0
        %1586 = vmatprep.subr.mxu0 0.0
        %1587 = vmatpush1.msra.mxu0 0.0
        %1588 = vmatprep.subr.mxu0 0.0
        %1589 = vmatpush1.msra.mxu0 0.0
        %1590 = vmatprep.subr.mxu0 0.0
        %1591 = vmatpush1.msra.mxu0 0.0
        %1592 = vmatprep.subr.mxu0 0.0
        %1593 = vmatpush1.msra.mxu0 0.0
        %1594 = vmatprep.subr.mxu0 0.0
        %1595 = vmatpush1.msra.mxu0 0.0
        %1596 = vmatprep.subr.mxu0 0.0
        %1597 = vmatpush1.msra.mxu0 0.0
        %1598 = vmatprep.subr.mxu0 0.0
        %1599 = vmatpush1.msra.mxu0 0.0
        %1600 = vmatprep.subr.mxu0 0.0
        %1601 = vmatpush1.msra.mxu0 0.0
        %1602 = vmatprep.subr.mxu0 0.0
        %1603 = vmatpush1.msra.mxu0 0.0
        %1604 = vmatprep.subr.mxu0 0.0
        %1605 = vmatpush1.msra.mxu0 0.0
        %1606 = vmatprep.subr.mxu0 0.0
        %1607 = vmatpush1.msra.mxu0 0.0
        %1608 = vmatprep.subr.mxu0 0.0
        %1609 = vmatpush1.msra.mxu0 0.0
        %1610 = vmatprep.subr.mxu0 0.0
        %1611 = vmatpush1.msra.mxu0 0.0
        %1612 = vmatprep.subr.mxu0 0.0
        %1613 = vmatpush1.msra.mxu0 0.0
        %1614 = vmatprep.subr.mxu0 0.0
        %1615 = vmatpush1.msra.mxu0 0.0
        %1616 = vmatprep.subr.mxu0 0.0
        %1617 = vmatpush1.msra.mxu0 0.0
        %1618 = vmatprep.subr.mxu0 0.0
        %1619 = vmatpush1.msra.mxu0 0.0
        %1620 = vmatprep.subr.mxu0 0.0
        %1621 = vmatpush1.msra.mxu0 0.0
        %1622 = vmatprep.subr.mxu0 0.0
        %1623 = vmatpush1.msra.mxu0 0.0
        %1624 = vmatprep.subr.mxu0 0.0
        %1625 = vmatpush1.msra.mxu0 0.0
        %1626 = vmatprep.subr.mxu0 0.0
        %1627 = vmatpush1.msra.mxu0 0.0
        %1628 = vmatprep.subr.mxu0 0.0
        %1629 = vmatpush1.msra.mxu0 0.0
        %1630 = vmatprep.subr.mxu0 0.0
        %1631 = vmatpush1.msra.mxu0 0.0
        %1632 = vmatprep.mubr.f32.mxu0 0.0
        %1633 = vmatmul.mubr.f32.gmra.mrb[0].mxu0 %v1560
        %v1634 = vpop.f32.mrb[0].mxu0
        %v1635 = vadd.f32 0.0, %v1634
        %v1636 = vpop.f32.mrb[0].mxu0
        %v1637 = vadd.f32 0.0, %v1636
        %1638 = vdwg.mxu0
        %v1639 = vadd.f32 %v1419, %v1635
        %v1640 = vadd.f32 %v1420, %v1637
        %s1641 = scalar_lea.vmem [#allocation5], 3072
        %v1642 = vld [vmem:[%s1641] sm:$0xff]
        %v1643 = vld [vmem:[%s1641 + $0x8] sm:$0xff]
        %v1644 = vld [vmem:[%s1641 + $0x10] sm:$0xff]
        %v1645 = vld [vmem:[%s1641 + $0x18] sm:$0xff]
        %v1646 = vld [vmem:[%s1641 + $0x20] sm:$0xff]
        %v1647 = vld [vmem:[%s1641 + $0x28] sm:$0xff]
        %v1648 = vld [vmem:[%s1641 + $0x30] sm:$0xff]
        %v1649 = vld [vmem:[%s1641 + $0x38] sm:$0xff]
        %v1650 = vld [vmem:[%s1641 + $0x40] sm:$0xff]
        %v1651 = vld [vmem:[%s1641 + $0x48] sm:$0xff]
        %v1652 = vld [vmem:[%s1641 + $0x50] sm:$0xff]
        %v1653 = vld [vmem:[%s1641 + $0x58] sm:$0xff]
        %v1654 = vld [vmem:[%s1641 + $0x60] sm:$0xff]
        %v1655 = vld [vmem:[%s1641 + $0x68] sm:$0xff]
        %v1656 = vld [vmem:[%s1641 + $0x70] sm:$0xff]
        %v1657 = vld [vmem:[%s1641 + $0x78] sm:$0xff]
        %v1658 = vld [vmem:[%s1641 + $0x80] sm:$0xff]
        %v1659 = vld [vmem:[%s1641 + $0x88] sm:$0xff]
        %v1660 = vld [vmem:[%s1641 + $0x90] sm:$0xff]
        %v1661 = vld [vmem:[%s1641 + $0x98] sm:$0xff]
        %v1662 = vld [vmem:[%s1641 + $0xa0] sm:$0xff]
        %v1663 = vld [vmem:[%s1641 + $0xa8] sm:$0xff]
        %v1664 = vld [vmem:[%s1641 + $0xb0] sm:$0xff]
        %v1665 = vld [vmem:[%s1641 + $0xb8] sm:$0xff]
        %v1666 = vld [vmem:[%s1641 + $0xc0] sm:$0xff]
        %v1667 = vld [vmem:[%s1641 + $0xc8] sm:$0xff]
        %v1668 = vld [vmem:[%s1641 + $0xd0] sm:$0xff]
        %v1669 = vld [vmem:[%s1641 + $0xd8] sm:$0xff]
        %v1670 = vld [vmem:[%s1641 + $0xe0] sm:$0xff]
        %v1671 = vld [vmem:[%s1641 + $0xe8] sm:$0xff]
        %v1672 = vld [vmem:[%s1641 + $0xf0] sm:$0xff]
        %v1673 = vld [vmem:[%s1641 + $0xf8] sm:$0xff]
        %v1674 = vld [vmem:[%s1641 + $0x100] sm:$0xff]
        %v1675 = vld [vmem:[%s1641 + $0x108] sm:$0xff]
        %v1676 = vld [vmem:[%s1641 + $0x110] sm:$0xff]
        %v1677 = vld [vmem:[%s1641 + $0x118] sm:$0xff]
        %v1678 = vld [vmem:[%s1641 + $0x120] sm:$0xff]
        %v1679 = vld [vmem:[%s1641 + $0x128] sm:$0xff]
        %v1680 = vld [vmem:[%s1641 + $0x130] sm:$0xff]
        %v1681 = vld [vmem:[%s1641 + $0x138] sm:$0xff]
        %v1682 = vld [vmem:[%s1641 + $0x140] sm:$0xff]
        %v1683 = vld [vmem:[%s1641 + $0x148] sm:$0xff]
        %v1684 = vld [vmem:[%s1641 + $0x150] sm:$0xff]
        %v1685 = vld [vmem:[%s1641 + $0x158] sm:$0xff]
        %v1686 = vld [vmem:[%s1641 + $0x160] sm:$0xff]
        %v1687 = vld [vmem:[%s1641 + $0x168] sm:$0xff]
        %v1688 = vld [vmem:[%s1641 + $0x170] sm:$0xff]
        %v1689 = vld [vmem:[%s1641 + $0x178] sm:$0xff]
        %v1690 = vld [vmem:[%s1641 + $0x180] sm:$0xff]
        %v1691 = vld [vmem:[%s1641 + $0x188] sm:$0xff]
        %v1692 = vld [vmem:[%s1641 + $0x190] sm:$0xff]
        %v1693 = vld [vmem:[%s1641 + $0x198] sm:$0xff]
        %v1694 = vld [vmem:[%s1641 + $0x1a0] sm:$0xff]
        %v1695 = vld [vmem:[%s1641 + $0x1a8] sm:$0xff]
        %v1696 = vld [vmem:[%s1641 + $0x1b0] sm:$0xff]
        %v1697 = vld [vmem:[%s1641 + $0x1b8] sm:$0xff]
        %v1698 = vld [vmem:[%s1641 + $0x1c0] sm:$0xff]
        %v1699 = vld [vmem:[%s1641 + $0x1c8] sm:$0xff]
        %v1700 = vld [vmem:[%s1641 + $0x1d0] sm:$0xff]
        %v1701 = vld [vmem:[%s1641 + $0x1d8] sm:$0xff]
        %v1702 = vld [vmem:[%s1641 + $0x1e0] sm:$0xff]
        %v1703 = vld [vmem:[%s1641 + $0x1e8] sm:$0xff]
        %v1704 = vld [vmem:[%s1641 + $0x1f0] sm:$0xff]
        %v1705 = vld [vmem:[%s1641 + $0x1f8] sm:$0xff]
        %1706 = vmatprep.subr.mxu0 %v1643
        %1707 = vmatpush1.msra.mxu0 %v1642
        %1708 = vmatprep.subr.mxu0 %v1645
        %1709 = vmatpush1.msra.mxu0 %v1644
        %1710 = vmatprep.subr.mxu0 %v1647
        %1711 = vmatpush1.msra.mxu0 %v1646
        %1712 = vmatprep.subr.mxu0 %v1649
        %1713 = vmatpush1.msra.mxu0 %v1648
        %1714 = vmatprep.subr.mxu0 %v1651
        %1715 = vmatpush1.msra.mxu0 %v1650
        %1716 = vmatprep.subr.mxu0 %v1653
        %1717 = vmatpush1.msra.mxu0 %v1652
        %1718 = vmatprep.subr.mxu0 %v1655
        %1719 = vmatpush1.msra.mxu0 %v1654
        %1720 = vmatprep.subr.mxu0 %v1657
        %1721 = vmatpush1.msra.mxu0 %v1656
        %1722 = vmatprep.subr.mxu0 %v1659
        %1723 = vmatpush1.msra.mxu0 %v1658
        %1724 = vmatprep.subr.mxu0 %v1661
        %1725 = vmatpush1.msra.mxu0 %v1660
        %1726 = vmatprep.subr.mxu0 %v1663
        %1727 = vmatpush1.msra.mxu0 %v1662
        %1728 = vmatprep.subr.mxu0 %v1665
        %1729 = vmatpush1.msra.mxu0 %v1664
        %1730 = vmatprep.subr.mxu0 %v1667
        %1731 = vmatpush1.msra.mxu0 %v1666
        %1732 = vmatprep.subr.mxu0 %v1669
        %1733 = vmatpush1.msra.mxu0 %v1668
        %1734 = vmatprep.subr.mxu0 %v1671
        %1735 = vmatpush1.msra.mxu0 %v1670
        %1736 = vmatprep.subr.mxu0 %v1673
        %1737 = vmatpush1.msra.mxu0 %v1672
        %1738 = vmatprep.subr.mxu0 %v1675
        %1739 = vmatpush1.msra.mxu0 %v1674
        %1740 = vmatprep.subr.mxu0 %v1677
        %1741 = vmatpush1.msra.mxu0 %v1676
        %1742 = vmatprep.subr.mxu0 %v1679
        %1743 = vmatpush1.msra.mxu0 %v1678
        %1744 = vmatprep.subr.mxu0 %v1681
        %1745 = vmatpush1.msra.mxu0 %v1680
        %1746 = vmatprep.subr.mxu0 %v1683
        %1747 = vmatpush1.msra.mxu0 %v1682
        %1748 = vmatprep.subr.mxu0 %v1685
        %1749 = vmatpush1.msra.mxu0 %v1684
        %1750 = vmatprep.subr.mxu0 %v1687
        %1751 = vmatpush1.msra.mxu0 %v1686
        %1752 = vmatprep.subr.mxu0 %v1689
        %1753 = vmatpush1.msra.mxu0 %v1688
        %1754 = vmatprep.subr.mxu0 %v1691
        %1755 = vmatpush1.msra.mxu0 %v1690
        %1756 = vmatprep.subr.mxu0 %v1693
        %1757 = vmatpush1.msra.mxu0 %v1692
        %1758 = vmatprep.subr.mxu0 %v1695
        %1759 = vmatpush1.msra.mxu0 %v1694
        %1760 = vmatprep.subr.mxu0 %v1697
        %1761 = vmatpush1.msra.mxu0 %v1696
        %1762 = vmatprep.subr.mxu0 %v1699
        %1763 = vmatpush1.msra.mxu0 %v1698
        %1764 = vmatprep.subr.mxu0 %v1701
        %1765 = vmatpush1.msra.mxu0 %v1700
        %1766 = vmatprep.subr.mxu0 %v1703
        %1767 = vmatpush1.msra.mxu0 %v1702
        %1768 = vmatprep.subr.mxu0 %v1705
        %1769 = vmatpush1.msra.mxu0 %v1704
        %1770 = vmatprep.mubr.f32.mxu0 %v387
        %1771 = vmatmul.mubr.f32.gmra.mrb[0].mxu0 %v321
        %v1772 = vpop.f32.mrb[0].mxu0
        %v1773 = vadd.f32 0.0, %v1772
        %v1774 = vpop.f32.mrb[0].mxu0
        %v1775 = vadd.f32 0.0, %v1774
        %1776 = vdwg.mxu0
        %s1777 = scalar_lea.vmem %s2, 48
        %v1778 = vld [vmem:[%s1777] sm:$0xff]
        %v1780 = vsel %vm599, %v1778, 0
        %v1783 = vsel %vm603, %v1773, 0
        %v1786 = vsel %vm603, %v1775, 0
        %1788 = vmatprep.subr.mxu0 %v1786
        %1789 = vmatpush1.msra.mxu0 %v1783
        %1790 = vmatprep.subr.mxu0 0.0
        %1791 = vmatpush1.msra.mxu0 0.0
        %1792 = vmatprep.subr.mxu0 0.0
        %1793 = vmatpush1.msra.mxu0 0.0
        %1794 = vmatprep.subr.mxu0 0.0
        %1795 = vmatpush1.msra.mxu0 0.0
        %1796 = vmatprep.subr.mxu0 0.0
        %1797 = vmatpush1.msra.mxu0 0.0
        %1798 = vmatprep.subr.mxu0 0.0
        %1799 = vmatpush1.msra.mxu0 0.0
        %1800 = vmatprep.subr.mxu0 0.0
        %1801 = vmatpush1.msra.mxu0 0.0
        %1802 = vmatprep.subr.mxu0 0.0
        %1803 = vmatpush1.msra.mxu0 0.0
        %1804 = vmatprep.subr.mxu0 0.0
        %1805 = vmatpush1.msra.mxu0 0.0
        %1806 = vmatprep.subr.mxu0 0.0
        %1807 = vmatpush1.msra.mxu0 0.0
        %1808 = vmatprep.subr.mxu0 0.0
        %1809 = vmatpush1.msra.mxu0 0.0
        %1810 = vmatprep.subr.mxu0 0.0
        %1811 = vmatpush1.msra.mxu0 0.0
        %1812 = vmatprep.subr.mxu0 0.0
        %1813 = vmatpush1.msra.mxu0 0.0
        %1814 = vmatprep.subr.mxu0 0.0
        %1815 = vmatpush1.msra.mxu0 0.0
        %1816 = vmatprep.subr.mxu0 0.0
        %1817 = vmatpush1.msra.mxu0 0.0
        %1818 = vmatprep.subr.mxu0 0.0
        %1819 = vmatpush1.msra.mxu0 0.0
        %1820 = vmatprep.subr.mxu0 0.0
        %1821 = vmatpush1.msra.mxu0 0.0
        %1822 = vmatprep.subr.mxu0 0.0
        %1823 = vmatpush1.msra.mxu0 0.0
        %1824 = vmatprep.subr.mxu0 0.0
        %1825 = vmatpush1.msra.mxu0 0.0
        %1826 = vmatprep.subr.mxu0 0.0
        %1827 = vmatpush1.msra.mxu0 0.0
        %1828 = vmatprep.subr.mxu0 0.0
        %1829 = vmatpush1.msra.mxu0 0.0
        %1830 = vmatprep.subr.mxu0 0.0
        %1831 = vmatpush1.msra.mxu0 0.0
        %1832 = vmatprep.subr.mxu0 0.0
        %1833 = vmatpush1.msra.mxu0 0.0
        %1834 = vmatprep.subr.mxu0 0.0
        %1835 = vmatpush1.msra.mxu0 0.0
        %1836 = vmatprep.subr.mxu0 0.0
        %1837 = vmatpush1.msra.mxu0 0.0
        %1838 = vmatprep.subr.mxu0 0.0
        %1839 = vmatpush1.msra.mxu0 0.0
        %1840 = vmatprep.subr.mxu0 0.0
        %1841 = vmatpush1.msra.mxu0 0.0
        %1842 = vmatprep.subr.mxu0 0.0
        %1843 = vmatpush1.msra.mxu0 0.0
        %1844 = vmatprep.subr.mxu0 0.0
        %1845 = vmatpush1.msra.mxu0 0.0
        %1846 = vmatprep.subr.mxu0 0.0
        %1847 = vmatpush1.msra.mxu0 0.0
        %1848 = vmatprep.subr.mxu0 0.0
        %1849 = vmatpush1.msra.mxu0 0.0
        %1850 = vmatprep.subr.mxu0 0.0
        %1851 = vmatpush1.msra.mxu0 0.0
        %1852 = vmatprep.mubr.f32.mxu0 0.0
        %1853 = vmatmul.mubr.f32.gmra.mrb[0].mxu0 %v1780
        %v1854 = vpop.f32.mrb[0].mxu0
        %v1855 = vadd.f32 0.0, %v1854
        %v1856 = vpop.f32.mrb[0].mxu0
        %v1857 = vadd.f32 0.0, %v1856
        %1858 = vdwg.mxu0
        %v1859 = vadd.f32 %v1639, %v1855
        %v1860 = vadd.f32 %v1640, %v1857
        %s1861 = scalar_lea.vmem [#allocation5], 3584
        %v1862 = vld [vmem:[%s1861] sm:$0xff]
        %v1863 = vld [vmem:[%s1861 + $0x8] sm:$0xff]
        %v1864 = vld [vmem:[%s1861 + $0x10] sm:$0xff]
        %v1865 = vld [vmem:[%s1861 + $0x18] sm:$0xff]
        %v1866 = vld [vmem:[%s1861 + $0x20] sm:$0xff]
        %v1867 = vld [vmem:[%s1861 + $0x28] sm:$0xff]
        %v1868 = vld [vmem:[%s1861 + $0x30] sm:$0xff]
        %v1869 = vld [vmem:[%s1861 + $0x38] sm:$0xff]
        %v1870 = vld [vmem:[%s1861 + $0x40] sm:$0xff]
        %v1871 = vld [vmem:[%s1861 + $0x48] sm:$0xff]
        %v1872 = vld [vmem:[%s1861 + $0x50] sm:$0xff]
        %v1873 = vld [vmem:[%s1861 + $0x58] sm:$0xff]
        %v1874 = vld [vmem:[%s1861 + $0x60] sm:$0xff]
        %v1875 = vld [vmem:[%s1861 + $0x68] sm:$0xff]
        %v1876 = vld [vmem:[%s1861 + $0x70] sm:$0xff]
        %v1877 = vld [vmem:[%s1861 + $0x78] sm:$0xff]
        %v1878 = vld [vmem:[%s1861 + $0x80] sm:$0xff]
        %v1879 = vld [vmem:[%s1861 + $0x88] sm:$0xff]
        %v1880 = vld [vmem:[%s1861 + $0x90] sm:$0xff]
        %v1881 = vld [vmem:[%s1861 + $0x98] sm:$0xff]
        %v1882 = vld [vmem:[%s1861 + $0xa0] sm:$0xff]
        %v1883 = vld [vmem:[%s1861 + $0xa8] sm:$0xff]
        %v1884 = vld [vmem:[%s1861 + $0xb0] sm:$0xff]
        %v1885 = vld [vmem:[%s1861 + $0xb8] sm:$0xff]
        %v1886 = vld [vmem:[%s1861 + $0xc0] sm:$0xff]
        %v1887 = vld [vmem:[%s1861 + $0xc8] sm:$0xff]
        %v1888 = vld [vmem:[%s1861 + $0xd0] sm:$0xff]
        %v1889 = vld [vmem:[%s1861 + $0xd8] sm:$0xff]
        %v1890 = vld [vmem:[%s1861 + $0xe0] sm:$0xff]
        %v1891 = vld [vmem:[%s1861 + $0xe8] sm:$0xff]
        %v1892 = vld [vmem:[%s1861 + $0xf0] sm:$0xff]
        %v1893 = vld [vmem:[%s1861 + $0xf8] sm:$0xff]
        %v1894 = vld [vmem:[%s1861 + $0x100] sm:$0xff]
        %v1895 = vld [vmem:[%s1861 + $0x108] sm:$0xff]
        %v1896 = vld [vmem:[%s1861 + $0x110] sm:$0xff]
        %v1897 = vld [vmem:[%s1861 + $0x118] sm:$0xff]
        %v1898 = vld [vmem:[%s1861 + $0x120] sm:$0xff]
        %v1899 = vld [vmem:[%s1861 + $0x128] sm:$0xff]
        %v1900 = vld [vmem:[%s1861 + $0x130] sm:$0xff]
        %v1901 = vld [vmem:[%s1861 + $0x138] sm:$0xff]
        %v1902 = vld [vmem:[%s1861 + $0x140] sm:$0xff]
        %v1903 = vld [vmem:[%s1861 + $0x148] sm:$0xff]
        %v1904 = vld [vmem:[%s1861 + $0x150] sm:$0xff]
        %v1905 = vld [vmem:[%s1861 + $0x158] sm:$0xff]
        %v1906 = vld [vmem:[%s1861 + $0x160] sm:$0xff]
        %v1907 = vld [vmem:[%s1861 + $0x168] sm:$0xff]
        %v1908 = vld [vmem:[%s1861 + $0x170] sm:$0xff]
        %v1909 = vld [vmem:[%s1861 + $0x178] sm:$0xff]
        %v1910 = vld [vmem:[%s1861 + $0x180] sm:$0xff]
        %v1911 = vld [vmem:[%s1861 + $0x188] sm:$0xff]
        %v1912 = vld [vmem:[%s1861 + $0x190] sm:$0xff]
        %v1913 = vld [vmem:[%s1861 + $0x198] sm:$0xff]
        %v1914 = vld [vmem:[%s1861 + $0x1a0] sm:$0xff]
        %v1915 = vld [vmem:[%s1861 + $0x1a8] sm:$0xff]
        %v1916 = vld [vmem:[%s1861 + $0x1b0] sm:$0xff]
        %v1917 = vld [vmem:[%s1861 + $0x1b8] sm:$0xff]
        %v1918 = vld [vmem:[%s1861 + $0x1c0] sm:$0xff]
        %v1919 = vld [vmem:[%s1861 + $0x1c8] sm:$0xff]
        %v1920 = vld [vmem:[%s1861 + $0x1d0] sm:$0xff]
        %v1921 = vld [vmem:[%s1861 + $0x1d8] sm:$0xff]
        %v1922 = vld [vmem:[%s1861 + $0x1e0] sm:$0xff]
        %v1923 = vld [vmem:[%s1861 + $0x1e8] sm:$0xff]
        %v1924 = vld [vmem:[%s1861 + $0x1f0] sm:$0xff]
        %v1925 = vld [vmem:[%s1861 + $0x1f8] sm:$0xff]
        %1926 = vmatprep.subr.mxu0 %v1863
        %1927 = vmatpush1.msra.mxu0 %v1862
        %1928 = vmatprep.subr.mxu0 %v1865
        %1929 = vmatpush1.msra.mxu0 %v1864
        %1930 = vmatprep.subr.mxu0 %v1867
        %1931 = vmatpush1.msra.mxu0 %v1866
        %1932 = vmatprep.subr.mxu0 %v1869
        %1933 = vmatpush1.msra.mxu0 %v1868
        %1934 = vmatprep.subr.mxu0 %v1871
        %1935 = vmatpush1.msra.mxu0 %v1870
        %1936 = vmatprep.subr.mxu0 %v1873
        %1937 = vmatpush1.msra.mxu0 %v1872
        %1938 = vmatprep.subr.mxu0 %v1875
        %1939 = vmatpush1.msra.mxu0 %v1874
        %1940 = vmatprep.subr.mxu0 %v1877
        %1941 = vmatpush1.msra.mxu0 %v1876
        %1942 = vmatprep.subr.mxu0 %v1879
        %1943 = vmatpush1.msra.mxu0 %v1878
        %1944 = vmatprep.subr.mxu0 %v1881
        %1945 = vmatpush1.msra.mxu0 %v1880
        %1946 = vmatprep.subr.mxu0 %v1883
        %1947 = vmatpush1.msra.mxu0 %v1882
        %1948 = vmatprep.subr.mxu0 %v1885
        %1949 = vmatpush1.msra.mxu0 %v1884
        %1950 = vmatprep.subr.mxu0 %v1887
        %1951 = vmatpush1.msra.mxu0 %v1886
        %1952 = vmatprep.subr.mxu0 %v1889
        %1953 = vmatpush1.msra.mxu0 %v1888
        %1954 = vmatprep.subr.mxu0 %v1891
        %1955 = vmatpush1.msra.mxu0 %v1890
        %1956 = vmatprep.subr.mxu0 %v1893
        %1957 = vmatpush1.msra.mxu0 %v1892
        %1958 = vmatprep.subr.mxu0 %v1895
        %1959 = vmatpush1.msra.mxu0 %v1894
        %1960 = vmatprep.subr.mxu0 %v1897
        %1961 = vmatpush1.msra.mxu0 %v1896
        %1962 = vmatprep.subr.mxu0 %v1899
        %1963 = vmatpush1.msra.mxu0 %v1898
        %1964 = vmatprep.subr.mxu0 %v1901
        %1965 = vmatpush1.msra.mxu0 %v1900
        %1966 = vmatprep.subr.mxu0 %v1903
        %1967 = vmatpush1.msra.mxu0 %v1902
        %1968 = vmatprep.subr.mxu0 %v1905
        %1969 = vmatpush1.msra.mxu0 %v1904
        %1970 = vmatprep.subr.mxu0 %v1907
        %1971 = vmatpush1.msra.mxu0 %v1906
        %1972 = vmatprep.subr.mxu0 %v1909
        %1973 = vmatpush1.msra.mxu0 %v1908
        %1974 = vmatprep.subr.mxu0 %v1911
        %1975 = vmatpush1.msra.mxu0 %v1910
        %1976 = vmatprep.subr.mxu0 %v1913
        %1977 = vmatpush1.msra.mxu0 %v1912
        %1978 = vmatprep.subr.mxu0 %v1915
        %1979 = vmatpush1.msra.mxu0 %v1914
        %1980 = vmatprep.subr.mxu0 %v1917
        %1981 = vmatpush1.msra.mxu0 %v1916
        %1982 = vmatprep.subr.mxu0 %v1919
        %1983 = vmatpush1.msra.mxu0 %v1918
        %1984 = vmatprep.subr.mxu0 %v1921
        %1985 = vmatpush1.msra.mxu0 %v1920
        %1986 = vmatprep.subr.mxu0 %v1923
        %1987 = vmatpush1.msra.mxu0 %v1922
        %1988 = vmatprep.subr.mxu0 %v1925
        %1989 = vmatpush1.msra.mxu0 %v1924
        %1990 = vmatprep.mubr.f32.mxu0 %v387
        %1991 = vmatmul.mubr.f32.gmra.mrb[0].mxu0 %v321
        %v1992 = vpop.f32.mrb[0].mxu0
        %v1993 = vadd.f32 0.0, %v1992
        %v1994 = vpop.f32.mrb[0].mxu0
        %v1995 = vadd.f32 0.0, %v1994
        %1996 = vdwg.mxu0
        %s1997 = scalar_lea.vmem %s2, 56
        %v1998 = vld [vmem:[%s1997] sm:$0xff]
        %v2000 = vsel %vm599, %v1998, 0
        %v2003 = vsel %vm603, %v1993, 0
        %v2006 = vsel %vm603, %v1995, 0
        %2008 = vmatprep.subr.mxu0 %v2006
        %2009 = vmatpush1.msra.mxu0 %v2003
        %2010 = vmatprep.subr.mxu0 0.0
        %2011 = vmatpush1.msra.mxu0 0.0
        %2012 = vmatprep.subr.mxu0 0.0
        %2013 = vmatpush1.msra.mxu0 0.0
        %2014 = vmatprep.subr.mxu0 0.0
        %2015 = vmatpush1.msra.mxu0 0.0
        %2016 = vmatprep.subr.mxu0 0.0
        %2017 = vmatpush1.msra.mxu0 0.0
        %2018 = vmatprep.subr.mxu0 0.0
        %2019 = vmatpush1.msra.mxu0 0.0
        %2020 = vmatprep.subr.mxu0 0.0
        %2021 = vmatpush1.msra.mxu0 0.0
        %2022 = vmatprep.subr.mxu0 0.0
        %2023 = vmatpush1.msra.mxu0 0.0
        %2024 = vmatprep.subr.mxu0 0.0
        %2025 = vmatpush1.msra.mxu0 0.0
        %2026 = vmatprep.subr.mxu0 0.0
        %2027 = vmatpush1.msra.mxu0 0.0
        %2028 = vmatprep.subr.mxu0 0.0
        %2029 = vmatpush1.msra.mxu0 0.0
        %2030 = vmatprep.subr.mxu0 0.0
        %2031 = vmatpush1.msra.mxu0 0.0
        %2032 = vmatprep.subr.mxu0 0.0
        %2033 = vmatpush1.msra.mxu0 0.0
        %2034 = vmatprep.subr.mxu0 0.0
        %2035 = vmatpush1.msra.mxu0 0.0
        %2036 = vmatprep.subr.mxu0 0.0
        %2037 = vmatpush1.msra.mxu0 0.0
        %2038 = vmatprep.subr.mxu0 0.0
        %2039 = vmatpush1.msra.mxu0 0.0
        %2040 = vmatprep.subr.mxu0 0.0
        %2041 = vmatpush1.msra.mxu0 0.0
        %2042 = vmatprep.subr.mxu0 0.0
        %2043 = vmatpush1.msra.mxu0 0.0
        %2044 = vmatprep.subr.mxu0 0.0
        %2045 = vmatpush1.msra.mxu0 0.0
        %2046 = vmatprep.subr.mxu0 0.0
        %2047 = vmatpush1.msra.mxu0 0.0
        %2048 = vmatprep.subr.mxu0 0.0
        %2049 = vmatpush1.msra.mxu0 0.0
        %2050 = vmatprep.subr.mxu0 0.0
        %2051 = vmatpush1.msra.mxu0 0.0
        %2052 = vmatprep.subr.mxu0 0.0
        %2053 = vmatpush1.msra.mxu0 0.0
        %2054 = vmatprep.subr.mxu0 0.0
        %2055 = vmatpush1.msra.mxu0 0.0
        %2056 = vmatprep.subr.mxu0 0.0
        %2057 = vmatpush1.msra.mxu0 0.0
        %2058 = vmatprep.subr.mxu0 0.0
        %2059 = vmatpush1.msra.mxu0 0.0
        %2060 = vmatprep.subr.mxu0 0.0
        %2061 = vmatpush1.msra.mxu0 0.0
        %2062 = vmatprep.subr.mxu0 0.0
        %2063 = vmatpush1.msra.mxu0 0.0
        %2064 = vmatprep.subr.mxu0 0.0
        %2065 = vmatpush1.msra.mxu0 0.0
        %2066 = vmatprep.subr.mxu0 0.0
        %2067 = vmatpush1.msra.mxu0 0.0
        %2068 = vmatprep.subr.mxu0 0.0
        %2069 = vmatpush1.msra.mxu0 0.0
        %2070 = vmatprep.subr.mxu0 0.0
        %2071 = vmatpush1.msra.mxu0 0.0
        %2072 = vmatprep.mubr.f32.mxu0 0.0
        %2073 = vmatmul.mubr.f32.gmra.mrb[0].mxu0 %v2000
        %v2074 = vpop.f32.mrb[0].mxu0
        %v2075 = vadd.f32 0.0, %v2074
        %v2076 = vpop.f32.mrb[0].mxu0
        %v2077 = vadd.f32 0.0, %v2076
        %2078 = vdwg.mxu0
        %v2079 = vadd.f32 %v1859, %v2075
        %v2080 = vadd.f32 %v1860, %v2077
        %s2081 = scalar_lea.vmem [#allocation5], 4096
        %v2082 = vld [vmem:[%s2081] sm:$0xff]
        %v2083 = vld [vmem:[%s2081 + $0x8] sm:$0xff]
        %v2084 = vld [vmem:[%s2081 + $0x10] sm:$0xff]
        %v2085 = vld [vmem:[%s2081 + $0x18] sm:$0xff]
        %v2086 = vld [vmem:[%s2081 + $0x20] sm:$0xff]
        %v2087 = vld [vmem:[%s2081 + $0x28] sm:$0xff]
        %v2088 = vld [vmem:[%s2081 + $0x30] sm:$0xff]
        %v2089 = vld [vmem:[%s2081 + $0x38] sm:$0xff]
        %v2090 = vld [vmem:[%s2081 + $0x40] sm:$0xff]
        %v2091 = vld [vmem:[%s2081 + $0x48] sm:$0xff]
        %v2092 = vld [vmem:[%s2081 + $0x50] sm:$0xff]
        %v2093 = vld [vmem:[%s2081 + $0x58] sm:$0xff]
        %v2094 = vld [vmem:[%s2081 + $0x60] sm:$0xff]
        %v2095 = vld [vmem:[%s2081 + $0x68] sm:$0xff]
        %v2096 = vld [vmem:[%s2081 + $0x70] sm:$0xff]
        %v2097 = vld [vmem:[%s2081 + $0x78] sm:$0xff]
        %v2098 = vld [vmem:[%s2081 + $0x80] sm:$0xff]
        %v2099 = vld [vmem:[%s2081 + $0x88] sm:$0xff]
        %v2100 = vld [vmem:[%s2081 + $0x90] sm:$0xff]
        %v2101 = vld [vmem:[%s2081 + $0x98] sm:$0xff]
        %v2102 = vld [vmem:[%s2081 + $0xa0] sm:$0xff]
        %v2103 = vld [vmem:[%s2081 + $0xa8] sm:$0xff]
        %v2104 = vld [vmem:[%s2081 + $0xb0] sm:$0xff]
        %v2105 = vld [vmem:[%s2081 + $0xb8] sm:$0xff]
        %v2106 = vld [vmem:[%s2081 + $0xc0] sm:$0xff]
        %v2107 = vld [vmem:[%s2081 + $0xc8] sm:$0xff]
        %v2108 = vld [vmem:[%s2081 + $0xd0] sm:$0xff]
        %v2109 = vld [vmem:[%s2081 + $0xd8] sm:$0xff]
        %v2110 = vld [vmem:[%s2081 + $0xe0] sm:$0xff]
        %v2111 = vld [vmem:[%s2081 + $0xe8] sm:$0xff]
        %v2112 = vld [vmem:[%s2081 + $0xf0] sm:$0xff]
        %v2113 = vld [vmem:[%s2081 + $0xf8] sm:$0xff]
        %v2114 = vld [vmem:[%s2081 + $0x100] sm:$0xff]
        %v2115 = vld [vmem:[%s2081 + $0x108] sm:$0xff]
        %v2116 = vld [vmem:[%s2081 + $0x110] sm:$0xff]
        %v2117 = vld [vmem:[%s2081 + $0x118] sm:$0xff]
        %v2118 = vld [vmem:[%s2081 + $0x120] sm:$0xff]
        %v2119 = vld [vmem:[%s2081 + $0x128] sm:$0xff]
        %v2120 = vld [vmem:[%s2081 + $0x130] sm:$0xff]
        %v2121 = vld [vmem:[%s2081 + $0x138] sm:$0xff]
        %v2122 = vld [vmem:[%s2081 + $0x140] sm:$0xff]
        %v2123 = vld [vmem:[%s2081 + $0x148] sm:$0xff]
        %v2124 = vld [vmem:[%s2081 + $0x150] sm:$0xff]
        %v2125 = vld [vmem:[%s2081 + $0x158] sm:$0xff]
        %v2126 = vld [vmem:[%s2081 + $0x160] sm:$0xff]
        %v2127 = vld [vmem:[%s2081 + $0x168] sm:$0xff]
        %v2128 = vld [vmem:[%s2081 + $0x170] sm:$0xff]
        %v2129 = vld [vmem:[%s2081 + $0x178] sm:$0xff]
        %v2130 = vld [vmem:[%s2081 + $0x180] sm:$0xff]
        %v2131 = vld [vmem:[%s2081 + $0x188] sm:$0xff]
        %v2132 = vld [vmem:[%s2081 + $0x190] sm:$0xff]
        %v2133 = vld [vmem:[%s2081 + $0x198] sm:$0xff]
        %v2134 = vld [vmem:[%s2081 + $0x1a0] sm:$0xff]
        %v2135 = vld [vmem:[%s2081 + $0x1a8] sm:$0xff]
        %v2136 = vld [vmem:[%s2081 + $0x1b0] sm:$0xff]
        %v2137 = vld [vmem:[%s2081 + $0x1b8] sm:$0xff]
        %v2138 = vld [vmem:[%s2081 + $0x1c0] sm:$0xff]
        %v2139 = vld [vmem:[%s2081 + $0x1c8] sm:$0xff]
        %v2140 = vld [vmem:[%s2081 + $0x1d0] sm:$0xff]
        %v2141 = vld [vmem:[%s2081 + $0x1d8] sm:$0xff]
        %v2142 = vld [vmem:[%s2081 + $0x1e0] sm:$0xff]
        %v2143 = vld [vmem:[%s2081 + $0x1e8] sm:$0xff]
        %v2144 = vld [vmem:[%s2081 + $0x1f0] sm:$0xff]
        %v2145 = vld [vmem:[%s2081 + $0x1f8] sm:$0xff]
        %2146 = vmatprep.subr.mxu0 %v2083
        %2147 = vmatpush1.msra.mxu0 %v2082
        %2148 = vmatprep.subr.mxu0 %v2085
        %2149 = vmatpush1.msra.mxu0 %v2084
        %2150 = vmatprep.subr.mxu0 %v2087
        %2151 = vmatpush1.msra.mxu0 %v2086
        %2152 = vmatprep.subr.mxu0 %v2089
        %2153 = vmatpush1.msra.mxu0 %v2088
        %2154 = vmatprep.subr.mxu0 %v2091
        %2155 = vmatpush1.msra.mxu0 %v2090
        %2156 = vmatprep.subr.mxu0 %v2093
        %2157 = vmatpush1.msra.mxu0 %v2092
        %2158 = vmatprep.subr.mxu0 %v2095
        %2159 = vmatpush1.msra.mxu0 %v2094
        %2160 = vmatprep.subr.mxu0 %v2097
        %2161 = vmatpush1.msra.mxu0 %v2096
        %2162 = vmatprep.subr.mxu0 %v2099
        %2163 = vmatpush1.msra.mxu0 %v2098
        %2164 = vmatprep.subr.mxu0 %v2101
        %2165 = vmatpush1.msra.mxu0 %v2100
        %2166 = vmatprep.subr.mxu0 %v2103
        %2167 = vmatpush1.msra.mxu0 %v2102
        %2168 = vmatprep.subr.mxu0 %v2105
        %2169 = vmatpush1.msra.mxu0 %v2104
        %2170 = vmatprep.subr.mxu0 %v2107
        %2171 = vmatpush1.msra.mxu0 %v2106
        %2172 = vmatprep.subr.mxu0 %v2109
        %2173 = vmatpush1.msra.mxu0 %v2108
        %2174 = vmatprep.subr.mxu0 %v2111
        %2175 = vmatpush1.msra.mxu0 %v2110
        %2176 = vmatprep.subr.mxu0 %v2113
        %2177 = vmatpush1.msra.mxu0 %v2112
        %2178 = vmatprep.subr.mxu0 %v2115
        %2179 = vmatpush1.msra.mxu0 %v2114
        %2180 = vmatprep.subr.mxu0 %v2117
        %2181 = vmatpush1.msra.mxu0 %v2116
        %2182 = vmatprep.subr.mxu0 %v2119
        %2183 = vmatpush1.msra.mxu0 %v2118
        %2184 = vmatprep.subr.mxu0 %v2121
        %2185 = vmatpush1.msra.mxu0 %v2120
        %2186 = vmatprep.subr.mxu0 %v2123
        %2187 = vmatpush1.msra.mxu0 %v2122
        %2188 = vmatprep.subr.mxu0 %v2125
        %2189 = vmatpush1.msra.mxu0 %v2124
        %2190 = vmatprep.subr.mxu0 %v2127
        %2191 = vmatpush1.msra.mxu0 %v2126
        %2192 = vmatprep.subr.mxu0 %v2129
        %2193 = vmatpush1.msra.mxu0 %v2128
        %2194 = vmatprep.subr.mxu0 %v2131
        %2195 = vmatpush1.msra.mxu0 %v2130
        %2196 = vmatprep.subr.mxu0 %v2133
        %2197 = vmatpush1.msra.mxu0 %v2132
        %2198 = vmatprep.subr.mxu0 %v2135
        %2199 = vmatpush1.msra.mxu0 %v2134
        %2200 = vmatprep.subr.mxu0 %v2137
        %2201 = vmatpush1.msra.mxu0 %v2136
        %2202 = vmatprep.subr.mxu0 %v2139
        %2203 = vmatpush1.msra.mxu0 %v2138
        %2204 = vmatprep.subr.mxu0 %v2141
        %2205 = vmatpush1.msra.mxu0 %v2140
        %2206 = vmatprep.subr.mxu0 %v2143
        %2207 = vmatpush1.msra.mxu0 %v2142
        %2208 = vmatprep.subr.mxu0 %v2145
        %2209 = vmatpush1.msra.mxu0 %v2144
        %2210 = vmatprep.mubr.f32.mxu0 %v387
        %2211 = vmatmul.mubr.f32.gmra.mrb[0].mxu0 %v321
        %v2212 = vpop.f32.mrb[0].mxu0
        %v2213 = vadd.f32 0.0, %v2212
        %v2214 = vpop.f32.mrb[0].mxu0
        %v2215 = vadd.f32 0.0, %v2214
        %2216 = vdwg.mxu0
        %s2217 = scalar_lea.vmem %s2, 64
        %v2218 = vld [vmem:[%s2217] sm:$0xff]
        %v2220 = vsel %vm599, %v2218, 0
        %v2223 = vsel %vm603, %v2213, 0
        %v2226 = vsel %vm603, %v2215, 0
        %2228 = vmatprep.subr.mxu0 %v2226
        %2229 = vmatpush1.msra.mxu0 %v2223
        %2230 = vmatprep.subr.mxu0 0.0
        %2231 = vmatpush1.msra.mxu0 0.0
        %2232 = vmatprep.subr.mxu0 0.0
        %2233 = vmatpush1.msra.mxu0 0.0
        %2234 = vmatprep.subr.mxu0 0.0
        %2235 = vmatpush1.msra.mxu0 0.0
        %2236 = vmatprep.subr.mxu0 0.0
        %2237 = vmatpush1.msra.mxu0 0.0
        %2238 = vmatprep.subr.mxu0 0.0
        %2239 = vmatpush1.msra.mxu0 0.0
        %2240 = vmatprep.subr.mxu0 0.0
        %2241 = vmatpush1.msra.mxu0 0.0
        %2242 = vmatprep.subr.mxu0 0.0
        %2243 = vmatpush1.msra.mxu0 0.0
        %2244 = vmatprep.subr.mxu0 0.0
        %2245 = vmatpush1.msra.mxu0 0.0
        %2246 = vmatprep.subr.mxu0 0.0
        %2247 = vmatpush1.msra.mxu0 0.0
        %2248 = vmatprep.subr.mxu0 0.0
        %2249 = vmatpush1.msra.mxu0 0.0
        %2250 = vmatprep.subr.mxu0 0.0
        %2251 = vmatpush1.msra.mxu0 0.0
        %2252 = vmatprep.subr.mxu0 0.0
        %2253 = vmatpush1.msra.mxu0 0.0
        %2254 = vmatprep.subr.mxu0 0.0
        %2255 = vmatpush1.msra.mxu0 0.0
        %2256 = vmatprep.subr.mxu0 0.0
        %2257 = vmatpush1.msra.mxu0 0.0
        %2258 = vmatprep.subr.mxu0 0.0
        %2259 = vmatpush1.msra.mxu0 0.0
        %2260 = vmatprep.subr.mxu0 0.0
        %2261 = vmatpush1.msra.mxu0 0.0
        %2262 = vmatprep.subr.mxu0 0.0
        %2263 = vmatpush1.msra.mxu0 0.0
        %2264 = vmatprep.subr.mxu0 0.0
        %2265 = vmatpush1.msra.mxu0 0.0
        %2266 = vmatprep.subr.mxu0 0.0
        %2267 = vmatpush1.msra.mxu0 0.0
        %2268 = vmatprep.subr.mxu0 0.0
        %2269 = vmatpush1.msra.mxu0 0.0
        %2270 = vmatprep.subr.mxu0 0.0
        %2271 = vmatpush1.msra.mxu0 0.0
        %2272 = vmatprep.subr.mxu0 0.0
        %2273 = vmatpush1.msra.mxu0 0.0
        %2274 = vmatprep.subr.mxu0 0.0
        %2275 = vmatpush1.msra.mxu0 0.0
        %2276 = vmatprep.subr.mxu0 0.0
        %2277 = vmatpush1.msra.mxu0 0.0
        %2278 = vmatprep.subr.mxu0 0.0
        %2279 = vmatpush1.msra.mxu0 0.0
        %2280 = vmatprep.subr.mxu0 0.0
        %2281 = vmatpush1.msra.mxu0 0.0
        %2282 = vmatprep.subr.mxu0 0.0
        %2283 = vmatpush1.msra.mxu0 0.0
        %2284 = vmatprep.subr.mxu0 0.0
        %2285 = vmatpush1.msra.mxu0 0.0
        %2286 = vmatprep.subr.mxu0 0.0
        %2287 = vmatpush1.msra.mxu0 0.0
        %2288 = vmatprep.subr.mxu0 0.0
        %2289 = vmatpush1.msra.mxu0 0.0
        %2290 = vmatprep.subr.mxu0 0.0
        %2291 = vmatpush1.msra.mxu0 0.0
        %2292 = vmatprep.mubr.f32.mxu0 0.0
        %2293 = vmatmul.mubr.f32.gmra.mrb[0].mxu0 %v2220
        %v2294 = vpop.f32.mrb[0].mxu0
        %v2295 = vadd.f32 0.0, %v2294
        %v2296 = vpop.f32.mrb[0].mxu0
        %v2297 = vadd.f32 0.0, %v2296
        %2298 = vdwg.mxu0
        %v2299 = vadd.f32 %v2079, %v2295
        %v2300 = vadd.f32 %v2080, %v2297
        %v2301 = vld [vmem:[%s3] sm:$0xff]
        %2303 = vset.pattern.permute.xlu0 0
        %2304 = vperm.xlu0 %2303, %v2301
        %v2305 = vpop.permute.xlu0 %2304
        %v2307 = vadd.f32 %v2299, %v2305
        %v2308 = vadd.f32 %v2300, %v2305
        %v2309 = vmax.f32 %v2307, 0.0
        %v2310 = vmax.f32 %v2308, 0.0
        %v2311 = vld [vmem:[%s4] sm:$0xff]
        %v2312 = vld [vmem:[%s4 + $0x8] sm:$0xff]
        %v2313 = vld [vmem:[%s4 + $0x10] sm:$0xff]
        %v2314 = vld [vmem:[%s4 + $0x18] sm:$0xff]
        %v2315 = vld [vmem:[%s4 + $0x20] sm:$0xff]
        %v2316 = vld [vmem:[%s4 + $0x28] sm:$0xff]
        %v2317 = vld [vmem:[%s4 + $0x30] sm:$0xff]
        %v2318 = vld [vmem:[%s4 + $0x38] sm:$0xff]
        %v2319 = vld [vmem:[%s4 + $0x40] sm:$0xff]
        %v2320 = vld [vmem:[%s4 + $0x48] sm:$0xff]
        %v2321 = vld [vmem:[%s4 + $0x50] sm:$0xff]
        %v2322 = vld [vmem:[%s4 + $0x58] sm:$0xff]
        %v2323 = vld [vmem:[%s4 + $0x60] sm:$0xff]
        %v2324 = vld [vmem:[%s4 + $0x68] sm:$0xff]
        %v2325 = vld [vmem:[%s4 + $0x70] sm:$0xff]
        %v2326 = vld [vmem:[%s4 + $0x78] sm:$0xff]
        %v2327 = vld [vmem:[%s4 + $0x80] sm:$0xff]
        %v2328 = vld [vmem:[%s4 + $0x88] sm:$0xff]
        %v2329 = vld [vmem:[%s4 + $0x90] sm:$0xff]
        %v2330 = vld [vmem:[%s4 + $0x98] sm:$0xff]
        %v2331 = vld [vmem:[%s4 + $0xa0] sm:$0xff]
        %v2332 = vld [vmem:[%s4 + $0xa8] sm:$0xff]
        %v2333 = vld [vmem:[%s4 + $0xb0] sm:$0xff]
        %v2334 = vld [vmem:[%s4 + $0xb8] sm:$0xff]
        %v2335 = vld [vmem:[%s4 + $0xc0] sm:$0xff]
        %v2336 = vld [vmem:[%s4 + $0xc8] sm:$0xff]
        %v2337 = vld [vmem:[%s4 + $0xd0] sm:$0xff]
        %v2338 = vld [vmem:[%s4 + $0xd8] sm:$0xff]
        %v2339 = vld [vmem:[%s4 + $0xe0] sm:$0xff]
        %v2340 = vld [vmem:[%s4 + $0xe8] sm:$0xff]
        %v2341 = vld [vmem:[%s4 + $0xf0] sm:$0xff]
        %v2342 = vld [vmem:[%s4 + $0xf8] sm:$0xff]
        %2343 = vmatprep.subr.mxu0 0.0
        %2344 = vmatpush1.msra.mxu0 %v2311
        %2345 = vmatprep.subr.mxu0 0.0
        %2346 = vmatpush1.msra.mxu0 %v2312
        %2347 = vmatprep.subr.mxu0 0.0
        %2348 = vmatpush1.msra.mxu0 %v2313
        %2349 = vmatprep.subr.mxu0 0.0
        %2350 = vmatpush1.msra.mxu0 %v2314
        %2351 = vmatprep.subr.mxu0 0.0
        %2352 = vmatpush1.msra.mxu0 %v2315
        %2353 = vmatprep.subr.mxu0 0.0
        %2354 = vmatpush1.msra.mxu0 %v2316
        %2355 = vmatprep.subr.mxu0 0.0
        %2356 = vmatpush1.msra.mxu0 %v2317
        %2357 = vmatprep.subr.mxu0 0.0
        %2358 = vmatpush1.msra.mxu0 %v2318
        %2359 = vmatprep.subr.mxu0 0.0
        %2360 = vmatpush1.msra.mxu0 %v2319
        %2361 = vmatprep.subr.mxu0 0.0
        %2362 = vmatpush1.msra.mxu0 %v2320
        %2363 = vmatprep.subr.mxu0 0.0
        %2364 = vmatpush1.msra.mxu0 %v2321
        %2365 = vmatprep.subr.mxu0 0.0
        %2366 = vmatpush1.msra.mxu0 %v2322
        %2367 = vmatprep.subr.mxu0 0.0
        %2368 = vmatpush1.msra.mxu0 %v2323
        %2369 = vmatprep.subr.mxu0 0.0
        %2370 = vmatpush1.msra.mxu0 %v2324
        %2371 = vmatprep.subr.mxu0 0.0
        %2372 = vmatpush1.msra.mxu0 %v2325
        %2373 = vmatprep.subr.mxu0 0.0
        %2374 = vmatpush1.msra.mxu0 %v2326
        %2375 = vmatprep.subr.mxu0 0.0
        %2376 = vmatpush1.msra.mxu0 %v2327
        %2377 = vmatprep.subr.mxu0 0.0
        %2378 = vmatpush1.msra.mxu0 %v2328
        %2379 = vmatprep.subr.mxu0 0.0
        %2380 = vmatpush1.msra.mxu0 %v2329
        %2381 = vmatprep.subr.mxu0 0.0
        %2382 = vmatpush1.msra.mxu0 %v2330
        %2383 = vmatprep.subr.mxu0 0.0
        %2384 = vmatpush1.msra.mxu0 %v2331
        %2385 = vmatprep.subr.mxu0 0.0
        %2386 = vmatpush1.msra.mxu0 %v2332
        %2387 = vmatprep.subr.mxu0 0.0
        %2388 = vmatpush1.msra.mxu0 %v2333
        %2389 = vmatprep.subr.mxu0 0.0
        %2390 = vmatpush1.msra.mxu0 %v2334
        %2391 = vmatprep.subr.mxu0 0.0
        %2392 = vmatpush1.msra.mxu0 %v2335
        %2393 = vmatprep.subr.mxu0 0.0
        %2394 = vmatpush1.msra.mxu0 %v2336
        %2395 = vmatprep.subr.mxu0 0.0
        %2396 = vmatpush1.msra.mxu0 %v2337
        %2397 = vmatprep.subr.mxu0 0.0
        %2398 = vmatpush1.msra.mxu0 %v2338
        %2399 = vmatprep.subr.mxu0 0.0
        %2400 = vmatpush1.msra.mxu0 %v2339
        %2401 = vmatprep.subr.mxu0 0.0
        %2402 = vmatpush1.msra.mxu0 %v2340
        %2403 = vmatprep.subr.mxu0 0.0
        %2404 = vmatpush1.msra.mxu0 %v2341
        %2405 = vmatprep.subr.mxu0 0.0
        %2406 = vmatpush1.msra.mxu0 %v2342
        %2407 = vmatprep.mubr.f32.mxu0 %v2310
        %2408 = vmatmul.mubr.f32.gmra.mrb[0].mxu0 %v2309
        %v2409 = vpop.f32.mrb[0].mxu0
        %v2410 = vadd.f32 0.0, %v2409
        %v2411 = vpop.f32.mrb[0].mxu0
        %2412 = vdwg.mxu0
        %s2413 = scalar_lea.vmem %s4, 256
        %v2414 = vld [vmem:[%s2413] sm:$0xff]
        %v2415 = vld [vmem:[%s2413 + $0x8] sm:$0xff]
        %v2416 = vld [vmem:[%s2413 + $0x10] sm:$0xff]
        %v2417 = vld [vmem:[%s2413 + $0x18] sm:$0xff]
        %v2418 = vld [vmem:[%s2413 + $0x20] sm:$0xff]
        %v2419 = vld [vmem:[%s2413 + $0x28] sm:$0xff]
        %v2420 = vld [vmem:[%s2413 + $0x30] sm:$0xff]
        %v2421 = vld [vmem:[%s2413 + $0x38] sm:$0xff]
        %v2422 = vld [vmem:[%s2413 + $0x40] sm:$0xff]
        %v2423 = vld [vmem:[%s2413 + $0x48] sm:$0xff]
        %v2424 = vld [vmem:[%s2413 + $0x50] sm:$0xff]
        %v2425 = vld [vmem:[%s2413 + $0x58] sm:$0xff]
        %v2426 = vld [vmem:[%s2413 + $0x60] sm:$0xff]
        %v2427 = vld [vmem:[%s2413 + $0x68] sm:$0xff]
        %v2428 = vld [vmem:[%s2413 + $0x70] sm:$0xff]
        %v2429 = vld [vmem:[%s2413 + $0x78] sm:$0xff]
        %v2430 = vld [vmem:[%s2413 + $0x80] sm:$0xff]
        %v2431 = vld [vmem:[%s2413 + $0x88] sm:$0xff]
        %v2432 = vld [vmem:[%s2413 + $0x90] sm:$0xff]
        %v2433 = vld [vmem:[%s2413 + $0x98] sm:$0xff]
        %v2434 = vld [vmem:[%s2413 + $0xa0] sm:$0xff]
        %v2435 = vld [vmem:[%s2413 + $0xa8] sm:$0xff]
        %v2436 = vld [vmem:[%s2413 + $0xb0] sm:$0xff]
        %v2437 = vld [vmem:[%s2413 + $0xb8] sm:$0xff]
        %v2438 = vld [vmem:[%s2413 + $0xc0] sm:$0xff]
        %v2439 = vld [vmem:[%s2413 + $0xc8] sm:$0xff]
        %v2440 = vld [vmem:[%s2413 + $0xd0] sm:$0xff]
        %v2441 = vld [vmem:[%s2413 + $0xd8] sm:$0xff]
        %v2442 = vld [vmem:[%s2413 + $0xe0] sm:$0xff]
        %v2443 = vld [vmem:[%s2413 + $0xe8] sm:$0xff]
        %v2444 = vld [vmem:[%s2413 + $0xf0] sm:$0xff]
        %v2445 = vld [vmem:[%s2413 + $0xf8] sm:$0xff]
        %2446 = vmatprep.subr.mxu0 0.0
        %2447 = vmatpush1.msra.mxu0 %v2414
        %2448 = vmatprep.subr.mxu0 0.0
        %2449 = vmatpush1.msra.mxu0 %v2415
        %2450 = vmatprep.subr.mxu0 0.0
        %2451 = vmatpush1.msra.mxu0 %v2416
        %2452 = vmatprep.subr.mxu0 0.0
        %2453 = vmatpush1.msra.mxu0 %v2417
        %2454 = vmatprep.subr.mxu0 0.0
        %2455 = vmatpush1.msra.mxu0 %v2418
        %2456 = vmatprep.subr.mxu0 0.0
        %2457 = vmatpush1.msra.mxu0 %v2419
        %2458 = vmatprep.subr.mxu0 0.0
        %2459 = vmatpush1.msra.mxu0 %v2420
        %2460 = vmatprep.subr.mxu0 0.0
        %2461 = vmatpush1.msra.mxu0 %v2421
        %2462 = vmatprep.subr.mxu0 0.0
        %2463 = vmatpush1.msra.mxu0 %v2422
        %2464 = vmatprep.subr.mxu0 0.0
        %2465 = vmatpush1.msra.mxu0 %v2423
        %2466 = vmatprep.subr.mxu0 0.0
        %2467 = vmatpush1.msra.mxu0 %v2424
        %2468 = vmatprep.subr.mxu0 0.0
        %2469 = vmatpush1.msra.mxu0 %v2425
        %2470 = vmatprep.subr.mxu0 0.0
        %2471 = vmatpush1.msra.mxu0 %v2426
        %2472 = vmatprep.subr.mxu0 0.0
        %2473 = vmatpush1.msra.mxu0 %v2427
        %2474 = vmatprep.subr.mxu0 0.0
        %2475 = vmatpush1.msra.mxu0 %v2428
        %2476 = vmatprep.subr.mxu0 0.0
        %2477 = vmatpush1.msra.mxu0 %v2429
        %2478 = vmatprep.subr.mxu0 0.0
        %2479 = vmatpush1.msra.mxu0 %v2430
        %2480 = vmatprep.subr.mxu0 0.0
        %2481 = vmatpush1.msra.mxu0 %v2431
        %2482 = vmatprep.subr.mxu0 0.0
        %2483 = vmatpush1.msra.mxu0 %v2432
        %2484 = vmatprep.subr.mxu0 0.0
        %2485 = vmatpush1.msra.mxu0 %v2433
        %2486 = vmatprep.subr.mxu0 0.0
        %2487 = vmatpush1.msra.mxu0 %v2434
        %2488 = vmatprep.subr.mxu0 0.0
        %2489 = vmatpush1.msra.mxu0 %v2435
        %2490 = vmatprep.subr.mxu0 0.0
        %2491 = vmatpush1.msra.mxu0 %v2436
        %2492 = vmatprep.subr.mxu0 0.0
        %2493 = vmatpush1.msra.mxu0 %v2437
        %2494 = vmatprep.subr.mxu0 0.0
        %2495 = vmatpush1.msra.mxu0 %v2438
        %2496 = vmatprep.subr.mxu0 0.0
        %2497 = vmatpush1.msra.mxu0 %v2439
        %2498 = vmatprep.subr.mxu0 0.0
        %2499 = vmatpush1.msra.mxu0 %v2440
        %2500 = vmatprep.subr.mxu0 0.0
        %2501 = vmatpush1.msra.mxu0 %v2441
        %2502 = vmatprep.subr.mxu0 0.0
        %2503 = vmatpush1.msra.mxu0 %v2442
        %2504 = vmatprep.subr.mxu0 0.0
        %2505 = vmatpush1.msra.mxu0 %v2443
        %2506 = vmatprep.subr.mxu0 0.0
        %2507 = vmatpush1.msra.mxu0 %v2444
        %2508 = vmatprep.subr.mxu0 0.0
        %2509 = vmatpush1.msra.mxu0 %v2445
        %2510 = vmatprep.mubr.f32.mxu0 %v2310
        %2511 = vmatmul.mubr.f32.gmra.mrb[0].mxu0 %v2309
        %v2512 = vpop.f32.mrb[0].mxu0
        %v2513 = vadd.f32 0.0, %v2512
        %v2514 = vpop.f32.mrb[0].mxu0
        %2515 = vdwg.mxu0
        %v2516 = vmax.f32 %v2410, %v2513
        %s2517 = scalar_lea.vmem %s4, 512
        %v2518 = vld [vmem:[%s2517] sm:$0xff]
        %v2519 = vld [vmem:[%s2517 + $0x8] sm:$0xff]
        %v2520 = vld [vmem:[%s2517 + $0x10] sm:$0xff]
        %v2521 = vld [vmem:[%s2517 + $0x18] sm:$0xff]
        %v2522 = vld [vmem:[%s2517 + $0x20] sm:$0xff]
        %v2523 = vld [vmem:[%s2517 + $0x28] sm:$0xff]
        %v2524 = vld [vmem:[%s2517 + $0x30] sm:$0xff]
        %v2525 = vld [vmem:[%s2517 + $0x38] sm:$0xff]
        %v2526 = vld [vmem:[%s2517 + $0x40] sm:$0xff]
        %v2527 = vld [vmem:[%s2517 + $0x48] sm:$0xff]
        %v2528 = vld [vmem:[%s2517 + $0x50] sm:$0xff]
        %v2529 = vld [vmem:[%s2517 + $0x58] sm:$0xff]
        %v2530 = vld [vmem:[%s2517 + $0x60] sm:$0xff]
        %v2531 = vld [vmem:[%s2517 + $0x68] sm:$0xff]
        %v2532 = vld [vmem:[%s2517 + $0x70] sm:$0xff]
        %v2533 = vld [vmem:[%s2517 + $0x78] sm:$0xff]
        %v2534 = vld [vmem:[%s2517 + $0x80] sm:$0xff]
        %v2535 = vld [vmem:[%s2517 + $0x88] sm:$0xff]
        %v2536 = vld [vmem:[%s2517 + $0x90] sm:$0xff]
        %v2537 = vld [vmem:[%s2517 + $0x98] sm:$0xff]
        %v2538 = vld [vmem:[%s2517 + $0xa0] sm:$0xff]
        %v2539 = vld [vmem:[%s2517 + $0xa8] sm:$0xff]
        %v2540 = vld [vmem:[%s2517 + $0xb0] sm:$0xff]
        %v2541 = vld [vmem:[%s2517 + $0xb8] sm:$0xff]
        %v2542 = vld [vmem:[%s2517 + $0xc0] sm:$0xff]
        %v2543 = vld [vmem:[%s2517 + $0xc8] sm:$0xff]
        %v2544 = vld [vmem:[%s2517 + $0xd0] sm:$0xff]
        %v2545 = vld [vmem:[%s2517 + $0xd8] sm:$0xff]
        %v2546 = vld [vmem:[%s2517 + $0xe0] sm:$0xff]
        %v2547 = vld [vmem:[%s2517 + $0xe8] sm:$0xff]
        %v2548 = vld [vmem:[%s2517 + $0xf0] sm:$0xff]
        %v2549 = vld [vmem:[%s2517 + $0xf8] sm:$0xff]
        %2550 = vmatprep.subr.mxu0 0.0
        %2551 = vmatpush1.msra.mxu0 %v2518
        %2552 = vmatprep.subr.mxu0 0.0
        %2553 = vmatpush1.msra.mxu0 %v2519
        %2554 = vmatprep.subr.mxu0 0.0
        %2555 = vmatpush1.msra.mxu0 %v2520
        %2556 = vmatprep.subr.mxu0 0.0
        %2557 = vmatpush1.msra.mxu0 %v2521
        %2558 = vmatprep.subr.mxu0 0.0
        %2559 = vmatpush1.msra.mxu0 %v2522
        %2560 = vmatprep.subr.mxu0 0.0
        %2561 = vmatpush1.msra.mxu0 %v2523
        %2562 = vmatprep.subr.mxu0 0.0
        %2563 = vmatpush1.msra.mxu0 %v2524
        %2564 = vmatprep.subr.mxu0 0.0
        %2565 = vmatpush1.msra.mxu0 %v2525
        %2566 = vmatprep.subr.mxu0 0.0
        %2567 = vmatpush1.msra.mxu0 %v2526
        %2568 = vmatprep.subr.mxu0 0.0
        %2569 = vmatpush1.msra.mxu0 %v2527
        %2570 = vmatprep.subr.mxu0 0.0
        %2571 = vmatpush1.msra.mxu0 %v2528
        %2572 = vmatprep.subr.mxu0 0.0
        %2573 = vmatpush1.msra.mxu0 %v2529
        %2574 = vmatprep.subr.mxu0 0.0
        %2575 = vmatpush1.msra.mxu0 %v2530
        %2576 = vmatprep.subr.mxu0 0.0
        %2577 = vmatpush1.msra.mxu0 %v2531
        %2578 = vmatprep.subr.mxu0 0.0
        %2579 = vmatpush1.msra.mxu0 %v2532
        %2580 = vmatprep.subr.mxu0 0.0
        %2581 = vmatpush1.msra.mxu0 %v2533
        %2582 = vmatprep.subr.mxu0 0.0
        %2583 = vmatpush1.msra.mxu0 %v2534
        %2584 = vmatprep.subr.mxu0 0.0
        %2585 = vmatpush1.msra.mxu0 %v2535
        %2586 = vmatprep.subr.mxu0 0.0
        %2587 = vmatpush1.msra.mxu0 %v2536
        %2588 = vmatprep.subr.mxu0 0.0
        %2589 = vmatpush1.msra.mxu0 %v2537
        %2590 = vmatprep.subr.mxu0 0.0
        %2591 = vmatpush1.msra.mxu0 %v2538
        %2592 = vmatprep.subr.mxu0 0.0
        %2593 = vmatpush1.msra.mxu0 %v2539
        %2594 = vmatprep.subr.mxu0 0.0
        %2595 = vmatpush1.msra.mxu0 %v2540
        %2596 = vmatprep.subr.mxu0 0.0
        %2597 = vmatpush1.msra.mxu0 %v2541
        %2598 = vmatprep.subr.mxu0 0.0
        %2599 = vmatpush1.msra.mxu0 %v2542
        %2600 = vmatprep.subr.mxu0 0.0
        %2601 = vmatpush1.msra.mxu0 %v2543
        %2602 = vmatprep.subr.mxu0 0.0
        %2603 = vmatpush1.msra.mxu0 %v2544
        %2604 = vmatprep.subr.mxu0 0.0
        %2605 = vmatpush1.msra.mxu0 %v2545
        %2606 = vmatprep.subr.mxu0 0.0
        %2607 = vmatpush1.msra.mxu0 %v2546
        %2608 = vmatprep.subr.mxu0 0.0
        %2609 = vmatpush1.msra.mxu0 %v2547
        %2610 = vmatprep.subr.mxu0 0.0
        %2611 = vmatpush1.msra.mxu0 %v2548
        %2612 = vmatprep.subr.mxu0 0.0
        %2613 = vmatpush1.msra.mxu0 %v2549
        %2614 = vmatprep.mubr.f32.mxu0 %v2310
        %2615 = vmatmul.mubr.f32.gmra.mrb[0].mxu0 %v2309
        %v2616 = vpop.f32.mrb[0].mxu0
        %v2617 = vadd.f32 0.0, %v2616
        %v2618 = vpop.f32.mrb[0].mxu0
        %2619 = vdwg.mxu0
        %v2620 = vmax.f32 %v2516, %v2617
        %s2621 = scalar_lea.vmem %s4, 768
        %v2622 = vld [vmem:[%s2621] sm:$0xff]
        %v2623 = vld [vmem:[%s2621 + $0x8] sm:$0xff]
        %v2624 = vld [vmem:[%s2621 + $0x10] sm:$0xff]
        %v2625 = vld [vmem:[%s2621 + $0x18] sm:$0xff]
        %v2626 = vld [vmem:[%s2621 + $0x20] sm:$0xff]
        %v2627 = vld [vmem:[%s2621 + $0x28] sm:$0xff]
        %v2628 = vld [vmem:[%s2621 + $0x30] sm:$0xff]
        %v2629 = vld [vmem:[%s2621 + $0x38] sm:$0xff]
        %v2630 = vld [vmem:[%s2621 + $0x40] sm:$0xff]
        %v2631 = vld [vmem:[%s2621 + $0x48] sm:$0xff]
        %v2632 = vld [vmem:[%s2621 + $0x50] sm:$0xff]
        %v2633 = vld [vmem:[%s2621 + $0x58] sm:$0xff]
        %v2634 = vld [vmem:[%s2621 + $0x60] sm:$0xff]
        %v2635 = vld [vmem:[%s2621 + $0x68] sm:$0xff]
        %v2636 = vld [vmem:[%s2621 + $0x70] sm:$0xff]
        %v2637 = vld [vmem:[%s2621 + $0x78] sm:$0xff]
        %v2638 = vld [vmem:[%s2621 + $0x80] sm:$0xff]
        %v2639 = vld [vmem:[%s2621 + $0x88] sm:$0xff]
        %v2640 = vld [vmem:[%s2621 + $0x90] sm:$0xff]
        %v2641 = vld [vmem:[%s2621 + $0x98] sm:$0xff]
        %v2642 = vld [vmem:[%s2621 + $0xa0] sm:$0xff]
        %v2643 = vld [vmem:[%s2621 + $0xa8] sm:$0xff]
        %v2644 = vld [vmem:[%s2621 + $0xb0] sm:$0xff]
        %v2645 = vld [vmem:[%s2621 + $0xb8] sm:$0xff]
        %v2646 = vld [vmem:[%s2621 + $0xc0] sm:$0xff]
        %v2647 = vld [vmem:[%s2621 + $0xc8] sm:$0xff]
        %v2648 = vld [vmem:[%s2621 + $0xd0] sm:$0xff]
        %v2649 = vld [vmem:[%s2621 + $0xd8] sm:$0xff]
        %v2650 = vld [vmem:[%s2621 + $0xe0] sm:$0xff]
        %v2651 = vld [vmem:[%s2621 + $0xe8] sm:$0xff]
        %v2652 = vld [vmem:[%s2621 + $0xf0] sm:$0xff]
        %v2653 = vld [vmem:[%s2621 + $0xf8] sm:$0xff]
        %2654 = vmatprep.subr.mxu0 0.0
        %2655 = vmatpush1.msra.mxu0 %v2622
        %2656 = vmatprep.subr.mxu0 0.0
        %2657 = vmatpush1.msra.mxu0 %v2623
        %2658 = vmatprep.subr.mxu0 0.0
        %2659 = vmatpush1.msra.mxu0 %v2624
        %2660 = vmatprep.subr.mxu0 0.0
        %2661 = vmatpush1.msra.mxu0 %v2625
        %2662 = vmatprep.subr.mxu0 0.0
        %2663 = vmatpush1.msra.mxu0 %v2626
        %2664 = vmatprep.subr.mxu0 0.0
        %2665 = vmatpush1.msra.mxu0 %v2627
        %2666 = vmatprep.subr.mxu0 0.0
        %2667 = vmatpush1.msra.mxu0 %v2628
        %2668 = vmatprep.subr.mxu0 0.0
        %2669 = vmatpush1.msra.mxu0 %v2629
        %2670 = vmatprep.subr.mxu0 0.0
        %2671 = vmatpush1.msra.mxu0 %v2630
        %2672 = vmatprep.subr.mxu0 0.0
        %2673 = vmatpush1.msra.mxu0 %v2631
        %2674 = vmatprep.subr.mxu0 0.0
        %2675 = vmatpush1.msra.mxu0 %v2632
        %2676 = vmatprep.subr.mxu0 0.0
        %2677 = vmatpush1.msra.mxu0 %v2633
        %2678 = vmatprep.subr.mxu0 0.0
        %2679 = vmatpush1.msra.mxu0 %v2634
        %2680 = vmatprep.subr.mxu0 0.0
        %2681 = vmatpush1.msra.mxu0 %v2635
        %2682 = vmatprep.subr.mxu0 0.0
        %2683 = vmatpush1.msra.mxu0 %v2636
        %2684 = vmatprep.subr.mxu0 0.0
        %2685 = vmatpush1.msra.mxu0 %v2637
        %2686 = vmatprep.subr.mxu0 0.0
        %2687 = vmatpush1.msra.mxu0 %v2638
        %2688 = vmatprep.subr.mxu0 0.0
        %2689 = vmatpush1.msra.mxu0 %v2639
        %2690 = vmatprep.subr.mxu0 0.0
        %2691 = vmatpush1.msra.mxu0 %v2640
        %2692 = vmatprep.subr.mxu0 0.0
        %2693 = vmatpush1.msra.mxu0 %v2641
        %2694 = vmatprep.subr.mxu0 0.0
        %2695 = vmatpush1.msra.mxu0 %v2642
        %2696 = vmatprep.subr.mxu0 0.0
        %2697 = vmatpush1.msra.mxu0 %v2643
        %2698 = vmatprep.subr.mxu0 0.0
        %2699 = vmatpush1.msra.mxu0 %v2644
        %2700 = vmatprep.subr.mxu0 0.0
        %2701 = vmatpush1.msra.mxu0 %v2645
        %2702 = vmatprep.subr.mxu0 0.0
        %2703 = vmatpush1.msra.mxu0 %v2646
        %2704 = vmatprep.subr.mxu0 0.0
        %2705 = vmatpush1.msra.mxu0 %v2647
        %2706 = vmatprep.subr.mxu0 0.0
        %2707 = vmatpush1.msra.mxu0 %v2648
        %2708 = vmatprep.subr.mxu0 0.0
        %2709 = vmatpush1.msra.mxu0 %v2649
        %2710 = vmatprep.subr.mxu0 0.0
        %2711 = vmatpush1.msra.mxu0 %v2650
        %2712 = vmatprep.subr.mxu0 0.0
        %2713 = vmatpush1.msra.mxu0 %v2651
        %2714 = vmatprep.subr.mxu0 0.0
        %2715 = vmatpush1.msra.mxu0 %v2652
        %2716 = vmatprep.subr.mxu0 0.0
        %2717 = vmatpush1.msra.mxu0 %v2653
        %2718 = vmatprep.mubr.f32.mxu0 %v2310
        %2719 = vmatmul.mubr.f32.gmra.mrb[0].mxu0 %v2309
        %v2720 = vpop.f32.mrb[0].mxu0
        %v2721 = vadd.f32 0.0, %v2720
        %v2722 = vpop.f32.mrb[0].mxu0
        %2723 = vdwg.mxu0
        %v2724 = vmax.f32 %v2620, %v2721
        %v2725 = vld [vmem:[%s5] sm:$0xff]
        %v2726 = vld [vmem:[%s5 + $0x8] sm:$0xff]
        %v2727 = vld [vmem:[%s5 + $0x10] sm:$0xff]
        %v2728 = vld [vmem:[%s5 + $0x18] sm:$0xff]
        %v2729 = vld [vmem:[%s5 + $0x20] sm:$0xff]
        %v2730 = vld [vmem:[%s5 + $0x28] sm:$0xff]
        %v2731 = vld [vmem:[%s5 + $0x30] sm:$0xff]
        %v2732 = vld [vmem:[%s5 + $0x38] sm:$0xff]
        %v2733 = vld [vmem:[%s5 + $0x40] sm:$0xff]
        %v2734 = vld [vmem:[%s5 + $0x48] sm:$0xff]
        %v2735 = vld [vmem:[%s5 + $0x50] sm:$0xff]
        %v2736 = vld [vmem:[%s5 + $0x58] sm:$0xff]
        %v2737 = vld [vmem:[%s5 + $0x60] sm:$0xff]
        %v2738 = vld [vmem:[%s5 + $0x68] sm:$0xff]
        %v2739 = vld [vmem:[%s5 + $0x70] sm:$0xff]
        %v2740 = vld [vmem:[%s5 + $0x78] sm:$0xff]
        %v2741 = vld [vmem:[%s5 + $0x80] sm:$0xff]
        %v2742 = vld [vmem:[%s5 + $0x88] sm:$0xff]
        %v2743 = vld [vmem:[%s5 + $0x90] sm:$0xff]
        %v2744 = vld [vmem:[%s5 + $0x98] sm:$0xff]
        %v2745 = vld [vmem:[%s5 + $0xa0] sm:$0xff]
        %v2746 = vld [vmem:[%s5 + $0xa8] sm:$0xff]
        %v2747 = vld [vmem:[%s5 + $0xb0] sm:$0xff]
        %v2748 = vld [vmem:[%s5 + $0xb8] sm:$0xff]
        %v2749 = vld [vmem:[%s5 + $0xc0] sm:$0xff]
        %v2750 = vld [vmem:[%s5 + $0xc8] sm:$0xff]
        %v2751 = vld [vmem:[%s5 + $0xd0] sm:$0xff]
        %v2752 = vld [vmem:[%s5 + $0xd8] sm:$0xff]
        %v2753 = vld [vmem:[%s5 + $0xe0] sm:$0xff]
        %v2754 = vld [vmem:[%s5 + $0xe8] sm:$0xff]
        %v2755 = vld [vmem:[%s5 + $0xf0] sm:$0xff]
        %v2756 = vld [vmem:[%s5 + $0xf8] sm:$0xff]
        %v2757 = vld [vmem:[%s5 + $0x100] sm:$0xff]
        %v2758 = vld [vmem:[%s5 + $0x108] sm:$0xff]
        %v2759 = vld [vmem:[%s5 + $0x110] sm:$0xff]
        %v2760 = vld [vmem:[%s5 + $0x118] sm:$0xff]
        %v2761 = vld [vmem:[%s5 + $0x120] sm:$0xff]
        %v2762 = vld [vmem:[%s5 + $0x128] sm:$0xff]
        %v2763 = vld [vmem:[%s5 + $0x130] sm:$0xff]
        %v2764 = vld [vmem:[%s5 + $0x138] sm:$0xff]
        %v2765 = vld [vmem:[%s5 + $0x140] sm:$0xff]
        %v2766 = vld [vmem:[%s5 + $0x148] sm:$0xff]
        %v2767 = vld [vmem:[%s5 + $0x150] sm:$0xff]
        %v2768 = vld [vmem:[%s5 + $0x158] sm:$0xff]
        %v2769 = vld [vmem:[%s5 + $0x160] sm:$0xff]
        %v2770 = vld [vmem:[%s5 + $0x168] sm:$0xff]
        %v2771 = vld [vmem:[%s5 + $0x170] sm:$0xff]
        %v2772 = vld [vmem:[%s5 + $0x178] sm:$0xff]
        %v2773 = vld [vmem:[%s5 + $0x180] sm:$0xff]
        %v2774 = vld [vmem:[%s5 + $0x188] sm:$0xff]
        %v2775 = vld [vmem:[%s5 + $0x190] sm:$0xff]
        %v2776 = vld [vmem:[%s5 + $0x198] sm:$0xff]
        %v2777 = vld [vmem:[%s5 + $0x1a0] sm:$0xff]
        %v2778 = vld [vmem:[%s5 + $0x1a8] sm:$0xff]
        %v2779 = vld [vmem:[%s5 + $0x1b0] sm:$0xff]
        %v2780 = vld [vmem:[%s5 + $0x1b8] sm:$0xff]
        %v2781 = vld [vmem:[%s5 + $0x1c0] sm:$0xff]
        %v2782 = vld [vmem:[%s5 + $0x1c8] sm:$0xff]
        %v2783 = vld [vmem:[%s5 + $0x1d0] sm:$0xff]
        %v2784 = vld [vmem:[%s5 + $0x1d8] sm:$0xff]
        %v2785 = vld [vmem:[%s5 + $0x1e0] sm:$0xff]
        %v2786 = vld [vmem:[%s5 + $0x1e8] sm:$0xff]
        %v2787 = vld [vmem:[%s5 + $0x1f0] sm:$0xff]
        %v2788 = vld [vmem:[%s5 + $0x1f8] sm:$0xff]
        %v2789 = vld [vmem:[#allocation7] sm:$0x1]
        %vm2790 = vcmask 523264
        %v2792 = vsel %vm2790, %v2724, 0
        %2794 = vmatprep.subr.mxu0 0.0
        %2795 = vmatpush1.msra.mxu0 %v2725
        %2796 = vmatprep.subr.mxu0 0.0
        %2797 = vmatpush1.msra.mxu0 %v2726
        %2798 = vmatprep.subr.mxu0 0.0
        %2799 = vmatpush1.msra.mxu0 %v2727
        %2800 = vmatprep.subr.mxu0 0.0
        %2801 = vmatpush1.msra.mxu0 %v2728
        %2802 = vmatprep.subr.mxu0 0.0
        %2803 = vmatpush1.msra.mxu0 %v2729
        %2804 = vmatprep.subr.mxu0 0.0
        %2805 = vmatpush1.msra.mxu0 %v2730
        %2806 = vmatprep.subr.mxu0 0.0
        %2807 = vmatpush1.msra.mxu0 %v2731
        %2808 = vmatprep.subr.mxu0 0.0
        %2809 = vmatpush1.msra.mxu0 %v2732
        %2810 = vmatprep.subr.mxu0 0.0
        %2811 = vmatpush1.msra.mxu0 0.0
        %2812 = vmatprep.subr.mxu0 0.0
        %2813 = vmatpush1.msra.mxu0 0.0
        %2814 = vmatprep.subr.mxu0 0.0
        %2815 = vmatpush1.msra.mxu0 0.0
        %2816 = vmatprep.subr.mxu0 0.0
        %2817 = vmatpush1.msra.mxu0 0.0
        %2818 = vmatprep.subr.mxu0 0.0
        %2819 = vmatpush1.msra.mxu0 0.0
        %2820 = vmatprep.subr.mxu0 0.0
        %2821 = vmatpush1.msra.mxu0 0.0
        %2822 = vmatprep.subr.mxu0 0.0
        %2823 = vmatpush1.msra.mxu0 0.0
        %2824 = vmatprep.subr.mxu0 0.0
        %2825 = vmatpush1.msra.mxu0 0.0
        %2826 = vmatprep.subr.mxu0 0.0
        %2827 = vmatpush1.msra.mxu0 0.0
        %2828 = vmatprep.subr.mxu0 0.0
        %2829 = vmatpush1.msra.mxu0 0.0
        %2830 = vmatprep.subr.mxu0 0.0
        %2831 = vmatpush1.msra.mxu0 0.0
        %2832 = vmatprep.subr.mxu0 0.0
        %2833 = vmatpush1.msra.mxu0 0.0
        %2834 = vmatprep.subr.mxu0 0.0
        %2835 = vmatpush1.msra.mxu0 0.0
        %2836 = vmatprep.subr.mxu0 0.0
        %2837 = vmatpush1.msra.mxu0 0.0
        %2838 = vmatprep.subr.mxu0 0.0
        %2839 = vmatpush1.msra.mxu0 0.0
        %2840 = vmatprep.subr.mxu0 0.0
        %2841 = vmatpush1.msra.mxu0 0.0
        %2842 = vmatprep.subr.mxu0 0.0
        %2843 = vmatpush1.msra.mxu0 0.0
        %2844 = vmatprep.subr.mxu0 0.0
        %2845 = vmatpush1.msra.mxu0 0.0
        %2846 = vmatprep.subr.mxu0 0.0
        %2847 = vmatpush1.msra.mxu0 0.0
        %2848 = vmatprep.subr.mxu0 0.0
        %2849 = vmatpush1.msra.mxu0 0.0
        %2850 = vmatprep.subr.mxu0 0.0
        %2851 = vmatpush1.msra.mxu0 0.0
        %2852 = vmatprep.subr.mxu0 0.0
        %2853 = vmatpush1.msra.mxu0 0.0
        %2854 = vmatprep.subr.mxu0 0.0
        %2855 = vmatpush1.msra.mxu0 0.0
        %2856 = vmatprep.subr.mxu0 0.0
        %2857 = vmatpush1.msra.mxu0 0.0
        %2858 = vmatprep.mubr.f32.mxu0 0.0
        %2859 = vmatmul.mubr.f32.gmra.mrb[0].mxu0 %v2792
        %v2860 = vpop.f32.mrb[0].mxu0
        %v2861 = vadd.f32 0.0, %v2860
        %v2862 = vpop.f32.mrb[0].mxu0
        %2863 = vdwg.mxu0
        %v2864 = vadd.f32 %v2789, %v2861
        %v2865 = vrot.slane %v2724, 1
        %v2866 = vsel %vm2790, %v2865, 0
        %2868 = vmatprep.subr.mxu0 0.0
        %2869 = vmatpush1.msra.mxu0 %v2733
        %2870 = vmatprep.subr.mxu0 0.0
        %2871 = vmatpush1.msra.mxu0 %v2734
        %2872 = vmatprep.subr.mxu0 0.0
        %2873 = vmatpush1.msra.mxu0 %v2735
        %2874 = vmatprep.subr.mxu0 0.0
        %2875 = vmatpush1.msra.mxu0 %v2736
        %2876 = vmatprep.subr.mxu0 0.0
        %2877 = vmatpush1.msra.mxu0 %v2737
        %2878 = vmatprep.subr.mxu0 0.0
        %2879 = vmatpush1.msra.mxu0 %v2738
        %2880 = vmatprep.subr.mxu0 0.0
        %2881 = vmatpush1.msra.mxu0 %v2739
        %2882 = vmatprep.subr.mxu0 0.0
        %2883 = vmatpush1.msra.mxu0 %v2740
        %2884 = vmatprep.subr.mxu0 0.0
        %2885 = vmatpush1.msra.mxu0 0.0
        %2886 = vmatprep.subr.mxu0 0.0
        %2887 = vmatpush1.msra.mxu0 0.0
        %2888 = vmatprep.subr.mxu0 0.0
        %2889 = vmatpush1.msra.mxu0 0.0
        %2890 = vmatprep.subr.mxu0 0.0
        %2891 = vmatpush1.msra.mxu0 0.0
        %2892 = vmatprep.subr.mxu0 0.0
        %2893 = vmatpush1.msra.mxu0 0.0
        %2894 = vmatprep.subr.mxu0 0.0
        %2895 = vmatpush1.msra.mxu0 0.0
        %2896 = vmatprep.subr.mxu0 0.0
        %2897 = vmatpush1.msra.mxu0 0.0
        %2898 = vmatprep.subr.mxu0 0.0
        %2899 = vmatpush1.msra.mxu0 0.0
        %2900 = vmatprep.subr.mxu0 0.0
        %2901 = vmatpush1.msra.mxu0 0.0
        %2902 = vmatprep.subr.mxu0 0.0
        %2903 = vmatpush1.msra.mxu0 0.0
        %2904 = vmatprep.subr.mxu0 0.0
        %2905 = vmatpush1.msra.mxu0 0.0
        %2906 = vmatprep.subr.mxu0 0.0
        %2907 = vmatpush1.msra.mxu0 0.0
        %2908 = vmatprep.subr.mxu0 0.0
        %2909 = vmatpush1.msra.mxu0 0.0
        %2910 = vmatprep.subr.mxu0 0.0
        %2911 = vmatpush1.msra.mxu0 0.0
        %2912 = vmatprep.subr.mxu0 0.0
        %2913 = vmatpush1.msra.mxu0 0.0
        %2914 = vmatprep.subr.mxu0 0.0
        %2915 = vmatpush1.msra.mxu0 0.0
        %2916 = vmatprep.subr.mxu0 0.0
        %2917 = vmatpush1.msra.mxu0 0.0
        %2918 = vmatprep.subr.mxu0 0.0
        %2919 = vmatpush1.msra.mxu0 0.0
        %2920 = vmatprep.subr.mxu0 0.0
        %2921 = vmatpush1.msra.mxu0 0.0
        %2922 = vmatprep.subr.mxu0 0.0
        %2923 = vmatpush1.msra.mxu0 0.0
        %2924 = vmatprep.subr.mxu0 0.0
        %2925 = vmatpush1.msra.mxu0 0.0
        %2926 = vmatprep.subr.mxu0 0.0
        %2927 = vmatpush1.msra.mxu0 0.0
        %2928 = vmatprep.subr.mxu0 0.0
        %2929 = vmatpush1.msra.mxu0 0.0
        %2930 = vmatprep.subr.mxu0 0.0
        %2931 = vmatpush1.msra.mxu0 0.0
        %2932 = vmatprep.mubr.f32.mxu0 0.0
        %2933 = vmatmul.mubr.f32.gmra.mrb[0].mxu0 %v2866
        %v2934 = vpop.f32.mrb[0].mxu0
        %v2935 = vadd.f32 0.0, %v2934
        %v2936 = vpop.f32.mrb[0].mxu0
        %2937 = vdwg.mxu0
        %v2938 = vadd.f32 %v2864, %v2935
        %v2939 = vrot.slane %v2724, 2
        %v2940 = vsel %vm2790, %v2939, 0
        %2942 = vmatprep.subr.mxu0 0.0
        %2943 = vmatpush1.msra.mxu0 %v2741
        %2944 = vmatprep.subr.mxu0 0.0
        %2945 = vmatpush1.msra.mxu0 %v2742
        %2946 = vmatprep.subr.mxu0 0.0
        %2947 = vmatpush1.msra.mxu0 %v2743
        %2948 = vmatprep.subr.mxu0 0.0
        %2949 = vmatpush1.msra.mxu0 %v2744
        %2950 = vmatprep.subr.mxu0 0.0
        %2951 = vmatpush1.msra.mxu0 %v2745
        %2952 = vmatprep.subr.mxu0 0.0
        %2953 = vmatpush1.msra.mxu0 %v2746
        %2954 = vmatprep.subr.mxu0 0.0
        %2955 = vmatpush1.msra.mxu0 %v2747
        %2956 = vmatprep.subr.mxu0 0.0
        %2957 = vmatpush1.msra.mxu0 %v2748
        %2958 = vmatprep.subr.mxu0 0.0
        %2959 = vmatpush1.msra.mxu0 0.0
        %2960 = vmatprep.subr.mxu0 0.0
        %2961 = vmatpush1.msra.mxu0 0.0
        %2962 = vmatprep.subr.mxu0 0.0
        %2963 = vmatpush1.msra.mxu0 0.0
        %2964 = vmatprep.subr.mxu0 0.0
        %2965 = vmatpush1.msra.mxu0 0.0
        %2966 = vmatprep.subr.mxu0 0.0
        %2967 = vmatpush1.msra.mxu0 0.0
        %2968 = vmatprep.subr.mxu0 0.0
        %2969 = vmatpush1.msra.mxu0 0.0
        %2970 = vmatprep.subr.mxu0 0.0
        %2971 = vmatpush1.msra.mxu0 0.0
        %2972 = vmatprep.subr.mxu0 0.0
        %2973 = vmatpush1.msra.mxu0 0.0
        %2974 = vmatprep.subr.mxu0 0.0
        %2975 = vmatpush1.msra.mxu0 0.0
        %2976 = vmatprep.subr.mxu0 0.0
        %2977 = vmatpush1.msra.mxu0 0.0
        %2978 = vmatprep.subr.mxu0 0.0
        %2979 = vmatpush1.msra.mxu0 0.0
        %2980 = vmatprep.subr.mxu0 0.0
        %2981 = vmatpush1.msra.mxu0 0.0
        %2982 = vmatprep.subr.mxu0 0.0
        %2983 = vmatpush1.msra.mxu0 0.0
        %2984 = vmatprep.subr.mxu0 0.0
        %2985 = vmatpush1.msra.mxu0 0.0
        %2986 = vmatprep.subr.mxu0 0.0
        %2987 = vmatpush1.msra.mxu0 0.0
        %2988 = vmatprep.subr.mxu0 0.0
        %2989 = vmatpush1.msra.mxu0 0.0
        %2990 = vmatprep.subr.mxu0 0.0
        %2991 = vmatpush1.msra.mxu0 0.0
        %2992 = vmatprep.subr.mxu0 0.0
        %2993 = vmatpush1.msra.mxu0 0.0
        %2994 = vmatprep.subr.mxu0 0.0
        %2995 = vmatpush1.msra.mxu0 0.0
        %2996 = vmatprep.subr.mxu0 0.0
        %2997 = vmatpush1.msra.mxu0 0.0
        %2998 = vmatprep.subr.mxu0 0.0
        %2999 = vmatpush1.msra.mxu0 0.0
        %3000 = vmatprep.subr.mxu0 0.0
        %3001 = vmatpush1.msra.mxu0 0.0
        %3002 = vmatprep.subr.mxu0 0.0
        %3003 = vmatpush1.msra.mxu0 0.0
        %3004 = vmatprep.subr.mxu0 0.0
        %3005 = vmatpush1.msra.mxu0 0.0
        %3006 = vmatprep.mubr.f32.mxu0 0.0
        %3007 = vmatmul.mubr.f32.gmra.mrb[0].mxu0 %v2940
        %v3008 = vpop.f32.mrb[0].mxu0
        %v3009 = vadd.f32 0.0, %v3008
        %v3010 = vpop.f32.mrb[0].mxu0
        %3011 = vdwg.mxu0
        %v3012 = vadd.f32 %v2938, %v3009
        %v3013 = vrot.slane %v2724, 3
        %v3014 = vsel %vm2790, %v3013, 0
        %3016 = vmatprep.subr.mxu0 0.0
        %3017 = vmatpush1.msra.mxu0 %v2749
        %3018 = vmatprep.subr.mxu0 0.0
        %3019 = vmatpush1.msra.mxu0 %v2750
        %3020 = vmatprep.subr.mxu0 0.0
        %3021 = vmatpush1.msra.mxu0 %v2751
        %3022 = vmatprep.subr.mxu0 0.0
        %3023 = vmatpush1.msra.mxu0 %v2752
        %3024 = vmatprep.subr.mxu0 0.0
        %3025 = vmatpush1.msra.mxu0 %v2753
        %3026 = vmatprep.subr.mxu0 0.0
        %3027 = vmatpush1.msra.mxu0 %v2754
        %3028 = vmatprep.subr.mxu0 0.0
        %3029 = vmatpush1.msra.mxu0 %v2755
        %3030 = vmatprep.subr.mxu0 0.0
        %3031 = vmatpush1.msra.mxu0 %v2756
        %3032 = vmatprep.subr.mxu0 0.0
        %3033 = vmatpush1.msra.mxu0 0.0
        %3034 = vmatprep.subr.mxu0 0.0
        %3035 = vmatpush1.msra.mxu0 0.0
        %3036 = vmatprep.subr.mxu0 0.0
        %3037 = vmatpush1.msra.mxu0 0.0
        %3038 = vmatprep.subr.mxu0 0.0
        %3039 = vmatpush1.msra.mxu0 0.0
        %3040 = vmatprep.subr.mxu0 0.0
        %3041 = vmatpush1.msra.mxu0 0.0
        %3042 = vmatprep.subr.mxu0 0.0
        %3043 = vmatpush1.msra.mxu0 0.0
        %3044 = vmatprep.subr.mxu0 0.0
        %3045 = vmatpush1.msra.mxu0 0.0
        %3046 = vmatprep.subr.mxu0 0.0
        %3047 = vmatpush1.msra.mxu0 0.0
        %3048 = vmatprep.subr.mxu0 0.0
        %3049 = vmatpush1.msra.mxu0 0.0
        %3050 = vmatprep.subr.mxu0 0.0
        %3051 = vmatpush1.msra.mxu0 0.0
        %3052 = vmatprep.subr.mxu0 0.0
        %3053 = vmatpush1.msra.mxu0 0.0
        %3054 = vmatprep.subr.mxu0 0.0
        %3055 = vmatpush1.msra.mxu0 0.0
        %3056 = vmatprep.subr.mxu0 0.0
        %3057 = vmatpush1.msra.mxu0 0.0
        %3058 = vmatprep.subr.mxu0 0.0
        %3059 = vmatpush1.msra.mxu0 0.0
        %3060 = vmatprep.subr.mxu0 0.0
        %3061 = vmatpush1.msra.mxu0 0.0
        %3062 = vmatprep.subr.mxu0 0.0
        %3063 = vmatpush1.msra.mxu0 0.0
        %3064 = vmatprep.subr.mxu0 0.0
        %3065 = vmatpush1.msra.mxu0 0.0
        %3066 = vmatprep.subr.mxu0 0.0
        %3067 = vmatpush1.msra.mxu0 0.0
        %3068 = vmatprep.subr.mxu0 0.0
        %3069 = vmatpush1.msra.mxu0 0.0
        %3070 = vmatprep.subr.mxu0 0.0
        %3071 = vmatpush1.msra.mxu0 0.0
        %3072 = vmatprep.subr.mxu0 0.0
        %3073 = vmatpush1.msra.mxu0 0.0
        %3074 = vmatprep.subr.mxu0 0.0
        %3075 = vmatpush1.msra.mxu0 0.0
        %3076 = vmatprep.subr.mxu0 0.0
        %3077 = vmatpush1.msra.mxu0 0.0
        %3078 = vmatprep.subr.mxu0 0.0
        %3079 = vmatpush1.msra.mxu0 0.0
        %3080 = vmatprep.mubr.f32.mxu0 0.0
        %3081 = vmatmul.mubr.f32.gmra.mrb[0].mxu0 %v3014
        %v3082 = vpop.f32.mrb[0].mxu0
        %v3083 = vadd.f32 0.0, %v3082
        %v3084 = vpop.f32.mrb[0].mxu0
        %3085 = vdwg.mxu0
        %v3086 = vadd.f32 %v3012, %v3083
        %v3087 = vrot.slane %v2724, 4
        %v3088 = vsel %vm2790, %v3087, 0
        %3090 = vmatprep.subr.mxu0 0.0
        %3091 = vmatpush1.msra.mxu0 %v2757
        %3092 = vmatprep.subr.mxu0 0.0
        %3093 = vmatpush1.msra.mxu0 %v2758
        %3094 = vmatprep.subr.mxu0 0.0
        %3095 = vmatpush1.msra.mxu0 %v2759
        %3096 = vmatprep.subr.mxu0 0.0
        %3097 = vmatpush1.msra.mxu0 %v2760
        %3098 = vmatprep.subr.mxu0 0.0
        %3099 = vmatpush1.msra.mxu0 %v2761
        %3100 = vmatprep.subr.mxu0 0.0
        %3101 = vmatpush1.msra.mxu0 %v2762
        %3102 = vmatprep.subr.mxu0 0.0
        %3103 = vmatpush1.msra.mxu0 %v2763
        %3104 = vmatprep.subr.mxu0 0.0
        %3105 = vmatpush1.msra.mxu0 %v2764
        %3106 = vmatprep.subr.mxu0 0.0
        %3107 = vmatpush1.msra.mxu0 0.0
        %3108 = vmatprep.subr.mxu0 0.0
        %3109 = vmatpush1.msra.mxu0 0.0
        %3110 = vmatprep.subr.mxu0 0.0
        %3111 = vmatpush1.msra.mxu0 0.0
        %3112 = vmatprep.subr.mxu0 0.0
        %3113 = vmatpush1.msra.mxu0 0.0
        %3114 = vmatprep.subr.mxu0 0.0
        %3115 = vmatpush1.msra.mxu0 0.0
        %3116 = vmatprep.subr.mxu0 0.0
        %3117 = vmatpush1.msra.mxu0 0.0
        %3118 = vmatprep.subr.mxu0 0.0
        %3119 = vmatpush1.msra.mxu0 0.0
        %3120 = vmatprep.subr.mxu0 0.0
        %3121 = vmatpush1.msra.mxu0 0.0
        %3122 = vmatprep.subr.mxu0 0.0
        %3123 = vmatpush1.msra.mxu0 0.0
        %3124 = vmatprep.subr.mxu0 0.0
        %3125 = vmatpush1.msra.mxu0 0.0
        %3126 = vmatprep.subr.mxu0 0.0
        %3127 = vmatpush1.msra.mxu0 0.0
        %3128 = vmatprep.subr.mxu0 0.0
        %3129 = vmatpush1.msra.mxu0 0.0
        %3130 = vmatprep.subr.mxu0 0.0
        %3131 = vmatpush1.msra.mxu0 0.0
        %3132 = vmatprep.subr.mxu0 0.0
        %3133 = vmatpush1.msra.mxu0 0.0
        %3134 = vmatprep.subr.mxu0 0.0
        %3135 = vmatpush1.msra.mxu0 0.0
        %3136 = vmatprep.subr.mxu0 0.0
        %3137 = vmatpush1.msra.mxu0 0.0
        %3138 = vmatprep.subr.mxu0 0.0
        %3139 = vmatpush1.msra.mxu0 0.0
        %3140 = vmatprep.subr.mxu0 0.0
        %3141 = vmatpush1.msra.mxu0 0.0
        %3142 = vmatprep.subr.mxu0 0.0
        %3143 = vmatpush1.msra.mxu0 0.0
        %3144 = vmatprep.subr.mxu0 0.0
        %3145 = vmatpush1.msra.mxu0 0.0
        %3146 = vmatprep.subr.mxu0 0.0
        %3147 = vmatpush1.msra.mxu0 0.0
        %3148 = vmatprep.subr.mxu0 0.0
        %3149 = vmatpush1.msra.mxu0 0.0
        %3150 = vmatprep.subr.mxu0 0.0
        %3151 = vmatpush1.msra.mxu0 0.0
        %3152 = vmatprep.subr.mxu0 0.0
        %3153 = vmatpush1.msra.mxu0 0.0
        %3154 = vmatprep.mubr.f32.mxu0 0.0
        %3155 = vmatmul.mubr.f32.gmra.mrb[0].mxu0 %v3088
        %v3156 = vpop.f32.mrb[0].mxu0
        %v3157 = vadd.f32 0.0, %v3156
        %v3158 = vpop.f32.mrb[0].mxu0
        %3159 = vdwg.mxu0
        %v3160 = vadd.f32 %v3086, %v3157
        %v3161 = vrot.slane %v2724, 5
        %v3162 = vsel %vm2790, %v3161, 0
        %3164 = vmatprep.subr.mxu0 0.0
        %3165 = vmatpush1.msra.mxu0 %v2765
        %3166 = vmatprep.subr.mxu0 0.0
        %3167 = vmatpush1.msra.mxu0 %v2766
        %3168 = vmatprep.subr.mxu0 0.0
        %3169 = vmatpush1.msra.mxu0 %v2767
        %3170 = vmatprep.subr.mxu0 0.0
        %3171 = vmatpush1.msra.mxu0 %v2768
        %3172 = vmatprep.subr.mxu0 0.0
        %3173 = vmatpush1.msra.mxu0 %v2769
        %3174 = vmatprep.subr.mxu0 0.0
        %3175 = vmatpush1.msra.mxu0 %v2770
        %3176 = vmatprep.subr.mxu0 0.0
        %3177 = vmatpush1.msra.mxu0 %v2771
        %3178 = vmatprep.subr.mxu0 0.0
        %3179 = vmatpush1.msra.mxu0 %v2772
        %3180 = vmatprep.subr.mxu0 0.0
        %3181 = vmatpush1.msra.mxu0 0.0
        %3182 = vmatprep.subr.mxu0 0.0
        %3183 = vmatpush1.msra.mxu0 0.0
        %3184 = vmatprep.subr.mxu0 0.0
        %3185 = vmatpush1.msra.mxu0 0.0
        %3186 = vmatprep.subr.mxu0 0.0
        %3187 = vmatpush1.msra.mxu0 0.0
        %3188 = vmatprep.subr.mxu0 0.0
        %3189 = vmatpush1.msra.mxu0 0.0
        %3190 = vmatprep.subr.mxu0 0.0
        %3191 = vmatpush1.msra.mxu0 0.0
        %3192 = vmatprep.subr.mxu0 0.0
        %3193 = vmatpush1.msra.mxu0 0.0
        %3194 = vmatprep.subr.mxu0 0.0
        %3195 = vmatpush1.msra.mxu0 0.0
        %3196 = vmatprep.subr.mxu0 0.0
        %3197 = vmatpush1.msra.mxu0 0.0
        %3198 = vmatprep.subr.mxu0 0.0
        %3199 = vmatpush1.msra.mxu0 0.0
        %3200 = vmatprep.subr.mxu0 0.0
        %3201 = vmatpush1.msra.mxu0 0.0
        %3202 = vmatprep.subr.mxu0 0.0
        %3203 = vmatpush1.msra.mxu0 0.0
        %3204 = vmatprep.subr.mxu0 0.0
        %3205 = vmatpush1.msra.mxu0 0.0
        %3206 = vmatprep.subr.mxu0 0.0
        %3207 = vmatpush1.msra.mxu0 0.0
        %3208 = vmatprep.subr.mxu0 0.0
        %3209 = vmatpush1.msra.mxu0 0.0
        %3210 = vmatprep.subr.mxu0 0.0
        %3211 = vmatpush1.msra.mxu0 0.0
        %3212 = vmatprep.subr.mxu0 0.0
        %3213 = vmatpush1.msra.mxu0 0.0
        %3214 = vmatprep.subr.mxu0 0.0
        %3215 = vmatpush1.msra.mxu0 0.0
        %3216 = vmatprep.subr.mxu0 0.0
        %3217 = vmatpush1.msra.mxu0 0.0
        %3218 = vmatprep.subr.mxu0 0.0
        %3219 = vmatpush1.msra.mxu0 0.0
        %3220 = vmatprep.subr.mxu0 0.0
        %3221 = vmatpush1.msra.mxu0 0.0
        %3222 = vmatprep.subr.mxu0 0.0
        %3223 = vmatpush1.msra.mxu0 0.0
        %3224 = vmatprep.subr.mxu0 0.0
        %3225 = vmatpush1.msra.mxu0 0.0
        %3226 = vmatprep.subr.mxu0 0.0
        %3227 = vmatpush1.msra.mxu0 0.0
        %3228 = vmatprep.mubr.f32.mxu0 0.0
        %3229 = vmatmul.mubr.f32.gmra.mrb[0].mxu0 %v3162
        %v3230 = vpop.f32.mrb[0].mxu0
        %v3231 = vadd.f32 0.0, %v3230
        %v3232 = vpop.f32.mrb[0].mxu0
        %3233 = vdwg.mxu0
        %v3234 = vadd.f32 %v3160, %v3231
        %v3235 = vrot.slane %v2724, 6
        %v3236 = vsel %vm2790, %v3235, 0
        %3238 = vmatprep.subr.mxu0 0.0
        %3239 = vmatpush1.msra.mxu0 %v2773
        %3240 = vmatprep.subr.mxu0 0.0
        %3241 = vmatpush1.msra.mxu0 %v2774
        %3242 = vmatprep.subr.mxu0 0.0
        %3243 = vmatpush1.msra.mxu0 %v2775
        %3244 = vmatprep.subr.mxu0 0.0
        %3245 = vmatpush1.msra.mxu0 %v2776
        %3246 = vmatprep.subr.mxu0 0.0
        %3247 = vmatpush1.msra.mxu0 %v2777
        %3248 = vmatprep.subr.mxu0 0.0
        %3249 = vmatpush1.msra.mxu0 %v2778
        %3250 = vmatprep.subr.mxu0 0.0
        %3251 = vmatpush1.msra.mxu0 %v2779
        %3252 = vmatprep.subr.mxu0 0.0
        %3253 = vmatpush1.msra.mxu0 %v2780
        %3254 = vmatprep.subr.mxu0 0.0
        %3255 = vmatpush1.msra.mxu0 0.0
        %3256 = vmatprep.subr.mxu0 0.0
        %3257 = vmatpush1.msra.mxu0 0.0
        %3258 = vmatprep.subr.mxu0 0.0
        %3259 = vmatpush1.msra.mxu0 0.0
        %3260 = vmatprep.subr.mxu0 0.0
        %3261 = vmatpush1.msra.mxu0 0.0
        %3262 = vmatprep.subr.mxu0 0.0
        %3263 = vmatpush1.msra.mxu0 0.0
        %3264 = vmatprep.subr.mxu0 0.0
        %3265 = vmatpush1.msra.mxu0 0.0
        %3266 = vmatprep.subr.mxu0 0.0
        %3267 = vmatpush1.msra.mxu0 0.0
        %3268 = vmatprep.subr.mxu0 0.0
        %3269 = vmatpush1.msra.mxu0 0.0
        %3270 = vmatprep.subr.mxu0 0.0
        %3271 = vmatpush1.msra.mxu0 0.0
        %3272 = vmatprep.subr.mxu0 0.0
        %3273 = vmatpush1.msra.mxu0 0.0
        %3274 = vmatprep.subr.mxu0 0.0
        %3275 = vmatpush1.msra.mxu0 0.0
        %3276 = vmatprep.subr.mxu0 0.0
        %3277 = vmatpush1.msra.mxu0 0.0
        %3278 = vmatprep.subr.mxu0 0.0
        %3279 = vmatpush1.msra.mxu0 0.0
        %3280 = vmatprep.subr.mxu0 0.0
        %3281 = vmatpush1.msra.mxu0 0.0
        %3282 = vmatprep.subr.mxu0 0.0
        %3283 = vmatpush1.msra.mxu0 0.0
        %3284 = vmatprep.subr.mxu0 0.0
        %3285 = vmatpush1.msra.mxu0 0.0
        %3286 = vmatprep.subr.mxu0 0.0
        %3287 = vmatpush1.msra.mxu0 0.0
        %3288 = vmatprep.subr.mxu0 0.0
        %3289 = vmatpush1.msra.mxu0 0.0
        %3290 = vmatprep.subr.mxu0 0.0
        %3291 = vmatpush1.msra.mxu0 0.0
        %3292 = vmatprep.subr.mxu0 0.0
        %3293 = vmatpush1.msra.mxu0 0.0
        %3294 = vmatprep.subr.mxu0 0.0
        %3295 = vmatpush1.msra.mxu0 0.0
        %3296 = vmatprep.subr.mxu0 0.0
        %3297 = vmatpush1.msra.mxu0 0.0
        %3298 = vmatprep.subr.mxu0 0.0
        %3299 = vmatpush1.msra.mxu0 0.0
        %3300 = vmatprep.subr.mxu0 0.0
        %3301 = vmatpush1.msra.mxu0 0.0
        %3302 = vmatprep.mubr.f32.mxu0 0.0
        %3303 = vmatmul.mubr.f32.gmra.mrb[0].mxu0 %v3236
        %v3304 = vpop.f32.mrb[0].mxu0
        %v3305 = vadd.f32 0.0, %v3304
        %v3306 = vpop.f32.mrb[0].mxu0
        %3307 = vdwg.mxu0
        %v3308 = vadd.f32 %v3234, %v3305
        %v3309 = vrot.slane %v2724, 7
        %v3310 = vsel %vm2790, %v3309, 0
        %3312 = vmatprep.subr.mxu0 0.0
        %3313 = vmatpush1.msra.mxu0 %v2781
        %3314 = vmatprep.subr.mxu0 0.0
        %3315 = vmatpush1.msra.mxu0 %v2782
        %3316 = vmatprep.subr.mxu0 0.0
        %3317 = vmatpush1.msra.mxu0 %v2783
        %3318 = vmatprep.subr.mxu0 0.0
        %3319 = vmatpush1.msra.mxu0 %v2784
        %3320 = vmatprep.subr.mxu0 0.0
        %3321 = vmatpush1.msra.mxu0 %v2785
        %3322 = vmatprep.subr.mxu0 0.0
        %3323 = vmatpush1.msra.mxu0 %v2786
        %3324 = vmatprep.subr.mxu0 0.0
        %3325 = vmatpush1.msra.mxu0 %v2787
        %3326 = vmatprep.subr.mxu0 0.0
        %3327 = vmatpush1.msra.mxu0 %v2788
        %3328 = vmatprep.subr.mxu0 0.0
        %3329 = vmatpush1.msra.mxu0 0.0
        %3330 = vmatprep.subr.mxu0 0.0
        %3331 = vmatpush1.msra.mxu0 0.0
        %3332 = vmatprep.subr.mxu0 0.0
        %3333 = vmatpush1.msra.mxu0 0.0
        %3334 = vmatprep.subr.mxu0 0.0
        %3335 = vmatpush1.msra.mxu0 0.0
        %3336 = vmatprep.subr.mxu0 0.0
        %3337 = vmatpush1.msra.mxu0 0.0
        %3338 = vmatprep.subr.mxu0 0.0
        %3339 = vmatpush1.msra.mxu0 0.0
        %3340 = vmatprep.subr.mxu0 0.0
        %3341 = vmatpush1.msra.mxu0 0.0
        %3342 = vmatprep.subr.mxu0 0.0
        %3343 = vmatpush1.msra.mxu0 0.0
        %3344 = vmatprep.subr.mxu0 0.0
        %3345 = vmatpush1.msra.mxu0 0.0
        %3346 = vmatprep.subr.mxu0 0.0
        %3347 = vmatpush1.msra.mxu0 0.0
        %3348 = vmatprep.subr.mxu0 0.0
        %3349 = vmatpush1.msra.mxu0 0.0
        %3350 = vmatprep.subr.mxu0 0.0
        %3351 = vmatpush1.msra.mxu0 0.0
        %3352 = vmatprep.subr.mxu0 0.0
        %3353 = vmatpush1.msra.mxu0 0.0
        %3354 = vmatprep.subr.mxu0 0.0
        %3355 = vmatpush1.msra.mxu0 0.0
        %3356 = vmatprep.subr.mxu0 0.0
        %3357 = vmatpush1.msra.mxu0 0.0
        %3358 = vmatprep.subr.mxu0 0.0
        %3359 = vmatpush1.msra.mxu0 0.0
        %3360 = vmatprep.subr.mxu0 0.0
        %3361 = vmatpush1.msra.mxu0 0.0
        %3362 = vmatprep.subr.mxu0 0.0
        %3363 = vmatpush1.msra.mxu0 0.0
        %3364 = vmatprep.subr.mxu0 0.0
        %3365 = vmatpush1.msra.mxu0 0.0
        %3366 = vmatprep.subr.mxu0 0.0
        %3367 = vmatpush1.msra.mxu0 0.0
        %3368 = vmatprep.subr.mxu0 0.0
        %3369 = vmatpush1.msra.mxu0 0.0
        %3370 = vmatprep.subr.mxu0 0.0
        %3371 = vmatpush1.msra.mxu0 0.0
        %3372 = vmatprep.subr.mxu0 0.0
        %3373 = vmatpush1.msra.mxu0 0.0
        %3374 = vmatprep.subr.mxu0 0.0
        %3375 = vmatpush1.msra.mxu0 0.0
        %3376 = vmatprep.mubr.f32.mxu0 0.0
        %3377 = vmatmul.mubr.f32.gmra.mrb[0].mxu0 %v3310
        %v3378 = vpop.f32.mrb[0].mxu0
        %v3379 = vadd.f32 0.0, %v3378
        %v3380 = vpop.f32.mrb[0].mxu0
        %3381 = vdwg.mxu0
        %v3382 = vadd.f32 %v3308, %v3379
        %vm3383 = vcmask 253952
        %3384 = vst.msk [vmem:[%s320] sm:$0x1] %vm3383, %v3382
        %s3385 = sand.u32 %s185, 1
        %s3386 = scalar_lea.sflag [#allocation4], %s3385
        %s3387 = sand.u32 %s185, 1
        %s3388 = scalar_lea.vmem [#allocation8], %s3387
        // Predicated region
        $region61: #{tpu_custom_call.1} parent=47 // pred_check
          %p3389 = pneg %p195
        $region62: #{tpu_custom_call.1} parent=47 // pred_check_branch
          %3391 = sbr.rel (%p3389) target = $region64
        $region63: #{tpu_custom_call.1} parent=47 // pred_region
          %s3393 = ssub.s32 16, 16
          %3394 = vsyncadd %s3386, %s3393
          %s3395 = smul.addr %s25, 16
          %s3396 = scalar_lea.hbm %s7, %s3395
          %s3398 = sshll.u32 %s3388, 4
          %s3399 = int_to_ptr.vmem [resolvable:$true] %s3398
          %3401 = dma.vmem_to_hbm [thread:$0]  %s3399, 16, %s3396, %s3386
        $region64: #{tpu_custom_call.1} parent=47 // pred_fallthru
          _
      $region48: #{tpu_custom_call.1} parent=5 // pred_fallthru
        _
      %p3402 = scmp.le.s32.totalorder 2, %s20
      // Predicated region
      $region65: #{tpu_custom_call.1} parent=5 // pred_check
        %p3403 = pneg %p3402
      $region66: #{tpu_custom_call.1} parent=5 // pred_check_branch
        %3405 = sbr.rel (%p3403) target = $region68
      $region67: #{tpu_custom_call.1} parent=5 // pred_region
        %s3406 = ssub.s32 %s20, 2
        // Predicated region
        $region69: #{tpu_custom_call.1} parent=67 // pred_check
          %p3407 = pneg %p201
        $region70: #{tpu_custom_call.1} parent=67 // pred_check_branch
          %3409 = sbr.rel (%p3407) target = $region72
        $region71: #{tpu_custom_call.1} parent=67 // pred_region
          %s3410 = sand.u32 %s186, 1
          %s3411 = scalar_lea.sflag [#allocation4], %s3410
          %s3412 = sand.u32 %s186, 1
          %s3413 = scalar_lea.vmem [#allocation8], %s3412
          %3414 = dma.done %s3411, 16
        $region72: #{tpu_custom_call.1} parent=67 // pred_fallthru
          _
      $region68: #{tpu_custom_call.1} parent=5 // pred_fallthru
        _
    $region6: #{tpu_custom_call.1} parent=1 // loop_footer
      %s24 = sadd.s32 1, %s20
    $region7: #{tpu_custom_call.1} parent=1 // loop_footer_branch
      %19 = sbr.rel target = $region3
    $region8: #{tpu_custom_call.1} parent=1 // loop_exit
      _
    %3415 = vsyncpa [#allocation3], 1
    %s3416 = scalar_lea.sflag [#allocation3], 1
    %3417 = vsyncpa %s3416, 1
    %3418 = vsyncpa [#allocation6], 1
    %3419 = vsyncpa [#allocation4], 1
    %s3420 = scalar_lea.sflag [#allocation4], 1
    %3421 = vsyncpa %s3420, 1

</llo_original>
